<compile_context>
chip_gen: v7x
topology: tpu7x:2x2x1
jax: 0.10.0
libtpu: 0.0.40
codegen_flags: <defaults>
</compile_context>

<pallas_src>
import functools

import jax
import jax.numpy as jnp
from jax.experimental import pallas as pl
from jax.experimental.pallas import tpu as pltpu


def _conv_bn_mish_kernel(x_ref, w_ref, shift_ref, o_ref, *,
                         kh_sz, kw_sz, stride, band_rows, ow, cout_p):
    """Fused conv + BN(shift) + Mish for one (batch, output-row-band) tile.

    x_ref:     (1, Hp, Wp, Cin)        full padded NHWC image (VMEM-resident)
    w_ref:     (KH, KW, Cin, cout_p)   BN-scale-folded, lane-padded weights
    shift_ref: (1, cout_p)             folded BN shift
    o_ref:     (1, band_rows, ow, cout_p)  NHWC output row band
    """
    t = pl.program_id(1)
    row0 = pl.multiple_of(t * band_rows * stride, band_rows * stride)

    cin = x_ref.shape[-1]
    acc = jnp.zeros((band_rows * ow, cout_p), jnp.float32)
    for kh in range(kh_sz):
        if stride == 1:
            rows = x_ref[0, pl.ds(row0 + kh, band_rows)]
        else:
            rows = x_ref[0, pl.ds(row0 + kh, band_rows, stride)]
        for kw in range(kw_sz):
            cols = rows[:, kw:kw + (ow - 1) * stride + 1:stride, :]
            lhs = cols.reshape(band_rows * ow, cin)
            acc = acc + jnp.dot(lhs, w_ref[kh, kw],
                                preferred_element_type=jnp.float32)

    y = acc + shift_ref[...]                 # folded BatchNorm (inference mode)
    # Mish: y * tanh(softplus(y)) with tanh(softplus(y)) = (e^2+2e)/(e^2+2e+2),
    # e = exp(y).  One transcendental + one divide instead of exp/log1p/tanh.
    # (pl.reciprocal(..., approx=True) could replace the divide when a looser
    # tolerance is acceptable.)
    e = jnp.exp(jnp.minimum(y, 20.0))
    num = e * (e + 2.0)
    tanh_sp = jnp.where(y > 20.0, 1.0, num / (num + 2.0))
    out = (y * tanh_sp).astype(o_ref.dtype)
    o_ref[...] = out.reshape(1, band_rows, ow, cout_p)


def _pick_band_rows(oh, ow, cout_p, budget_bytes=2 << 20):
    """Largest divisor of OH whose f32 output band fits the VMEM budget."""
    per_row = ow * cout_p * 4
    max_rows = max(1, budget_bytes // per_row)
    best = 1
    for cand in range(1, oh + 1):
        if oh % cand == 0 and cand <= max_rows:
            best = cand
    return best


@functools.partial(
    jax.jit,
    static_argnames=("stride", "padding", "eps", "band_rows", "matmul_dtype"))
def my_conv2d(x, w, gamma, beta, running_mean, running_var,
              stride=1, padding=0, eps=1e-5, band_rows=None,
              matmul_dtype=jnp.bfloat16):
    N, Cin, H, W = x.shape
    Cout, _, KH, KW = w.shape
    OH = (H + 2 * padding - KH) // stride + 1
    OW = (W + 2 * padding - KW) // stride + 1
    Hp, Wp = H + 2 * padding, W + 2 * padding
    cout_p = pl.cdiv(Cout, 128) * 128          # lane-dense output channels

    # --- host-side glue: NHWC layout, spatial padding, BN folding ---
    xp = jnp.transpose(x, (0, 2, 3, 1))
    xp = jnp.pad(xp, ((0, 0), (padding, padding), (padding, padding), (0, 0)))
    xp = xp.astype(matmul_dtype)

    inv_std = jax.lax.rsqrt(running_var.astype(jnp.float32) + eps)
    scale = gamma.astype(jnp.float32) * inv_std                    # (Cout,)
    shift = beta.astype(jnp.float32) - running_mean.astype(jnp.float32) * scale
    wf = jnp.transpose(w, (2, 3, 1, 0)).astype(jnp.float32) * scale  # (KH,KW,Cin,Cout)
    wf = jnp.pad(wf, ((0, 0), (0, 0), (0, 0), (0, cout_p - Cout)))
    wf = wf.astype(matmul_dtype)
    shift_p = jnp.pad(shift, (0, cout_p - Cout)).reshape(1, cout_p)

    th = band_rows if band_rows is not None else _pick_band_rows(OH, OW, cout_p)
    if OH % th != 0:
        raise ValueError(f"band_rows={th} must divide OH={OH}")

    itemsize = jax.dtypes.canonicalize_dtype(matmul_dtype).itemsize
    vmem_bytes = (2 * Hp * Wp * Cin * itemsize            # image (double buffer)
                  + KH * KW * Cin * cout_p * itemsize     # weights (resident)
                  + 2 * th * OW * cout_p * 4              # output band
                  + th * OW * cout_p * 4                  # f32 accumulator
                  + cout_p * 4)                           # shift
    vmem_limit = int(min(48 << 20, max(4 * vmem_bytes, 32 << 20)))

    kernel = functools.partial(
        _conv_bn_mish_kernel, kh_sz=KH, kw_sz=KW, stride=stride,
        band_rows=th, ow=OW, cout_p=cout_p)

    out_nhwc = pl.pallas_call(
        kernel,
        out_shape=jax.ShapeDtypeStruct((N, OH, OW, cout_p), x.dtype),
        grid=(N, OH // th),
        in_specs=[
            # Full padded image of batch element n; index is constant across
            # the band axis so it is DMA'd once and stays VMEM-resident.
            pl.BlockSpec((1, Hp, Wp, Cin), lambda n, t: (n, 0, 0, 0)),
            pl.BlockSpec((KH, KW, Cin, cout_p), lambda n, t: (0, 0, 0, 0)),
            pl.BlockSpec((1, cout_p), lambda n, t: (0, 0)),
        ],
        out_specs=pl.BlockSpec((1, th, OW, cout_p), lambda n, t: (n, t, 0, 0)),
        compiler_params=pltpu.CompilerParams(
            dimension_semantics=("parallel", "parallel"),
            vmem_limit_bytes=vmem_limit),
    )(xp, wf, shift_p)

    out = out_nhwc[:, :, :, :Cout]
    return jnp.transpose(out, (0, 3, 1, 2))    # NCHW


def _reference(x, w, gamma, beta, running_mean, running_var,
               stride, padding, eps=1e-5):
    y = jax.lax.conv_general_dilated(
        x, w, window_strides=(stride, stride),
        padding=[(padding, padding), (padding, padding)],
        dimension_numbers=("NCHW", "OIHW", "NCHW"))
    inv_std = 1.0 / jnp.sqrt(running_var + eps)
    y = (y - running_mean[None, :, None, None]) * inv_std[None, :, None, None]
    y = y * gamma[None, :, None, None] + beta[None, :, None, None]
    return y * jnp.tanh(jax.nn.softplus(y))


if __name__ == "__main__":
    # MyConv2d(in_c=4, out_c=8, k_sz=3, stride=1, padding=1, bias=False)
    N, Cin, H, W = 2, 4, 16, 16
    Cout, K = 8, 3
    stride, padding = 1, 1

    key = jax.random.PRNGKey(0)
    kx, kw, kg, kb, km, kv = jax.random.split(key, 6)

    x = jax.random.normal(kx, (N, Cin, H, W), dtype=jnp.float32)
    w = jax.random.normal(kw, (Cout, Cin, K, K), dtype=jnp.float32) * 0.1
    gamma = 1.0 + 0.1 * jax.random.normal(kg, (Cout,), dtype=jnp.float32)
    beta = 0.1 * jax.random.normal(kb, (Cout,), dtype=jnp.float32)
    running_mean = 0.1 * jax.random.normal(km, (Cout,), dtype=jnp.float32)
    running_var = 1.0 + 0.1 * jax.random.uniform(kv, (Cout,), dtype=jnp.float32)

    ref = _reference(x, w, gamma, beta, running_mean, running_var,
                     stride, padding)

    # f32 matmul path: tight numerical check against the XLA reference.
    out_f32 = my_conv2d(x, w, gamma, beta, running_mean, running_var,
                        stride=stride, padding=padding,
                        matmul_dtype=jnp.float32)
    out_f32 = jax.block_until_ready(out_f32)
    assert out_f32.shape == (N, Cout, H, W), out_f32.shape
    assert jnp.allclose(out_f32, ref, rtol=1e-4, atol=1e-4), \
        float(jnp.max(jnp.abs(out_f32 - ref)))

    # Default bf16 matmul path (halved HBM traffic): bf16-level tolerance.
    out_bf16 = my_conv2d(x, w, gamma, beta, running_mean, running_var,
                         stride=stride, padding=padding)
    out_bf16 = jax.block_until_ready(out_bf16)
    assert out_bf16.shape == (N, Cout, H, W), out_bf16.shape
    assert jnp.allclose(out_bf16, ref, rtol=3e-2, atol=3e-2), \
        float(jnp.max(jnp.abs(out_bf16 - ref)))

    print("KERNEL_OK")
</pallas_src>

<mosaic_0001>
module attributes {stable_mosaic.version = 11 : i64} {
  func.func @_conv_bn_mish_kernel(%arg0: i32, %arg1: i32, %arg2: memref<1x18x18x4xf32, #tpu.memory_space<vmem>>, %arg3: memref<3x3x4x128xf32, #tpu.memory_space<vmem>>, %arg4: memref<1x128xf32, #tpu.memory_space<vmem>>, %arg5: memref<1x16x16x128xf32, #tpu.memory_space<vmem>>) attributes {dimension_semantics = [#tpu.dimension_semantics<parallel>, #tpu.dimension_semantics<parallel>], iteration_bounds = array<i64: 2, 1>, scalar_prefetch = 0 : i64, scratch_operands = 0 : i64, tpu.core_type = #tpu.core_type<tc>, window_params = [{transform_indices = @transform_0, window_bounds = array<i64: 1, 18, 18, 4>}, {pipeline_mode = #tpu.pipeline_mode<synchronous>, transform_indices = @transform_1, window_bounds = array<i64: 3, 3, 4, 128>}, {pipeline_mode = #tpu.pipeline_mode<synchronous>, transform_indices = @transform_2, window_bounds = array<i64: 1, 128>}, {transform_indices = @transform_3, window_bounds = array<i64: 1, 16, 16, 128>}]} {
    %c16_i32 = arith.constant 16 : i32
    %0 = arith.muli %arg1, %c16_i32 : i32
    %c1_i32 = arith.constant 1 : i32
    %1 = arith.muli %0, %c1_i32 : i32
    %2 = tpu.assume_multiple %1, 16 : i32
    %cst = arith.constant 0.000000e+00 : f32
    %3 = vector.broadcast %cst : f32 to vector<256x128xf32>
    %c0_i32 = arith.constant 0 : i32
    %4 = arith.addi %2, %c0_i32 : i32
    %c0 = arith.constant 0 : index
    %5 = arith.index_cast %4 : i32 to index
    %c0_0 = arith.constant 0 : index
    %c0_1 = arith.constant 0 : index
    %6 = vector.load %arg2[%c0, %5, %c0_0, %c0_1] : memref<1x18x18x4xf32, #tpu.memory_space<vmem>>, vector<1x16x18x4xf32>
    %7 = vector.shape_cast %6 : vector<1x16x18x4xf32> to vector<16x18x4xf32>
    %8 = vector.extract_strided_slice %7 {offsets = [0, 0, 0], sizes = [16, 16, 4], strides = [1, 1, 1]} : vector<16x18x4xf32> to vector<16x16x4xf32>
    %9 = vector.shape_cast %8 : vector<16x16x4xf32> to vector<256x4xf32>
    %c0_2 = arith.constant 0 : index
    %c0_3 = arith.constant 0 : index
    %c0_4 = arith.constant 0 : index
    %c0_5 = arith.constant 0 : index
    %10 = vector.load %arg3[%c0_2, %c0_3, %c0_4, %c0_5] : memref<3x3x4x128xf32, #tpu.memory_space<vmem>>, vector<1x1x4x128xf32>
    %11 = vector.shape_cast %10 : vector<1x1x4x128xf32> to vector<4x128xf32>
    %cst_6 = arith.constant dense<0.000000e+00> : vector<256x128xf32>
    %12 = tpu.matmul %9, %11, %cst_6 {dimension_numbers = #tpu.dot_dimension_numbers<[1], [0], [0], [1], [0, 0, 1, 1], [], []>} : vector<256x4xf32>, vector<4x128xf32>, vector<256x128xf32> -> vector<256x128xf32>
    %13 = arith.addf %3, %12 : vector<256x128xf32>
    %14 = vector.extract_strided_slice %7 {offsets = [0, 1, 0], sizes = [16, 16, 4], strides = [1, 1, 1]} : vector<16x18x4xf32> to vector<16x16x4xf32>
    %15 = vector.shape_cast %14 : vector<16x16x4xf32> to vector<256x4xf32>
    %c0_7 = arith.constant 0 : index
    %c1 = arith.constant 1 : index
    %c0_8 = arith.constant 0 : index
    %c0_9 = arith.constant 0 : index
    %16 = vector.load %arg3[%c0_7, %c1, %c0_8, %c0_9] : memref<3x3x4x128xf32, #tpu.memory_space<vmem>>, vector<1x1x4x128xf32>
    %17 = vector.shape_cast %16 : vector<1x1x4x128xf32> to vector<4x128xf32>
    %cst_10 = arith.constant dense<0.000000e+00> : vector<256x128xf32>
    %18 = tpu.matmul %15, %17, %cst_10 {dimension_numbers = #tpu.dot_dimension_numbers<[1], [0], [0], [1], [0, 0, 1, 1], [], []>} : vector<256x4xf32>, vector<4x128xf32>, vector<256x128xf32> -> vector<256x128xf32>
    %19 = arith.addf %13, %18 : vector<256x128xf32>
    %20 = vector.extract_strided_slice %7 {offsets = [0, 2, 0], sizes = [16, 16, 4], strides = [1, 1, 1]} : vector<16x18x4xf32> to vector<16x16x4xf32>
    %21 = vector.shape_cast %20 : vector<16x16x4xf32> to vector<256x4xf32>
    %c0_11 = arith.constant 0 : index
    %c2 = arith.constant 2 : index
    %c0_12 = arith.constant 0 : index
    %c0_13 = arith.constant 0 : index
    %22 = vector.load %arg3[%c0_11, %c2, %c0_12, %c0_13] : memref<3x3x4x128xf32, #tpu.memory_space<vmem>>, vector<1x1x4x128xf32>
    %23 = vector.shape_cast %22 : vector<1x1x4x128xf32> to vector<4x128xf32>
    %cst_14 = arith.constant dense<0.000000e+00> : vector<256x128xf32>
    %24 = tpu.matmul %21, %23, %cst_14 {dimension_numbers = #tpu.dot_dimension_numbers<[1], [0], [0], [1], [0, 0, 1, 1], [], []>} : vector<256x4xf32>, vector<4x128xf32>, vector<256x128xf32> -> vector<256x128xf32>
    %25 = arith.addf %19, %24 : vector<256x128xf32>
    %c1_i32_15 = arith.constant 1 : i32
    %26 = arith.addi %2, %c1_i32_15 : i32
    %c0_16 = arith.constant 0 : index
    %27 = arith.index_cast %26 : i32 to index
    %c0_17 = arith.constant 0 : index
    %c0_18 = arith.constant 0 : index
    %28 = vector.load %arg2[%c0_16, %27, %c0_17, %c0_18] : memref<1x18x18x4xf32, #tpu.memory_space<vmem>>, vector<1x16x18x4xf32>
    %29 = vector.shape_cast %28 : vector<1x16x18x4xf32> to vector<16x18x4xf32>
    %30 = vector.extract_strided_slice %29 {offsets = [0, 0, 0], sizes = [16, 16, 4], strides = [1, 1, 1]} : vector<16x18x4xf32> to vector<16x16x4xf32>
    %31 = vector.shape_cast %30 : vector<16x16x4xf32> to vector<256x4xf32>
    %c1_19 = arith.constant 1 : index
    %c0_20 = arith.constant 0 : index
    %c0_21 = arith.constant 0 : index
    %c0_22 = arith.constant 0 : index
    %32 = vector.load %arg3[%c1_19, %c0_20, %c0_21, %c0_22] : memref<3x3x4x128xf32, #tpu.memory_space<vmem>>, vector<1x1x4x128xf32>
    %33 = vector.shape_cast %32 : vector<1x1x4x128xf32> to vector<4x128xf32>
    %cst_23 = arith.constant dense<0.000000e+00> : vector<256x128xf32>
    %34 = tpu.matmul %31, %33, %cst_23 {dimension_numbers = #tpu.dot_dimension_numbers<[1], [0], [0], [1], [0, 0, 1, 1], [], []>} : vector<256x4xf32>, vector<4x128xf32>, vector<256x128xf32> -> vector<256x128xf32>
    %35 = arith.addf %25, %34 : vector<256x128xf32>
    %36 = vector.extract_strided_slice %29 {offsets = [0, 1, 0], sizes = [16, 16, 4], strides = [1, 1, 1]} : vector<16x18x4xf32> to vector<16x16x4xf32>
    %37 = vector.shape_cast %36 : vector<16x16x4xf32> to vector<256x4xf32>
    %c1_24 = arith.constant 1 : index
    %c1_25 = arith.constant 1 : index
    %c0_26 = arith.constant 0 : index
    %c0_27 = arith.constant 0 : index
    %38 = vector.load %arg3[%c1_24, %c1_25, %c0_26, %c0_27] : memref<3x3x4x128xf32, #tpu.memory_space<vmem>>, vector<1x1x4x128xf32>
    %39 = vector.shape_cast %38 : vector<1x1x4x128xf32> to vector<4x128xf32>
    %cst_28 = arith.constant dense<0.000000e+00> : vector<256x128xf32>
    %40 = tpu.matmul %37, %39, %cst_28 {dimension_numbers = #tpu.dot_dimension_numbers<[1], [0], [0], [1], [0, 0, 1, 1], [], []>} : vector<256x4xf32>, vector<4x128xf32>, vector<256x128xf32> -> vector<256x128xf32>
    %41 = arith.addf %35, %40 : vector<256x128xf32>
    %42 = vector.extract_strided_slice %29 {offsets = [0, 2, 0], sizes = [16, 16, 4], strides = [1, 1, 1]} : vector<16x18x4xf32> to vector<16x16x4xf32>
    %43 = vector.shape_cast %42 : vector<16x16x4xf32> to vector<256x4xf32>
    %c1_29 = arith.constant 1 : index
    %c2_30 = arith.constant 2 : index
    %c0_31 = arith.constant 0 : index
    %c0_32 = arith.constant 0 : index
    %44 = vector.load %arg3[%c1_29, %c2_30, %c0_31, %c0_32] : memref<3x3x4x128xf32, #tpu.memory_space<vmem>>, vector<1x1x4x128xf32>
    %45 = vector.shape_cast %44 : vector<1x1x4x128xf32> to vector<4x128xf32>
    %cst_33 = arith.constant dense<0.000000e+00> : vector<256x128xf32>
    %46 = tpu.matmul %43, %45, %cst_33 {dimension_numbers = #tpu.dot_dimension_numbers<[1], [0], [0], [1], [0, 0, 1, 1], [], []>} : vector<256x4xf32>, vector<4x128xf32>, vector<256x128xf32> -> vector<256x128xf32>
    %47 = arith.addf %41, %46 : vector<256x128xf32>
    %c2_i32 = arith.constant 2 : i32
    %48 = arith.addi %2, %c2_i32 : i32
    %c0_34 = arith.constant 0 : index
    %49 = arith.index_cast %48 : i32 to index
    %c0_35 = arith.constant 0 : index
    %c0_36 = arith.constant 0 : index
    %50 = vector.load %arg2[%c0_34, %49, %c0_35, %c0_36] : memref<1x18x18x4xf32, #tpu.memory_space<vmem>>, vector<1x16x18x4xf32>
    %51 = vector.shape_cast %50 : vector<1x16x18x4xf32> to vector<16x18x4xf32>
    %52 = vector.extract_strided_slice %51 {offsets = [0, 0, 0], sizes = [16, 16, 4], strides = [1, 1, 1]} : vector<16x18x4xf32> to vector<16x16x4xf32>
    %53 = vector.shape_cast %52 : vector<16x16x4xf32> to vector<256x4xf32>
    %c2_37 = arith.constant 2 : index
    %c0_38 = arith.constant 0 : index
    %c0_39 = arith.constant 0 : index
    %c0_40 = arith.constant 0 : index
    %54 = vector.load %arg3[%c2_37, %c0_38, %c0_39, %c0_40] : memref<3x3x4x128xf32, #tpu.memory_space<vmem>>, vector<1x1x4x128xf32>
    %55 = vector.shape_cast %54 : vector<1x1x4x128xf32> to vector<4x128xf32>
    %cst_41 = arith.constant dense<0.000000e+00> : vector<256x128xf32>
    %56 = tpu.matmul %53, %55, %cst_41 {dimension_numbers = #tpu.dot_dimension_numbers<[1], [0], [0], [1], [0, 0, 1, 1], [], []>} : vector<256x4xf32>, vector<4x128xf32>, vector<256x128xf32> -> vector<256x128xf32>
    %57 = arith.addf %47, %56 : vector<256x128xf32>
    %58 = vector.extract_strided_slice %51 {offsets = [0, 1, 0], sizes = [16, 16, 4], strides = [1, 1, 1]} : vector<16x18x4xf32> to vector<16x16x4xf32>
    %59 = vector.shape_cast %58 : vector<16x16x4xf32> to vector<256x4xf32>
    %c2_42 = arith.constant 2 : index
    %c1_43 = arith.constant 1 : index
    %c0_44 = arith.constant 0 : index
    %c0_45 = arith.constant 0 : index
    %60 = vector.load %arg3[%c2_42, %c1_43, %c0_44, %c0_45] : memref<3x3x4x128xf32, #tpu.memory_space<vmem>>, vector<1x1x4x128xf32>
    %61 = vector.shape_cast %60 : vector<1x1x4x128xf32> to vector<4x128xf32>
    %cst_46 = arith.constant dense<0.000000e+00> : vector<256x128xf32>
    %62 = tpu.matmul %59, %61, %cst_46 {dimension_numbers = #tpu.dot_dimension_numbers<[1], [0], [0], [1], [0, 0, 1, 1], [], []>} : vector<256x4xf32>, vector<4x128xf32>, vector<256x128xf32> -> vector<256x128xf32>
    %63 = arith.addf %57, %62 : vector<256x128xf32>
    %64 = vector.extract_strided_slice %51 {offsets = [0, 2, 0], sizes = [16, 16, 4], strides = [1, 1, 1]} : vector<16x18x4xf32> to vector<16x16x4xf32>
    %65 = vector.shape_cast %64 : vector<16x16x4xf32> to vector<256x4xf32>
    %c2_47 = arith.constant 2 : index
    %c2_48 = arith.constant 2 : index
    %c0_49 = arith.constant 0 : index
    %c0_50 = arith.constant 0 : index
    %66 = vector.load %arg3[%c2_47, %c2_48, %c0_49, %c0_50] : memref<3x3x4x128xf32, #tpu.memory_space<vmem>>, vector<1x1x4x128xf32>
    %67 = vector.shape_cast %66 : vector<1x1x4x128xf32> to vector<4x128xf32>
    %cst_51 = arith.constant dense<0.000000e+00> : vector<256x128xf32>
    %68 = tpu.matmul %65, %67, %cst_51 {dimension_numbers = #tpu.dot_dimension_numbers<[1], [0], [0], [1], [0, 0, 1, 1], [], []>} : vector<256x4xf32>, vector<4x128xf32>, vector<256x128xf32> -> vector<256x128xf32>
    %69 = arith.addf %63, %68 : vector<256x128xf32>
    %c0_52 = arith.constant 0 : index
    %c0_53 = arith.constant 0 : index
    %70 = vector.load %arg4[%c0_52, %c0_53] : memref<1x128xf32, #tpu.memory_space<vmem>>, vector<1x128xf32>
    %71 = vector.broadcast %70 : vector<1x128xf32> to vector<256x128xf32>
    %72 = arith.addf %69, %71 : vector<256x128xf32>
    %cst_54 = arith.constant 2.000000e+01 : f32
    %73 = vector.broadcast %cst_54 : f32 to vector<256x128xf32>
    %74 = arith.minimumf %72, %73 : vector<256x128xf32>
    %75 = math.exp %74 : vector<256x128xf32>
    %cst_55 = arith.constant 2.000000e+00 : f32
    %76 = vector.broadcast %cst_55 : f32 to vector<256x128xf32>
    %77 = arith.addf %75, %76 : vector<256x128xf32>
    %78 = arith.mulf %75, %77 : vector<256x128xf32>
    %cst_56 = arith.constant 2.000000e+01 : f32
    %79 = vector.broadcast %cst_56 : f32 to vector<256x128xf32>
    %80 = arith.cmpf ogt, %72, %79 : vector<256x128xf32>
    %cst_57 = arith.constant 2.000000e+00 : f32
    %81 = vector.broadcast %cst_57 : f32 to vector<256x128xf32>
    %82 = arith.addf %78, %81 : vector<256x128xf32>
    %83 = arith.divf %78, %82 : vector<256x128xf32>
    %cst_58 = arith.constant 1.000000e+00 : f32
    %84 = vector.broadcast %cst_58 : f32 to vector<256x128xf32>
    %85 = arith.select %80, %84, %83 : vector<256x128xi1>, vector<256x128xf32>
    %86 = arith.mulf %72, %85 : vector<256x128xf32>
    %87 = vector.shape_cast %86 : vector<256x128xf32> to vector<1x16x16x128xf32>
    %c0_59 = arith.constant 0 : index
    %c0_60 = arith.constant 0 : index
    %c0_61 = arith.constant 0 : index
    %c0_62 = arith.constant 0 : index
    %88 = vector.load %arg5[%c0_59, %c0_60, %c0_61, %c0_62] : memref<1x16x16x128xf32, #tpu.memory_space<vmem>>, vector<1x16x16x128xf32>
    tpu.vector_store %arg5[%c0_59, %c0_60, %c0_61, %c0_62], %87 {strides = array<i32>} : memref<1x16x16x128xf32, #tpu.memory_space<vmem>>, vector<1x16x16x128xf32>,
    return
  }
  func.func @transform_0(%arg0: i32, %arg1: i32) -> (i32, i32, i32, i32) {
    %c0_i32 = arith.constant 0 : i32
    %c0_i32_0 = arith.constant 0 : i32
    %c0_i32_1 = arith.constant 0 : i32
    %c0_i32_2 = arith.constant 0 : i32
    return %arg0, %c0_i32, %c0_i32_0, %c0_i32_1 : i32, i32, i32, i32
  }
  func.func @transform_1(%arg0: i32, %arg1: i32) -> (i32, i32, i32, i32) {
    %c0_i32 = arith.constant 0 : i32
    %c0_i32_0 = arith.constant 0 : i32
    %c0_i32_1 = arith.constant 0 : i32
    %c0_i32_2 = arith.constant 0 : i32
    %c0_i32_3 = arith.constant 0 : i32
    return %c0_i32, %c0_i32_0, %c0_i32_1, %c0_i32_2 : i32, i32, i32, i32
  }
  func.func @transform_2(%arg0: i32, %arg1: i32) -> (i32, i32) {
    %c0_i32 = arith.constant 0 : i32
    %c0_i32_0 = arith.constant 0 : i32
    %c0_i32_1 = arith.constant 0 : i32
    return %c0_i32, %c0_i32_0 : i32, i32
  }
  func.func @transform_3(%arg0: i32, %arg1: i32) -> (i32, i32, i32, i32) {
    %c0_i32 = arith.constant 0 : i32
    %c0_i32_0 = arith.constant 0 : i32
    %c0_i32_1 = arith.constant 0 : i32
    return %arg0, %arg1, %c0_i32, %c0_i32_0 : i32, i32, i32, i32
  }
}

</mosaic_0001>

<llo_original>
// kernel: my_conv2d.1
$region0: #{my_conv2d.1}
  #allocation0 [shape = 'u32[]', space=smem, size = 0x4, offset = 0x4, fixed_abs, tag = 'smem constant byte address 0x4 - core index']
  #allocation1 [shape = 'u32[144,128]{1,0:T(1,128)}', space=vmem, size = 0x12000, scoped, tag = 'internal scratch']
  %s0 = inlined_call_operand.vmem [shape: f32[2,18,18,4], index: 0, kind: input, shape index: {}]
  %s1 = inlined_call_operand.vmem [shape: f32[3,3,4,128], index: 1, kind: input, shape index: {}]
  %s2 = inlined_call_operand.vmem [shape: f32[1,128], index: 2, kind: input, shape index: {}]
  %s3 = inlined_call_operand.vmem [shape: f32[2,16,16,128], index: 3, kind: output, shape index: {}]
  %s4 = sld [smem:[#allocation0]]
  $region45: #{my_conv2d.1} parent=0
    _
  %s6 = ssub.s32 1, %s4
  %s7 = scalar_select 0, %s6, %s4
  loop: start=0, step=1, limit=4
  $region2: #{my_conv2d.1} parent=0 // loop_pre_header
    _
  $region3: #{my_conv2d.1} parent=0 // loop_header
    %s9 = sphi 0, %s13
    %p10 = scmp.ge.s32.totalorder %s9, 4
    %s16 = sphi 0, %s28
    %s17 = sphi 0, %s24
    %s18 = sphi 0, %s16
    %s19 = sphi 0, %s17
    %s20 = sphi 0, %s18
    %s21 = sphi 0, %s19
    %s31 = sphi 0, %s33
    %s34 = sphi 0, %s31
    %s35 = sphi 0, %s34
    %s51 = sphi 0, %s35
    %s55 = sphi 0, %s55
    %s57 = sphi 0, %s55
    %s58 = sphi 0, %s57
    %s72 = sphi 0, %s58
    %s76 = sphi 0, %s76
    %s78 = sphi 0, %s76
    %s79 = sphi 0, %s78
    %s93 = sphi 0, %s79
    %s101 = sphi 0, %s103
    %s104 = sphi 0, %s101
    %s105 = sphi 0, %s104
    %s121 = sphi 0, %s105
  $region4: #{my_conv2d.1} parent=0 // loop_header_branch
    %12 = sbr.rel (%p10) target = $region8
  $region5: #{my_conv2d.1} parent=0 // loop_body
    %s14 = ssub.s32 %s9, 1
    %s15 = ssub.s32 %s9, 2
    %s22 = sadd.s32 1, %s17
    %p23 = scmp.ge.s32.totalorder %s22, 1
    %s24 = scalar_select %p23, 0, %s22
    %s25 = sadd.s32 1, %s16
    %s26 = scalar_select %p23, %s25, %s16
    %p27 = scmp.ge.s32.totalorder %s26, 2
    %s28 = scalar_select %p27, 0, %s26
    %s29 = ssub.s32 %s16, %s28
    %p30 = scmp.eq.s32.totalorder %s29, 0
    %s32 = sadd.s32 %s31, 1
    %s33 = scalar_select %p30, %s31, %s32
    %p36 = pneg %p30
    %p37 = scmp.eq.s32.totalorder %s9, 1
    %p38 = por %p36, %p37
    %p39 = scmp.ne.s32.totalorder %s31, %s34
    %p40 = scmp.eq.s32.totalorder %s9, 0
    %p41 = por %p39, %p40
    %p42 = scmp.ne.s32.totalorder %s31, %s34
    %p43 = scmp.eq.s32.totalorder %s14, 1
    %p44 = por %p42, %p43
    %p45 = scmp.ne.s32.totalorder %s34, %s35
    %p46 = scmp.eq.s32.totalorder %s14, 0
    %p47 = por %p45, %p46
    %p48 = scmp.ne.s32.totalorder %s34, %s35
    %p49 = scmp.eq.s32.totalorder %s15, 1
    %p50 = por %p48, %p49
    %p52 = scmp.ne.s32.totalorder %s35, %s51
    %p53 = scmp.eq.s32.totalorder %s15, 0
    %p54 = por %p52, %p53
    %s56 = sadd.s32 %s55, 1
    %p59 = scmp.eq.s32.totalorder %s9, 1
    %p60 = scmp.ne.s32.totalorder %s55, %s57
    %p61 = scmp.eq.s32.totalorder %s9, 0
    %p62 = por %p60, %p61
    %p63 = scmp.ne.s32.totalorder %s55, %s57
    %p64 = scmp.eq.s32.totalorder %s14, 1
    %p65 = por %p63, %p64
    %p66 = scmp.ne.s32.totalorder %s57, %s58
    %p67 = scmp.eq.s32.totalorder %s14, 0
    %p68 = por %p66, %p67
    %p69 = scmp.ne.s32.totalorder %s57, %s58
    %p70 = scmp.eq.s32.totalorder %s15, 1
    %p71 = por %p69, %p70
    %p73 = scmp.ne.s32.totalorder %s58, %s72
    %p74 = scmp.eq.s32.totalorder %s15, 0
    %p75 = por %p73, %p74
    %s77 = sadd.s32 %s76, 1
    %p80 = scmp.eq.s32.totalorder %s9, 1
    %p81 = scmp.ne.s32.totalorder %s76, %s78
    %p82 = scmp.eq.s32.totalorder %s9, 0
    %p83 = por %p81, %p82
    %p84 = scmp.ne.s32.totalorder %s76, %s78
    %p85 = scmp.eq.s32.totalorder %s14, 1
    %p86 = por %p84, %p85
    %p87 = scmp.ne.s32.totalorder %s78, %s79
    %p88 = scmp.eq.s32.totalorder %s14, 0
    %p89 = por %p87, %p88
    %p90 = scmp.ne.s32.totalorder %s78, %s79
    %p91 = scmp.eq.s32.totalorder %s15, 1
    %p92 = por %p90, %p91
    %p94 = scmp.ne.s32.totalorder %s79, %s93
    %p95 = scmp.eq.s32.totalorder %s15, 0
    %p96 = por %p94, %p95
    %s97 = ssub.s32 %s16, %s28
    %s98 = ssub.s32 %s17, %s24
    %s99 = sor.u32 %s97, %s98
    %p100 = scmp.eq.s32.totalorder %s99, 0
    %s102 = sadd.s32 %s101, 1
    %s103 = scalar_select %p100, %s101, %s102
    %p106 = pneg %p100
    %p107 = scmp.eq.s32.totalorder %s9, 1
    %p108 = por %p106, %p107
    %p109 = scmp.ne.s32.totalorder %s101, %s104
    %p110 = scmp.eq.s32.totalorder %s9, 0
    %p111 = por %p109, %p110
    %p112 = scmp.ne.s32.totalorder %s101, %s104
    %p113 = scmp.eq.s32.totalorder %s14, 1
    %p114 = por %p112, %p113
    %p115 = scmp.ne.s32.totalorder %s104, %s105
    %p116 = scmp.eq.s32.totalorder %s14, 0
    %p117 = por %p115, %p116
    %p118 = scmp.ne.s32.totalorder %s104, %s105
    %p119 = scmp.eq.s32.totalorder %s15, 1
    %p120 = por %p118, %p119
    %p122 = scmp.ne.s32.totalorder %s105, %s121
    %p123 = scmp.eq.s32.totalorder %s15, 0
    %p124 = por %p122, %p123
    %p125 = scmp.le.s32.totalorder 1, %s9
    %p126 = scmp.lt.s32.totalorder %s9, 3
    %p127 = pnand %p125, %p126
    %p128 = pneg %p127
    // Predicated region
    $region9: #{my_conv2d.1} parent=5 // pred_check
      _
    $region10: #{my_conv2d.1} parent=5 // pred_check_branch
      %130 = sbr.rel (%p127) target = $region12
    $region11: #{my_conv2d.1} parent=5 // pred_region
      %s131 = ssub.s32 %s9, 1
      // Predicated region
      $region13: #{my_conv2d.1} parent=11 // pred_check
        %p132 = pneg %p68
      $region14: #{my_conv2d.1} parent=11 // pred_check_branch
        %134 = sbr.rel (%p132) target = $region16
      $region15: #{my_conv2d.1} parent=11 // pred_region
        _
      $region16: #{my_conv2d.1} parent=11 // pred_fallthru
        _
      // Predicated region
      $region17: #{my_conv2d.1} parent=11 // pred_check
        %p135 = pneg %p89
      $region18: #{my_conv2d.1} parent=11 // pred_check_branch
        %137 = sbr.rel (%p135) target = $region20
      $region19: #{my_conv2d.1} parent=11 // pred_region
        _
      $region20: #{my_conv2d.1} parent=11 // pred_fallthru
        _
    $region12: #{my_conv2d.1} parent=5 // pred_fallthru
      _
    %p138 = scmp.lt.s32.totalorder %s9, 2
    // Predicated region
    $region21: #{my_conv2d.1} parent=5 // pred_check
      %p139 = pneg %p138
    $region22: #{my_conv2d.1} parent=5 // pred_check_branch
      %141 = sbr.rel (%p139) target = $region24
    $region23: #{my_conv2d.1} parent=5 // pred_region
      // Predicated region
      $region25: #{my_conv2d.1} parent=23 // pred_check
        %p142 = pneg %p41
      $region26: #{my_conv2d.1} parent=23 // pred_check_branch
        %144 = sbr.rel (%p142) target = $region28
      $region27: #{my_conv2d.1} parent=23 // pred_region
        %p145 = scmp.lt.s32.totalorder %s16, 1
        %s146 = scalar_select %p145, %s16, 1
        %s147 = smul.addr %s146, 54
        %s148 = smul.addr %s147, 8
        %s149 = scalar_lea.vmem %s0, %s148
      $region28: #{my_conv2d.1} parent=23 // pred_fallthru
        _
    $region24: #{my_conv2d.1} parent=5 // pred_fallthru
      _
    %p150 = scmp.le.s32.totalorder 1, %s9
    %p151 = scmp.lt.s32.totalorder %s9, 3
    %p152 = pnand %p150, %p151
    %p153 = pneg %p152
    // Predicated region
    $region29: #{my_conv2d.1} parent=5 // pred_check
      _
    $region30: #{my_conv2d.1} parent=5 // pred_check_branch
      %155 = sbr.rel (%p152) target = $region32
    $region31: #{my_conv2d.1} parent=5 // pred_region
      %s156 = ssub.s32 %s9, 1
      %p157 = scmp.lt.s32.totalorder %s18, 1
      %s158 = scalar_select %p157, %s18, 1
      %s159 = smul.addr %s158, 54
      %s160 = smul.addr %s159, 8
      %s161 = scalar_lea.vmem %s0, %s160
      %p162 = pneg %p47
      %p163 = pneg %p44
      %p164 = pneg %p68
      %p165 = pneg %p65
      %p166 = pneg %p89
      %p167 = pneg %p86
      %p168 = pneg %p117
      %p169 = pneg %p114
      %s170 = smul.u32 16, %s19
      %p171 = scmp.lt.s32.totalorder %s18, 1
      %s172 = scalar_select %p171, %s18, 1
      %p173 = scmp.lt.s32.totalorder %s170, 15
      %s174 = scalar_select %p173, %s170, 15
      %s175 = smul.addr %s174, 2
      %s176 = smul.addr %s172, 32
      %s177 = sadd.s32 %s175, %s176
      %s178 = smul.addr %s177, 8
      %s179 = scalar_lea.vmem %s3, %s178
      %p180 = scmp.lt.s32.totalorder %s18, 1
      %s181 = scalar_select %p180, %s18, 1
      %s182 = smul.addr %s181, 54
      %s183 = smul.addr %s182, 8
      %s184 = scalar_lea.vmem %s0, %s183
      %s185 = smul.u32 16, %s19
      %p186 = scmp.lt.s32.totalorder %s18, 1
      %s187 = scalar_select %p186, %s18, 1
      %p188 = scmp.lt.s32.totalorder %s185, 15
      %s189 = scalar_select %p188, %s185, 15
      %s190 = smul.addr %s189, 2
      %s191 = smul.addr %s187, 32
      %s192 = sadd.s32 %s190, %s191
      %s193 = smul.addr %s192, 8
      %s194 = scalar_lea.vmem %s3, %s193
      %s195 = smul.u32 16, %s19
      %s196 = smul.u32 %s19, 16
      %s197 = smul.u32 %s196, 24
      %s198 = scalar_lea.vmem %s184, %s197
      %v199 = vld [vmem:[%s198] sm:$0xff]
      %v200 = vld [vmem:[%s198 + $0x8] sm:$0xff]
      %v201 = vld [vmem:[%s198 + $0x10] sm:$0x3]
      %v202 = vld [vmem:[%s198 + $0x18] sm:$0xff]
      %v203 = vld [vmem:[%s198 + $0x20] sm:$0xff]
      %v204 = vld [vmem:[%s198 + $0x28] sm:$0x3]
      %v205 = vld [vmem:[%s198 + $0x30] sm:$0xff]
      %v206 = vld [vmem:[%s198 + $0x38] sm:$0xff]
      %v207 = vld [vmem:[%s198 + $0x40] sm:$0x3]
      %v208 = vld [vmem:[%s198 + $0x48] sm:$0xff]
      %v209 = vld [vmem:[%s198 + $0x50] sm:$0xff]
      %v210 = vld [vmem:[%s198 + $0x58] sm:$0x3]
      %v211 = vld [vmem:[%s198 + $0x60] sm:$0xff]
      %v212 = vld [vmem:[%s198 + $0x68] sm:$0xff]
      %v213 = vld [vmem:[%s198 + $0x70] sm:$0x3]
      %v214 = vld [vmem:[%s198 + $0x78] sm:$0xff]
      %v215 = vld [vmem:[%s198 + $0x80] sm:$0xff]
      %v216 = vld [vmem:[%s198 + $0x88] sm:$0x3]
      %v217 = vld [vmem:[%s198 + $0x90] sm:$0xff]
      %v218 = vld [vmem:[%s198 + $0x98] sm:$0xff]
      %v219 = vld [vmem:[%s198 + $0xa0] sm:$0x3]
      %v220 = vld [vmem:[%s198 + $0xa8] sm:$0xff]
      %v221 = vld [vmem:[%s198 + $0xb0] sm:$0xff]
      %v222 = vld [vmem:[%s198 + $0xb8] sm:$0x3]
      %v223 = vld [vmem:[%s198 + $0xc0] sm:$0xff]
      %v224 = vld [vmem:[%s198 + $0xc8] sm:$0xff]
      %v225 = vld [vmem:[%s198 + $0xd0] sm:$0x3]
      %v226 = vld [vmem:[%s198 + $0xd8] sm:$0xff]
      %v227 = vld [vmem:[%s198 + $0xe0] sm:$0xff]
      %v228 = vld [vmem:[%s198 + $0xe8] sm:$0x3]
      %v229 = vld [vmem:[%s198 + $0xf0] sm:$0xff]
      %v230 = vld [vmem:[%s198 + $0xf8] sm:$0xff]
      %v231 = vld [vmem:[%s198 + $0x100] sm:$0x3]
      %v232 = vld [vmem:[%s198 + $0x108] sm:$0xff]
      %v233 = vld [vmem:[%s198 + $0x110] sm:$0xff]
      %v234 = vld [vmem:[%s198 + $0x118] sm:$0x3]
      %v235 = vld [vmem:[%s198 + $0x120] sm:$0xff]
      %v236 = vld [vmem:[%s198 + $0x128] sm:$0xff]
      %v237 = vld [vmem:[%s198 + $0x130] sm:$0x3]
      %v238 = vld [vmem:[%s198 + $0x138] sm:$0xff]
      %v239 = vld [vmem:[%s198 + $0x140] sm:$0xff]
      %v240 = vld [vmem:[%s198 + $0x148] sm:$0x3]
      %v241 = vld [vmem:[%s198 + $0x150] sm:$0xff]
      %v242 = vld [vmem:[%s198 + $0x158] sm:$0xff]
      %v243 = vld [vmem:[%s198 + $0x160] sm:$0x3]
      %v244 = vld [vmem:[%s198 + $0x168] sm:$0xff]
      %v245 = vld [vmem:[%s198 + $0x170] sm:$0xff]
      %v246 = vld [vmem:[%s198 + $0x178] sm:$0x3]
      %v247 = vld [vmem:[%s1] sm:$0xf]
      %vm296 = vcmask 1046528
      %v297 = vrot.slane %v199, 1
      %v298 = vrot.slane %v200, 1
      %v299 = vsel %vm296, %v297, %v298
      %v300 = vrot.slane %v201, 1
      %v301 = vsel %vm296, %v298, %v300
      %v302 = vrot.slane %v202, 1
      %v303 = vrot.slane %v203, 1
      %v304 = vsel %vm296, %v302, %v303
      %v305 = vrot.slane %v204, 1
      %v306 = vsel %vm296, %v303, %v305
      %v307 = vrot.slane %v205, 1
      %v308 = vrot.slane %v206, 1
      %v309 = vsel %vm296, %v307, %v308
      %v310 = vrot.slane %v207, 1
      %v311 = vsel %vm296, %v308, %v310
      %v312 = vrot.slane %v208, 1
      %v313 = vrot.slane %v209, 1
      %v314 = vsel %vm296, %v312, %v313
      %v315 = vrot.slane %v210, 1
      %v316 = vsel %vm296, %v313, %v315
      %v317 = vrot.slane %v211, 1
      %v318 = vrot.slane %v212, 1
      %v319 = vsel %vm296, %v317, %v318
      %v320 = vrot.slane %v213, 1
      %v321 = vsel %vm296, %v318, %v320
      %v322 = vrot.slane %v214, 1
      %v323 = vrot.slane %v215, 1
      %v324 = vsel %vm296, %v322, %v323
      %v325 = vrot.slane %v216, 1
      %v326 = vsel %vm296, %v323, %v325
      %v327 = vrot.slane %v217, 1
      %v328 = vrot.slane %v218, 1
      %v329 = vsel %vm296, %v327, %v328
      %v330 = vrot.slane %v219, 1
      %v331 = vsel %vm296, %v328, %v330
      %v332 = vrot.slane %v220, 1
      %v333 = vrot.slane %v221, 1
      %v334 = vsel %vm296, %v332, %v333
      %v335 = vrot.slane %v222, 1
      %v336 = vsel %vm296, %v333, %v335
      %v337 = vrot.slane %v223, 1
      %v338 = vrot.slane %v224, 1
      %v339 = vsel %vm296, %v337, %v338
      %v340 = vrot.slane %v225, 1
      %v341 = vsel %vm296, %v338, %v340
      %v342 = vrot.slane %v226, 1
      %v343 = vrot.slane %v227, 1
      %v344 = vsel %vm296, %v342, %v343
      %v345 = vrot.slane %v228, 1
      %v346 = vsel %vm296, %v343, %v345
      %v347 = vrot.slane %v229, 1
      %v348 = vrot.slane %v230, 1
      %v349 = vsel %vm296, %v347, %v348
      %v350 = vrot.slane %v231, 1
      %v351 = vsel %vm296, %v348, %v350
      %v352 = vrot.slane %v232, 1
      %v353 = vrot.slane %v233, 1
      %v354 = vsel %vm296, %v352, %v353
      %v355 = vrot.slane %v234, 1
      %v356 = vsel %vm296, %v353, %v355
      %v357 = vrot.slane %v235, 1
      %v358 = vrot.slane %v236, 1
      %v359 = vsel %vm296, %v357, %v358
      %v360 = vrot.slane %v237, 1
      %v361 = vsel %vm296, %v358, %v360
      %v362 = vrot.slane %v238, 1
      %v363 = vrot.slane %v239, 1
      %v364 = vsel %vm296, %v362, %v363
      %v365 = vrot.slane %v240, 1
      %v366 = vsel %vm296, %v363, %v365
      %v367 = vrot.slane %v241, 1
      %v368 = vrot.slane %v242, 1
      %v369 = vsel %vm296, %v367, %v368
      %v370 = vrot.slane %v243, 1
      %v371 = vsel %vm296, %v368, %v370
      %v372 = vrot.slane %v244, 1
      %v373 = vrot.slane %v245, 1
      %v374 = vsel %vm296, %v372, %v373
      %v375 = vrot.slane %v246, 1
      %v376 = vsel %vm296, %v373, %v375
      %s377 = scalar_lea.vmem %s1, 4
      %v378 = vld [vmem:[%s377] sm:$0xf]
      %vm379 = vcmask 31744
      %v380 = vsel %vm379, %v299, 0
      %v382 = vsel %vm379, %v301, 0
      %v384 = vsel %vm379, %v304, 0
      %v386 = vsel %vm379, %v306, 0
      %v388 = vsel %vm379, %v309, 0
      %v390 = vsel %vm379, %v311, 0
      %v392 = vsel %vm379, %v314, 0
      %v394 = vsel %vm379, %v316, 0
      %v396 = vsel %vm379, %v319, 0
      %v398 = vsel %vm379, %v321, 0
      %v400 = vsel %vm379, %v324, 0
      %v402 = vsel %vm379, %v326, 0
      %v404 = vsel %vm379, %v329, 0
      %v406 = vsel %vm379, %v331, 0
      %v408 = vsel %vm379, %v334, 0
      %v410 = vsel %vm379, %v336, 0
      %v412 = vsel %vm379, %v339, 0
      %v414 = vsel %vm379, %v341, 0
      %v416 = vsel %vm379, %v344, 0
      %v418 = vsel %vm379, %v346, 0
      %v420 = vsel %vm379, %v349, 0
      %v422 = vsel %vm379, %v351, 0
      %v424 = vsel %vm379, %v354, 0
      %v426 = vsel %vm379, %v356, 0
      %v428 = vsel %vm379, %v359, 0
      %v430 = vsel %vm379, %v361, 0
      %v432 = vsel %vm379, %v364, 0
      %v434 = vsel %vm379, %v366, 0
      %v436 = vsel %vm379, %v369, 0
      %v438 = vsel %vm379, %v371, 0
      %v440 = vsel %vm379, %v374, 0
      %v442 = vsel %vm379, %v376, 0
      %vm444 = vcmask 1043456
      %v446 = vsel %vm444, %v378, 0
      %448 = vmatprep.subr.mxu0 0.0
      %449 = vmatpush1.msra.mxu0 %v446
      %450 = vmatprep.subr.mxu0 0.0
      %451 = vmatpush1.msra.mxu0 0.0
      %452 = vmatprep.subr.mxu0 0.0
      %453 = vmatpush1.msra.mxu0 0.0
      %454 = vmatprep.subr.mxu0 0.0
      %455 = vmatpush1.msra.mxu0 0.0
      %456 = vmatprep.subr.mxu0 0.0
      %457 = vmatpush1.msra.mxu0 0.0
      %458 = vmatprep.subr.mxu0 0.0
      %459 = vmatpush1.msra.mxu0 0.0
      %460 = vmatprep.subr.mxu0 0.0
      %461 = vmatpush1.msra.mxu0 0.0
      %462 = vmatprep.subr.mxu0 0.0
      %463 = vmatpush1.msra.mxu0 0.0
      %464 = vmatprep.subr.mxu0 0.0
      %465 = vmatpush1.msra.mxu0 0.0
      %466 = vmatprep.subr.mxu0 0.0
      %467 = vmatpush1.msra.mxu0 0.0
      %468 = vmatprep.subr.mxu0 0.0
      %469 = vmatpush1.msra.mxu0 0.0
      %470 = vmatprep.subr.mxu0 0.0
      %471 = vmatpush1.msra.mxu0 0.0
      %472 = vmatprep.subr.mxu0 0.0
      %473 = vmatpush1.msra.mxu0 0.0
      %474 = vmatprep.subr.mxu0 0.0
      %475 = vmatpush1.msra.mxu0 0.0
      %476 = vmatprep.subr.mxu0 0.0
      %477 = vmatpush1.msra.mxu0 0.0
      %478 = vmatprep.subr.mxu0 0.0
      %479 = vmatpush1.msra.mxu0 0.0
      %480 = vmatprep.subr.mxu0 0.0
      %481 = vmatpush1.msra.mxu0 0.0
      %482 = vmatprep.subr.mxu0 0.0
      %483 = vmatpush1.msra.mxu0 0.0
      %484 = vmatprep.subr.mxu0 0.0
      %485 = vmatpush1.msra.mxu0 0.0
      %486 = vmatprep.subr.mxu0 0.0
      %487 = vmatpush1.msra.mxu0 0.0
      %488 = vmatprep.subr.mxu0 0.0
      %489 = vmatpush1.msra.mxu0 0.0
      %490 = vmatprep.subr.mxu0 0.0
      %491 = vmatpush1.msra.mxu0 0.0
      %492 = vmatprep.subr.mxu0 0.0
      %493 = vmatpush1.msra.mxu0 0.0
      %494 = vmatprep.subr.mxu0 0.0
      %495 = vmatpush1.msra.mxu0 0.0
      %496 = vmatprep.subr.mxu0 0.0
      %497 = vmatpush1.msra.mxu0 0.0
      %498 = vmatprep.subr.mxu0 0.0
      %499 = vmatpush1.msra.mxu0 0.0
      %500 = vmatprep.subr.mxu0 0.0
      %501 = vmatpush1.msra.mxu0 0.0
      %502 = vmatprep.subr.mxu0 0.0
      %503 = vmatpush1.msra.mxu0 0.0
      %504 = vmatprep.subr.mxu0 0.0
      %505 = vmatpush1.msra.mxu0 0.0
      %506 = vmatprep.subr.mxu0 0.0
      %507 = vmatpush1.msra.mxu0 0.0
      %508 = vmatprep.subr.mxu0 0.0
      %509 = vmatpush1.msra.mxu0 0.0
      %510 = vmatprep.subr.mxu0 0.0
      %511 = vmatpush1.msra.mxu0 0.0
      %512 = vmatprep.mubr.f32.mxu0 0.0
      %513 = vmatmul.mubr.f32.gmra.mrb[0].mxu0 %v380
      %v514 = vpop.f32.mrb[0].mxu0
      %v515 = vadd.f32 0.0, %v514
      %v516 = vpop.f32.mrb[0].mxu0
      %517 = vmatprep.mubr.f32.mxu0 0.0
      %518 = vmatmul.mubr.f32.gmra.mrb[0].mxu0 %v382
      %v519 = vpop.f32.mrb[0].mxu0
      %v520 = vadd.f32 0.0, %v519
      %v521 = vpop.f32.mrb[0].mxu0
      %522 = vmatprep.mubr.f32.mxu0 0.0
      %523 = vmatmul.mubr.f32.gmra.mrb[0].mxu0 %v384
      %v524 = vpop.f32.mrb[0].mxu0
      %v525 = vadd.f32 0.0, %v524
      %v526 = vpop.f32.mrb[0].mxu0
      %527 = vmatprep.mubr.f32.mxu0 0.0
      %528 = vmatmul.mubr.f32.gmra.mrb[0].mxu0 %v386
      %v529 = vpop.f32.mrb[0].mxu0
      %v530 = vadd.f32 0.0, %v529
      %v531 = vpop.f32.mrb[0].mxu0
      %532 = vmatprep.mubr.f32.mxu0 0.0
      %533 = vmatmul.mubr.f32.gmra.mrb[0].mxu0 %v388
      %v534 = vpop.f32.mrb[0].mxu0
      %v535 = vadd.f32 0.0, %v534
      %v536 = vpop.f32.mrb[0].mxu0
      %537 = vmatprep.mubr.f32.mxu0 0.0
      %538 = vmatmul.mubr.f32.gmra.mrb[0].mxu0 %v390
      %v539 = vpop.f32.mrb[0].mxu0
      %v540 = vadd.f32 0.0, %v539
      %v541 = vpop.f32.mrb[0].mxu0
      %542 = vmatprep.mubr.f32.mxu0 0.0
      %543 = vmatmul.mubr.f32.gmra.mrb[0].mxu0 %v392
      %v544 = vpop.f32.mrb[0].mxu0
      %v545 = vadd.f32 0.0, %v544
      %v546 = vpop.f32.mrb[0].mxu0
      %547 = vmatprep.mubr.f32.mxu0 0.0
      %548 = vmatmul.mubr.f32.gmra.mrb[0].mxu0 %v394
      %v549 = vpop.f32.mrb[0].mxu0
      %v550 = vadd.f32 0.0, %v549
      %v551 = vpop.f32.mrb[0].mxu0
      %552 = vmatprep.mubr.f32.mxu0 0.0
      %553 = vmatmul.mubr.f32.gmra.mrb[0].mxu0 %v396
      %v554 = vpop.f32.mrb[0].mxu0
      %v555 = vadd.f32 0.0, %v554
      %v556 = vpop.f32.mrb[0].mxu0
      %557 = vmatprep.mubr.f32.mxu0 0.0
      %558 = vmatmul.mubr.f32.gmra.mrb[0].mxu0 %v398
      %v559 = vpop.f32.mrb[0].mxu0
      %v560 = vadd.f32 0.0, %v559
      %v561 = vpop.f32.mrb[0].mxu0
      %562 = vmatprep.mubr.f32.mxu0 0.0
      %563 = vmatmul.mubr.f32.gmra.mrb[0].mxu0 %v400
      %v564 = vpop.f32.mrb[0].mxu0
      %v565 = vadd.f32 0.0, %v564
      %v566 = vpop.f32.mrb[0].mxu0
      %567 = vmatprep.mubr.f32.mxu0 0.0
      %568 = vmatmul.mubr.f32.gmra.mrb[0].mxu0 %v402
      %v569 = vpop.f32.mrb[0].mxu0
      %v570 = vadd.f32 0.0, %v569
      %v571 = vpop.f32.mrb[0].mxu0
      %572 = vmatprep.mubr.f32.mxu0 0.0
      %573 = vmatmul.mubr.f32.gmra.mrb[0].mxu0 %v404
      %v574 = vpop.f32.mrb[0].mxu0
      %v575 = vadd.f32 0.0, %v574
      %v576 = vpop.f32.mrb[0].mxu0
      %577 = vmatprep.mubr.f32.mxu0 0.0
      %578 = vmatmul.mubr.f32.gmra.mrb[0].mxu0 %v406
      %v579 = vpop.f32.mrb[0].mxu0
      %v580 = vadd.f32 0.0, %v579
      %v581 = vpop.f32.mrb[0].mxu0
      %582 = vmatprep.mubr.f32.mxu0 0.0
      %583 = vmatmul.mubr.f32.gmra.mrb[0].mxu0 %v408
      %v584 = vpop.f32.mrb[0].mxu0
      %v585 = vadd.f32 0.0, %v584
      %v586 = vpop.f32.mrb[0].mxu0
      %587 = vmatprep.mubr.f32.mxu0 0.0
      %588 = vmatmul.mubr.f32.gmra.mrb[0].mxu0 %v410
      %v589 = vpop.f32.mrb[0].mxu0
      %v590 = vadd.f32 0.0, %v589
      %v591 = vpop.f32.mrb[0].mxu0
      %592 = vmatprep.mubr.f32.mxu0 0.0
      %593 = vmatmul.mubr.f32.gmra.mrb[0].mxu0 %v412
      %v594 = vpop.f32.mrb[0].mxu0
      %v595 = vadd.f32 0.0, %v594
      %v596 = vpop.f32.mrb[0].mxu0
      %597 = vmatprep.mubr.f32.mxu0 0.0
      %598 = vmatmul.mubr.f32.gmra.mrb[0].mxu0 %v414
      %v599 = vpop.f32.mrb[0].mxu0
      %v600 = vadd.f32 0.0, %v599
      %v601 = vpop.f32.mrb[0].mxu0
      %602 = vmatprep.mubr.f32.mxu0 0.0
      %603 = vmatmul.mubr.f32.gmra.mrb[0].mxu0 %v416
      %v604 = vpop.f32.mrb[0].mxu0
      %v605 = vadd.f32 0.0, %v604
      %v606 = vpop.f32.mrb[0].mxu0
      %607 = vmatprep.mubr.f32.mxu0 0.0
      %608 = vmatmul.mubr.f32.gmra.mrb[0].mxu0 %v418
      %v609 = vpop.f32.mrb[0].mxu0
      %v610 = vadd.f32 0.0, %v609
      %v611 = vpop.f32.mrb[0].mxu0
      %612 = vmatprep.mubr.f32.mxu0 0.0
      %613 = vmatmul.mubr.f32.gmra.mrb[0].mxu0 %v420
      %v614 = vpop.f32.mrb[0].mxu0
      %v615 = vadd.f32 0.0, %v614
      %v616 = vpop.f32.mrb[0].mxu0
      %617 = vmatprep.mubr.f32.mxu0 0.0
      %618 = vmatmul.mubr.f32.gmra.mrb[0].mxu0 %v422
      %v619 = vpop.f32.mrb[0].mxu0
      %v620 = vadd.f32 0.0, %v619
      %v621 = vpop.f32.mrb[0].mxu0
      %622 = vmatprep.mubr.f32.mxu0 0.0
      %623 = vmatmul.mubr.f32.gmra.mrb[0].mxu0 %v424
      %v624 = vpop.f32.mrb[0].mxu0
      %v625 = vadd.f32 0.0, %v624
      %v626 = vpop.f32.mrb[0].mxu0
      %627 = vmatprep.mubr.f32.mxu0 0.0
      %628 = vmatmul.mubr.f32.gmra.mrb[0].mxu0 %v426
      %v629 = vpop.f32.mrb[0].mxu0
      %v630 = vadd.f32 0.0, %v629
      %v631 = vpop.f32.mrb[0].mxu0
      %632 = vmatprep.mubr.f32.mxu0 0.0
      %633 = vmatmul.mubr.f32.gmra.mrb[0].mxu0 %v428
      %v634 = vpop.f32.mrb[0].mxu0
      %v635 = vadd.f32 0.0, %v634
      %v636 = vpop.f32.mrb[0].mxu0
      %637 = vmatprep.mubr.f32.mxu0 0.0
      %638 = vmatmul.mubr.f32.gmra.mrb[0].mxu0 %v430
      %v639 = vpop.f32.mrb[0].mxu0
      %v640 = vadd.f32 0.0, %v639
      %v641 = vpop.f32.mrb[0].mxu0
      %642 = vmatprep.mubr.f32.mxu0 0.0
      %643 = vmatmul.mubr.f32.gmra.mrb[0].mxu0 %v432
      %v644 = vpop.f32.mrb[0].mxu0
      %v645 = vadd.f32 0.0, %v644
      %v646 = vpop.f32.mrb[0].mxu0
      %647 = vmatprep.mubr.f32.mxu0 0.0
      %648 = vmatmul.mubr.f32.gmra.mrb[0].mxu0 %v434
      %v649 = vpop.f32.mrb[0].mxu0
      %v650 = vadd.f32 0.0, %v649
      %v651 = vpop.f32.mrb[0].mxu0
      %652 = vmatprep.mubr.f32.mxu0 0.0
      %653 = vmatmul.mubr.f32.gmra.mrb[0].mxu0 %v436
      %v654 = vpop.f32.mrb[0].mxu0
      %v655 = vadd.f32 0.0, %v654
      %v656 = vpop.f32.mrb[0].mxu0
      %657 = vmatprep.mubr.f32.mxu0 0.0
      %658 = vmatmul.mubr.f32.gmra.mrb[0].mxu0 %v438
      %v659 = vpop.f32.mrb[0].mxu0
      %v660 = vadd.f32 0.0, %v659
      %v661 = vpop.f32.mrb[0].mxu0
      %662 = vmatprep.mubr.f32.mxu0 0.0
      %663 = vmatmul.mubr.f32.gmra.mrb[0].mxu0 %v440
      %v664 = vpop.f32.mrb[0].mxu0
      %v665 = vadd.f32 0.0, %v664
      %v666 = vpop.f32.mrb[0].mxu0
      %667 = vmatprep.mubr.f32.mxu0 0.0
      %668 = vmatmul.mubr.f32.gmra.mrb[0].mxu0 %v442
      %v669 = vpop.f32.mrb[0].mxu0
      %v670 = vadd.f32 0.0, %v669
      %v671 = vpop.f32.mrb[0].mxu0
      %672 = vdwg.mxu0
      %v673 = vsel %vm379, %v199, 0
      %v675 = vsel %vm379, %v200, 0
      %v677 = vsel %vm379, %v202, 0
      %v679 = vsel %vm379, %v203, 0
      %v681 = vsel %vm379, %v205, 0
      %v683 = vsel %vm379, %v206, 0
      %v685 = vsel %vm379, %v208, 0
      %v687 = vsel %vm379, %v209, 0
      %v689 = vsel %vm379, %v211, 0
      %v691 = vsel %vm379, %v212, 0
      %v693 = vsel %vm379, %v214, 0
      %v695 = vsel %vm379, %v215, 0
      %v697 = vsel %vm379, %v217, 0
      %v699 = vsel %vm379, %v218, 0
      %v701 = vsel %vm379, %v220, 0
      %v703 = vsel %vm379, %v221, 0
      %v705 = vsel %vm379, %v223, 0
      %v707 = vsel %vm379, %v224, 0
      %v709 = vsel %vm379, %v226, 0
      %v711 = vsel %vm379, %v227, 0
      %v713 = vsel %vm379, %v229, 0
      %v715 = vsel %vm379, %v230, 0
      %v717 = vsel %vm379, %v232, 0
      %v719 = vsel %vm379, %v233, 0
      %v721 = vsel %vm379, %v235, 0
      %v723 = vsel %vm379, %v236, 0
      %v725 = vsel %vm379, %v238, 0
      %v727 = vsel %vm379, %v239, 0
      %v729 = vsel %vm379, %v241, 0
      %v731 = vsel %vm379, %v242, 0
      %v733 = vsel %vm379, %v244, 0
      %v735 = vsel %vm379, %v245, 0
      %v738 = vsel %vm444, %v247, 0
      %740 = vmatprep.subr.mxu0 0.0
      %741 = vmatpush1.msra.mxu0 %v738
      %742 = vmatprep.subr.mxu0 0.0
      %743 = vmatpush1.msra.mxu0 0.0
      %744 = vmatprep.subr.mxu0 0.0
      %745 = vmatpush1.msra.mxu0 0.0
      %746 = vmatprep.subr.mxu0 0.0
      %747 = vmatpush1.msra.mxu0 0.0
      %748 = vmatprep.subr.mxu0 0.0
      %749 = vmatpush1.msra.mxu0 0.0
      %750 = vmatprep.subr.mxu0 0.0
      %751 = vmatpush1.msra.mxu0 0.0
      %752 = vmatprep.subr.mxu0 0.0
      %753 = vmatpush1.msra.mxu0 0.0
      %754 = vmatprep.subr.mxu0 0.0
      %755 = vmatpush1.msra.mxu0 0.0
      %756 = vmatprep.subr.mxu0 0.0
      %757 = vmatpush1.msra.mxu0 0.0
      %758 = vmatprep.subr.mxu0 0.0
      %759 = vmatpush1.msra.mxu0 0.0
      %760 = vmatprep.subr.mxu0 0.0
      %761 = vmatpush1.msra.mxu0 0.0
      %762 = vmatprep.subr.mxu0 0.0
      %763 = vmatpush1.msra.mxu0 0.0
      %764 = vmatprep.subr.mxu0 0.0
      %765 = vmatpush1.msra.mxu0 0.0
      %766 = vmatprep.subr.mxu0 0.0
      %767 = vmatpush1.msra.mxu0 0.0
      %768 = vmatprep.subr.mxu0 0.0
      %769 = vmatpush1.msra.mxu0 0.0
      %770 = vmatprep.subr.mxu0 0.0
      %771 = vmatpush1.msra.mxu0 0.0
      %772 = vmatprep.subr.mxu0 0.0
      %773 = vmatpush1.msra.mxu0 0.0
      %774 = vmatprep.subr.mxu0 0.0
      %775 = vmatpush1.msra.mxu0 0.0
      %776 = vmatprep.subr.mxu0 0.0
      %777 = vmatpush1.msra.mxu0 0.0
      %778 = vmatprep.subr.mxu0 0.0
      %779 = vmatpush1.msra.mxu0 0.0
      %780 = vmatprep.subr.mxu0 0.0
      %781 = vmatpush1.msra.mxu0 0.0
      %782 = vmatprep.subr.mxu0 0.0
      %783 = vmatpush1.msra.mxu0 0.0
      %784 = vmatprep.subr.mxu0 0.0
      %785 = vmatpush1.msra.mxu0 0.0
      %786 = vmatprep.subr.mxu0 0.0
      %787 = vmatpush1.msra.mxu0 0.0
      %788 = vmatprep.subr.mxu0 0.0
      %789 = vmatpush1.msra.mxu0 0.0
      %790 = vmatprep.subr.mxu0 0.0
      %791 = vmatpush1.msra.mxu0 0.0
      %792 = vmatprep.subr.mxu0 0.0
      %793 = vmatpush1.msra.mxu0 0.0
      %794 = vmatprep.subr.mxu0 0.0
      %795 = vmatpush1.msra.mxu0 0.0
      %796 = vmatprep.subr.mxu0 0.0
      %797 = vmatpush1.msra.mxu0 0.0
      %798 = vmatprep.subr.mxu0 0.0
      %799 = vmatpush1.msra.mxu0 0.0
      %800 = vmatprep.subr.mxu0 0.0
      %801 = vmatpush1.msra.mxu0 0.0
      %802 = vmatprep.subr.mxu0 0.0
      %803 = vmatpush1.msra.mxu0 0.0
      %804 = vmatprep.mubr.f32.mxu0 0.0
      %805 = vmatmul.mubr.f32.gmra.mrb[0].mxu0 %v673
      %v806 = vpop.f32.mrb[0].mxu0
      %v807 = vadd.f32 %v515, %v806
      %v808 = vpop.f32.mrb[0].mxu0
      %809 = vmatprep.mubr.f32.mxu0 0.0
      %810 = vmatmul.mubr.f32.gmra.mrb[0].mxu0 %v675
      %v811 = vpop.f32.mrb[0].mxu0
      %v812 = vadd.f32 %v520, %v811
      %v813 = vpop.f32.mrb[0].mxu0
      %814 = vmatprep.mubr.f32.mxu0 0.0
      %815 = vmatmul.mubr.f32.gmra.mrb[0].mxu0 %v677
      %v816 = vpop.f32.mrb[0].mxu0
      %v817 = vadd.f32 %v525, %v816
      %v818 = vpop.f32.mrb[0].mxu0
      %819 = vmatprep.mubr.f32.mxu0 0.0
      %820 = vmatmul.mubr.f32.gmra.mrb[0].mxu0 %v679
      %v821 = vpop.f32.mrb[0].mxu0
      %v822 = vadd.f32 %v530, %v821
      %v823 = vpop.f32.mrb[0].mxu0
      %824 = vmatprep.mubr.f32.mxu0 0.0
      %825 = vmatmul.mubr.f32.gmra.mrb[0].mxu0 %v681
      %v826 = vpop.f32.mrb[0].mxu0
      %v827 = vadd.f32 %v535, %v826
      %v828 = vpop.f32.mrb[0].mxu0
      %829 = vmatprep.mubr.f32.mxu0 0.0
      %830 = vmatmul.mubr.f32.gmra.mrb[0].mxu0 %v683
      %v831 = vpop.f32.mrb[0].mxu0
      %v832 = vadd.f32 %v540, %v831
      %v833 = vpop.f32.mrb[0].mxu0
      %834 = vmatprep.mubr.f32.mxu0 0.0
      %835 = vmatmul.mubr.f32.gmra.mrb[0].mxu0 %v685
      %v836 = vpop.f32.mrb[0].mxu0
      %v837 = vadd.f32 %v545, %v836
      %v838 = vpop.f32.mrb[0].mxu0
      %839 = vmatprep.mubr.f32.mxu0 0.0
      %840 = vmatmul.mubr.f32.gmra.mrb[0].mxu0 %v687
      %v841 = vpop.f32.mrb[0].mxu0
      %v842 = vadd.f32 %v550, %v841
      %v843 = vpop.f32.mrb[0].mxu0
      %844 = vmatprep.mubr.f32.mxu0 0.0
      %845 = vmatmul.mubr.f32.gmra.mrb[0].mxu0 %v689
      %v846 = vpop.f32.mrb[0].mxu0
      %v847 = vadd.f32 %v555, %v846
      %v848 = vpop.f32.mrb[0].mxu0
      %849 = vmatprep.mubr.f32.mxu0 0.0
      %850 = vmatmul.mubr.f32.gmra.mrb[0].mxu0 %v691
      %v851 = vpop.f32.mrb[0].mxu0
      %v852 = vadd.f32 %v560, %v851
      %v853 = vpop.f32.mrb[0].mxu0
      %854 = vmatprep.mubr.f32.mxu0 0.0
      %855 = vmatmul.mubr.f32.gmra.mrb[0].mxu0 %v693
      %v856 = vpop.f32.mrb[0].mxu0
      %v857 = vadd.f32 %v565, %v856
      %v858 = vpop.f32.mrb[0].mxu0
      %859 = vmatprep.mubr.f32.mxu0 0.0
      %860 = vmatmul.mubr.f32.gmra.mrb[0].mxu0 %v695
      %v861 = vpop.f32.mrb[0].mxu0
      %v862 = vadd.f32 %v570, %v861
      %v863 = vpop.f32.mrb[0].mxu0
      %864 = vmatprep.mubr.f32.mxu0 0.0
      %865 = vmatmul.mubr.f32.gmra.mrb[0].mxu0 %v697
      %v866 = vpop.f32.mrb[0].mxu0
      %v867 = vadd.f32 %v575, %v866
      %v868 = vpop.f32.mrb[0].mxu0
      %869 = vmatprep.mubr.f32.mxu0 0.0
      %870 = vmatmul.mubr.f32.gmra.mrb[0].mxu0 %v699
      %v871 = vpop.f32.mrb[0].mxu0
      %v872 = vadd.f32 %v580, %v871
      %v873 = vpop.f32.mrb[0].mxu0
      %874 = vmatprep.mubr.f32.mxu0 0.0
      %875 = vmatmul.mubr.f32.gmra.mrb[0].mxu0 %v701
      %v876 = vpop.f32.mrb[0].mxu0
      %v877 = vadd.f32 %v585, %v876
      %v878 = vpop.f32.mrb[0].mxu0
      %879 = vmatprep.mubr.f32.mxu0 0.0
      %880 = vmatmul.mubr.f32.gmra.mrb[0].mxu0 %v703
      %v881 = vpop.f32.mrb[0].mxu0
      %v882 = vadd.f32 %v590, %v881
      %v883 = vpop.f32.mrb[0].mxu0
      %884 = vmatprep.mubr.f32.mxu0 0.0
      %885 = vmatmul.mubr.f32.gmra.mrb[0].mxu0 %v705
      %v886 = vpop.f32.mrb[0].mxu0
      %v887 = vadd.f32 %v595, %v886
      %v888 = vpop.f32.mrb[0].mxu0
      %889 = vmatprep.mubr.f32.mxu0 0.0
      %890 = vmatmul.mubr.f32.gmra.mrb[0].mxu0 %v707
      %v891 = vpop.f32.mrb[0].mxu0
      %v892 = vadd.f32 %v600, %v891
      %v893 = vpop.f32.mrb[0].mxu0
      %894 = vmatprep.mubr.f32.mxu0 0.0
      %895 = vmatmul.mubr.f32.gmra.mrb[0].mxu0 %v709
      %v896 = vpop.f32.mrb[0].mxu0
      %v897 = vadd.f32 %v605, %v896
      %v898 = vpop.f32.mrb[0].mxu0
      %899 = vmatprep.mubr.f32.mxu0 0.0
      %900 = vmatmul.mubr.f32.gmra.mrb[0].mxu0 %v711
      %v901 = vpop.f32.mrb[0].mxu0
      %v902 = vadd.f32 %v610, %v901
      %v903 = vpop.f32.mrb[0].mxu0
      %904 = vmatprep.mubr.f32.mxu0 0.0
      %905 = vmatmul.mubr.f32.gmra.mrb[0].mxu0 %v713
      %v906 = vpop.f32.mrb[0].mxu0
      %v907 = vadd.f32 %v615, %v906
      %v908 = vpop.f32.mrb[0].mxu0
      %909 = vmatprep.mubr.f32.mxu0 0.0
      %910 = vmatmul.mubr.f32.gmra.mrb[0].mxu0 %v715
      %v911 = vpop.f32.mrb[0].mxu0
      %v912 = vadd.f32 %v620, %v911
      %v913 = vpop.f32.mrb[0].mxu0
      %914 = vmatprep.mubr.f32.mxu0 0.0
      %915 = vmatmul.mubr.f32.gmra.mrb[0].mxu0 %v717
      %v916 = vpop.f32.mrb[0].mxu0
      %v917 = vadd.f32 %v625, %v916
      %v918 = vpop.f32.mrb[0].mxu0
      %919 = vmatprep.mubr.f32.mxu0 0.0
      %920 = vmatmul.mubr.f32.gmra.mrb[0].mxu0 %v719
      %v921 = vpop.f32.mrb[0].mxu0
      %v922 = vadd.f32 %v630, %v921
      %v923 = vpop.f32.mrb[0].mxu0
      %924 = vmatprep.mubr.f32.mxu0 0.0
      %925 = vmatmul.mubr.f32.gmra.mrb[0].mxu0 %v721
      %v926 = vpop.f32.mrb[0].mxu0
      %v927 = vadd.f32 %v635, %v926
      %v928 = vpop.f32.mrb[0].mxu0
      %929 = vmatprep.mubr.f32.mxu0 0.0
      %930 = vmatmul.mubr.f32.gmra.mrb[0].mxu0 %v723
      %v931 = vpop.f32.mrb[0].mxu0
      %v932 = vadd.f32 %v640, %v931
      %v933 = vpop.f32.mrb[0].mxu0
      %934 = vmatprep.mubr.f32.mxu0 0.0
      %935 = vmatmul.mubr.f32.gmra.mrb[0].mxu0 %v725
      %v936 = vpop.f32.mrb[0].mxu0
      %v937 = vadd.f32 %v645, %v936
      %v938 = vpop.f32.mrb[0].mxu0
      %939 = vmatprep.mubr.f32.mxu0 0.0
      %940 = vmatmul.mubr.f32.gmra.mrb[0].mxu0 %v727
      %v941 = vpop.f32.mrb[0].mxu0
      %v942 = vadd.f32 %v650, %v941
      %v943 = vpop.f32.mrb[0].mxu0
      %944 = vmatprep.mubr.f32.mxu0 0.0
      %945 = vmatmul.mubr.f32.gmra.mrb[0].mxu0 %v729
      %v946 = vpop.f32.mrb[0].mxu0
      %v947 = vadd.f32 %v655, %v946
      %v948 = vpop.f32.mrb[0].mxu0
      %949 = vmatprep.mubr.f32.mxu0 0.0
      %950 = vmatmul.mubr.f32.gmra.mrb[0].mxu0 %v731
      %v951 = vpop.f32.mrb[0].mxu0
      %v952 = vadd.f32 %v660, %v951
      %v953 = vpop.f32.mrb[0].mxu0
      %954 = vmatprep.mubr.f32.mxu0 0.0
      %955 = vmatmul.mubr.f32.gmra.mrb[0].mxu0 %v733
      %v956 = vpop.f32.mrb[0].mxu0
      %v957 = vadd.f32 %v665, %v956
      %v958 = vpop.f32.mrb[0].mxu0
      %959 = vmatprep.mubr.f32.mxu0 0.0
      %960 = vmatmul.mubr.f32.gmra.mrb[0].mxu0 %v735
      %v961 = vpop.f32.mrb[0].mxu0
      %v962 = vadd.f32 %v670, %v961
      %v963 = vpop.f32.mrb[0].mxu0
      %964 = vdwg.mxu0
      %vm965 = vcmask 1045504
      %v966 = vrot.slane %v199, 2
      %v967 = vrot.slane %v200, 2
      %v968 = vsel %vm965, %v966, %v967
      %v969 = vrot.slane %v201, 2
      %v970 = vsel %vm965, %v967, %v969
      %v971 = vrot.slane %v202, 2
      %v972 = vrot.slane %v203, 2
      %v973 = vsel %vm965, %v971, %v972
      %v974 = vrot.slane %v204, 2
      %v975 = vsel %vm965, %v972, %v974
      %v976 = vrot.slane %v205, 2
      %v977 = vrot.slane %v206, 2
      %v978 = vsel %vm965, %v976, %v977
      %v979 = vrot.slane %v207, 2
      %v980 = vsel %vm965, %v977, %v979
      %v981 = vrot.slane %v208, 2
      %v982 = vrot.slane %v209, 2
      %v983 = vsel %vm965, %v981, %v982
      %v984 = vrot.slane %v210, 2
      %v985 = vsel %vm965, %v982, %v984
      %v986 = vrot.slane %v211, 2
      %v987 = vrot.slane %v212, 2
      %v988 = vsel %vm965, %v986, %v987
      %v989 = vrot.slane %v213, 2
      %v990 = vsel %vm965, %v987, %v989
      %v991 = vrot.slane %v214, 2
      %v992 = vrot.slane %v215, 2
      %v993 = vsel %vm965, %v991, %v992
      %v994 = vrot.slane %v216, 2
      %v995 = vsel %vm965, %v992, %v994
      %v996 = vrot.slane %v217, 2
      %v997 = vrot.slane %v218, 2
      %v998 = vsel %vm965, %v996, %v997
      %v999 = vrot.slane %v219, 2
      %v1000 = vsel %vm965, %v997, %v999
      %v1001 = vrot.slane %v220, 2
      %v1002 = vrot.slane %v221, 2
      %v1003 = vsel %vm965, %v1001, %v1002
      %v1004 = vrot.slane %v222, 2
      %v1005 = vsel %vm965, %v1002, %v1004
      %v1006 = vrot.slane %v223, 2
      %v1007 = vrot.slane %v224, 2
      %v1008 = vsel %vm965, %v1006, %v1007
      %v1009 = vrot.slane %v225, 2
      %v1010 = vsel %vm965, %v1007, %v1009
      %v1011 = vrot.slane %v226, 2
      %v1012 = vrot.slane %v227, 2
      %v1013 = vsel %vm965, %v1011, %v1012
      %v1014 = vrot.slane %v228, 2
      %v1015 = vsel %vm965, %v1012, %v1014
      %v1016 = vrot.slane %v229, 2
      %v1017 = vrot.slane %v230, 2
      %v1018 = vsel %vm965, %v1016, %v1017
      %v1019 = vrot.slane %v231, 2
      %v1020 = vsel %vm965, %v1017, %v1019
      %v1021 = vrot.slane %v232, 2
      %v1022 = vrot.slane %v233, 2
      %v1023 = vsel %vm965, %v1021, %v1022
      %v1024 = vrot.slane %v234, 2
      %v1025 = vsel %vm965, %v1022, %v1024
      %v1026 = vrot.slane %v235, 2
      %v1027 = vrot.slane %v236, 2
      %v1028 = vsel %vm965, %v1026, %v1027
      %v1029 = vrot.slane %v237, 2
      %v1030 = vsel %vm965, %v1027, %v1029
      %v1031 = vrot.slane %v238, 2
      %v1032 = vrot.slane %v239, 2
      %v1033 = vsel %vm965, %v1031, %v1032
      %v1034 = vrot.slane %v240, 2
      %v1035 = vsel %vm965, %v1032, %v1034
      %v1036 = vrot.slane %v241, 2
      %v1037 = vrot.slane %v242, 2
      %v1038 = vsel %vm965, %v1036, %v1037
      %v1039 = vrot.slane %v243, 2
      %v1040 = vsel %vm965, %v1037, %v1039
      %v1041 = vrot.slane %v244, 2
      %v1042 = vrot.slane %v245, 2
      %v1043 = vsel %vm965, %v1041, %v1042
      %v1044 = vrot.slane %v246, 2
      %v1045 = vsel %vm965, %v1042, %v1044
      %s1046 = scalar_lea.vmem %s1, 8
      %v1047 = vld [vmem:[%s1046] sm:$0xf]
      %v1048 = vsel %vm379, %v968, 0
      %v1050 = vsel %vm379, %v970, 0
      %v1052 = vsel %vm379, %v973, 0
      %v1054 = vsel %vm379, %v975, 0
      %v1056 = vsel %vm379, %v978, 0
      %v1058 = vsel %vm379, %v980, 0
      %v1060 = vsel %vm379, %v983, 0
      %v1062 = vsel %vm379, %v985, 0
      %v1064 = vsel %vm379, %v988, 0
      %v1066 = vsel %vm379, %v990, 0
      %v1068 = vsel %vm379, %v993, 0
      %v1070 = vsel %vm379, %v995, 0
      %v1072 = vsel %vm379, %v998, 0
      %v1074 = vsel %vm379, %v1000, 0
      %v1076 = vsel %vm379, %v1003, 0
      %v1078 = vsel %vm379, %v1005, 0
      %v1080 = vsel %vm379, %v1008, 0
      %v1082 = vsel %vm379, %v1010, 0
      %v1084 = vsel %vm379, %v1013, 0
      %v1086 = vsel %vm379, %v1015, 0
      %v1088 = vsel %vm379, %v1018, 0
      %v1090 = vsel %vm379, %v1020, 0
      %v1092 = vsel %vm379, %v1023, 0
      %v1094 = vsel %vm379, %v1025, 0
      %v1096 = vsel %vm379, %v1028, 0
      %v1098 = vsel %vm379, %v1030, 0
      %v1100 = vsel %vm379, %v1033, 0
      %v1102 = vsel %vm379, %v1035, 0
      %v1104 = vsel %vm379, %v1038, 0
      %v1106 = vsel %vm379, %v1040, 0
      %v1108 = vsel %vm379, %v1043, 0
      %v1110 = vsel %vm379, %v1045, 0
      %v1113 = vsel %vm444, %v1047, 0
      %1115 = vmatprep.subr.mxu0 0.0
      %1116 = vmatpush1.msra.mxu0 %v1113
      %1117 = vmatprep.subr.mxu0 0.0
      %1118 = vmatpush1.msra.mxu0 0.0
      %1119 = vmatprep.subr.mxu0 0.0
      %1120 = vmatpush1.msra.mxu0 0.0
      %1121 = vmatprep.subr.mxu0 0.0
      %1122 = vmatpush1.msra.mxu0 0.0
      %1123 = vmatprep.subr.mxu0 0.0
      %1124 = vmatpush1.msra.mxu0 0.0
      %1125 = vmatprep.subr.mxu0 0.0
      %1126 = vmatpush1.msra.mxu0 0.0
      %1127 = vmatprep.subr.mxu0 0.0
      %1128 = vmatpush1.msra.mxu0 0.0
      %1129 = vmatprep.subr.mxu0 0.0
      %1130 = vmatpush1.msra.mxu0 0.0
      %1131 = vmatprep.subr.mxu0 0.0
      %1132 = vmatpush1.msra.mxu0 0.0
      %1133 = vmatprep.subr.mxu0 0.0
      %1134 = vmatpush1.msra.mxu0 0.0
      %1135 = vmatprep.subr.mxu0 0.0
      %1136 = vmatpush1.msra.mxu0 0.0
      %1137 = vmatprep.subr.mxu0 0.0
      %1138 = vmatpush1.msra.mxu0 0.0
      %1139 = vmatprep.subr.mxu0 0.0
      %1140 = vmatpush1.msra.mxu0 0.0
      %1141 = vmatprep.subr.mxu0 0.0
      %1142 = vmatpush1.msra.mxu0 0.0
      %1143 = vmatprep.subr.mxu0 0.0
      %1144 = vmatpush1.msra.mxu0 0.0
      %1145 = vmatprep.subr.mxu0 0.0
      %1146 = vmatpush1.msra.mxu0 0.0
      %1147 = vmatprep.subr.mxu0 0.0
      %1148 = vmatpush1.msra.mxu0 0.0
      %1149 = vmatprep.subr.mxu0 0.0
      %1150 = vmatpush1.msra.mxu0 0.0
      %1151 = vmatprep.subr.mxu0 0.0
      %1152 = vmatpush1.msra.mxu0 0.0
      %1153 = vmatprep.subr.mxu0 0.0
      %1154 = vmatpush1.msra.mxu0 0.0
      %1155 = vmatprep.subr.mxu0 0.0
      %1156 = vmatpush1.msra.mxu0 0.0
      %1157 = vmatprep.subr.mxu0 0.0
      %1158 = vmatpush1.msra.mxu0 0.0
      %1159 = vmatprep.subr.mxu0 0.0
      %1160 = vmatpush1.msra.mxu0 0.0
      %1161 = vmatprep.subr.mxu0 0.0
      %1162 = vmatpush1.msra.mxu0 0.0
      %1163 = vmatprep.subr.mxu0 0.0
      %1164 = vmatpush1.msra.mxu0 0.0
      %1165 = vmatprep.subr.mxu0 0.0
      %1166 = vmatpush1.msra.mxu0 0.0
      %1167 = vmatprep.subr.mxu0 0.0
      %1168 = vmatpush1.msra.mxu0 0.0
      %1169 = vmatprep.subr.mxu0 0.0
      %1170 = vmatpush1.msra.mxu0 0.0
      %1171 = vmatprep.subr.mxu0 0.0
      %1172 = vmatpush1.msra.mxu0 0.0
      %1173 = vmatprep.subr.mxu0 0.0
      %1174 = vmatpush1.msra.mxu0 0.0
      %1175 = vmatprep.subr.mxu0 0.0
      %1176 = vmatpush1.msra.mxu0 0.0
      %1177 = vmatprep.subr.mxu0 0.0
      %1178 = vmatpush1.msra.mxu0 0.0
      %1179 = vmatprep.mubr.f32.mxu0 0.0
      %1180 = vmatmul.mubr.f32.gmra.mrb[0].mxu0 %v1048
      %v1181 = vpop.f32.mrb[0].mxu0
      %v1182 = vadd.f32 0.0, %v1181
      %v1183 = vpop.f32.mrb[0].mxu0
      %1184 = vmatprep.mubr.f32.mxu0 0.0
      %1185 = vmatmul.mubr.f32.gmra.mrb[0].mxu0 %v1050
      %v1186 = vpop.f32.mrb[0].mxu0
      %v1187 = vadd.f32 0.0, %v1186
      %v1188 = vpop.f32.mrb[0].mxu0
      %1189 = vmatprep.mubr.f32.mxu0 0.0
      %1190 = vmatmul.mubr.f32.gmra.mrb[0].mxu0 %v1052
      %v1191 = vpop.f32.mrb[0].mxu0
      %v1192 = vadd.f32 0.0, %v1191
      %v1193 = vpop.f32.mrb[0].mxu0
      %1194 = vmatprep.mubr.f32.mxu0 0.0
      %1195 = vmatmul.mubr.f32.gmra.mrb[0].mxu0 %v1054
      %v1196 = vpop.f32.mrb[0].mxu0
      %v1197 = vadd.f32 0.0, %v1196
      %v1198 = vpop.f32.mrb[0].mxu0
      %1199 = vmatprep.mubr.f32.mxu0 0.0
      %1200 = vmatmul.mubr.f32.gmra.mrb[0].mxu0 %v1056
      %v1201 = vpop.f32.mrb[0].mxu0
      %v1202 = vadd.f32 0.0, %v1201
      %v1203 = vpop.f32.mrb[0].mxu0
      %1204 = vmatprep.mubr.f32.mxu0 0.0
      %1205 = vmatmul.mubr.f32.gmra.mrb[0].mxu0 %v1058
      %v1206 = vpop.f32.mrb[0].mxu0
      %v1207 = vadd.f32 0.0, %v1206
      %v1208 = vpop.f32.mrb[0].mxu0
      %1209 = vmatprep.mubr.f32.mxu0 0.0
      %1210 = vmatmul.mubr.f32.gmra.mrb[0].mxu0 %v1060
      %v1211 = vpop.f32.mrb[0].mxu0
      %v1212 = vadd.f32 0.0, %v1211
      %v1213 = vpop.f32.mrb[0].mxu0
      %1214 = vmatprep.mubr.f32.mxu0 0.0
      %1215 = vmatmul.mubr.f32.gmra.mrb[0].mxu0 %v1062
      %v1216 = vpop.f32.mrb[0].mxu0
      %v1217 = vadd.f32 0.0, %v1216
      %v1218 = vpop.f32.mrb[0].mxu0
      %1219 = vmatprep.mubr.f32.mxu0 0.0
      %1220 = vmatmul.mubr.f32.gmra.mrb[0].mxu0 %v1064
      %v1221 = vpop.f32.mrb[0].mxu0
      %v1222 = vadd.f32 0.0, %v1221
      %v1223 = vpop.f32.mrb[0].mxu0
      %1224 = vmatprep.mubr.f32.mxu0 0.0
      %1225 = vmatmul.mubr.f32.gmra.mrb[0].mxu0 %v1066
      %v1226 = vpop.f32.mrb[0].mxu0
      %v1227 = vadd.f32 0.0, %v1226
      %v1228 = vpop.f32.mrb[0].mxu0
      %1229 = vmatprep.mubr.f32.mxu0 0.0
      %1230 = vmatmul.mubr.f32.gmra.mrb[0].mxu0 %v1068
      %v1231 = vpop.f32.mrb[0].mxu0
      %v1232 = vadd.f32 0.0, %v1231
      %v1233 = vpop.f32.mrb[0].mxu0
      %1234 = vmatprep.mubr.f32.mxu0 0.0
      %1235 = vmatmul.mubr.f32.gmra.mrb[0].mxu0 %v1070
      %v1236 = vpop.f32.mrb[0].mxu0
      %v1237 = vadd.f32 0.0, %v1236
      %v1238 = vpop.f32.mrb[0].mxu0
      %1239 = vmatprep.mubr.f32.mxu0 0.0
      %1240 = vmatmul.mubr.f32.gmra.mrb[0].mxu0 %v1072
      %v1241 = vpop.f32.mrb[0].mxu0
      %v1242 = vadd.f32 0.0, %v1241
      %v1243 = vpop.f32.mrb[0].mxu0
      %1244 = vmatprep.mubr.f32.mxu0 0.0
      %1245 = vmatmul.mubr.f32.gmra.mrb[0].mxu0 %v1074
      %v1246 = vpop.f32.mrb[0].mxu0
      %v1247 = vadd.f32 0.0, %v1246
      %v1248 = vpop.f32.mrb[0].mxu0
      %1249 = vmatprep.mubr.f32.mxu0 0.0
      %1250 = vmatmul.mubr.f32.gmra.mrb[0].mxu0 %v1076
      %v1251 = vpop.f32.mrb[0].mxu0
      %v1252 = vadd.f32 0.0, %v1251
      %v1253 = vpop.f32.mrb[0].mxu0
      %1254 = vmatprep.mubr.f32.mxu0 0.0
      %1255 = vmatmul.mubr.f32.gmra.mrb[0].mxu0 %v1078
      %v1256 = vpop.f32.mrb[0].mxu0
      %v1257 = vadd.f32 0.0, %v1256
      %v1258 = vpop.f32.mrb[0].mxu0
      %1259 = vmatprep.mubr.f32.mxu0 0.0
      %1260 = vmatmul.mubr.f32.gmra.mrb[0].mxu0 %v1080
      %v1261 = vpop.f32.mrb[0].mxu0
      %v1262 = vadd.f32 0.0, %v1261
      %v1263 = vpop.f32.mrb[0].mxu0
      %1264 = vmatprep.mubr.f32.mxu0 0.0
      %1265 = vmatmul.mubr.f32.gmra.mrb[0].mxu0 %v1082
      %v1266 = vpop.f32.mrb[0].mxu0
      %v1267 = vadd.f32 0.0, %v1266
      %v1268 = vpop.f32.mrb[0].mxu0
      %1269 = vmatprep.mubr.f32.mxu0 0.0
      %1270 = vmatmul.mubr.f32.gmra.mrb[0].mxu0 %v1084
      %v1271 = vpop.f32.mrb[0].mxu0
      %v1272 = vadd.f32 0.0, %v1271
      %v1273 = vpop.f32.mrb[0].mxu0
      %1274 = vmatprep.mubr.f32.mxu0 0.0
      %1275 = vmatmul.mubr.f32.gmra.mrb[0].mxu0 %v1086
      %v1276 = vpop.f32.mrb[0].mxu0
      %v1277 = vadd.f32 0.0, %v1276
      %v1278 = vpop.f32.mrb[0].mxu0
      %1279 = vmatprep.mubr.f32.mxu0 0.0
      %1280 = vmatmul.mubr.f32.gmra.mrb[0].mxu0 %v1088
      %v1281 = vpop.f32.mrb[0].mxu0
      %v1282 = vadd.f32 0.0, %v1281
      %v1283 = vpop.f32.mrb[0].mxu0
      %1284 = vmatprep.mubr.f32.mxu0 0.0
      %1285 = vmatmul.mubr.f32.gmra.mrb[0].mxu0 %v1090
      %v1286 = vpop.f32.mrb[0].mxu0
      %v1287 = vadd.f32 0.0, %v1286
      %v1288 = vpop.f32.mrb[0].mxu0
      %1289 = vmatprep.mubr.f32.mxu0 0.0
      %1290 = vmatmul.mubr.f32.gmra.mrb[0].mxu0 %v1092
      %v1291 = vpop.f32.mrb[0].mxu0
      %v1292 = vadd.f32 0.0, %v1291
      %v1293 = vpop.f32.mrb[0].mxu0
      %1294 = vmatprep.mubr.f32.mxu0 0.0
      %1295 = vmatmul.mubr.f32.gmra.mrb[0].mxu0 %v1094
      %v1296 = vpop.f32.mrb[0].mxu0
      %v1297 = vadd.f32 0.0, %v1296
      %v1298 = vpop.f32.mrb[0].mxu0
      %1299 = vmatprep.mubr.f32.mxu0 0.0
      %1300 = vmatmul.mubr.f32.gmra.mrb[0].mxu0 %v1096
      %v1301 = vpop.f32.mrb[0].mxu0
      %v1302 = vadd.f32 0.0, %v1301
      %v1303 = vpop.f32.mrb[0].mxu0
      %1304 = vmatprep.mubr.f32.mxu0 0.0
      %1305 = vmatmul.mubr.f32.gmra.mrb[0].mxu0 %v1098
      %v1306 = vpop.f32.mrb[0].mxu0
      %v1307 = vadd.f32 0.0, %v1306
      %v1308 = vpop.f32.mrb[0].mxu0
      %1309 = vmatprep.mubr.f32.mxu0 0.0
      %1310 = vmatmul.mubr.f32.gmra.mrb[0].mxu0 %v1100
      %v1311 = vpop.f32.mrb[0].mxu0
      %v1312 = vadd.f32 0.0, %v1311
      %v1313 = vpop.f32.mrb[0].mxu0
      %1314 = vmatprep.mubr.f32.mxu0 0.0
      %1315 = vmatmul.mubr.f32.gmra.mrb[0].mxu0 %v1102
      %v1316 = vpop.f32.mrb[0].mxu0
      %v1317 = vadd.f32 0.0, %v1316
      %v1318 = vpop.f32.mrb[0].mxu0
      %1319 = vmatprep.mubr.f32.mxu0 0.0
      %1320 = vmatmul.mubr.f32.gmra.mrb[0].mxu0 %v1104
      %v1321 = vpop.f32.mrb[0].mxu0
      %v1322 = vadd.f32 0.0, %v1321
      %v1323 = vpop.f32.mrb[0].mxu0
      %1324 = vmatprep.mubr.f32.mxu0 0.0
      %1325 = vmatmul.mubr.f32.gmra.mrb[0].mxu0 %v1106
      %v1326 = vpop.f32.mrb[0].mxu0
      %v1327 = vadd.f32 0.0, %v1326
      %v1328 = vpop.f32.mrb[0].mxu0
      %1329 = vmatprep.mubr.f32.mxu0 0.0
      %1330 = vmatmul.mubr.f32.gmra.mrb[0].mxu0 %v1108
      %v1331 = vpop.f32.mrb[0].mxu0
      %v1332 = vadd.f32 0.0, %v1331
      %v1333 = vpop.f32.mrb[0].mxu0
      %1334 = vmatprep.mubr.f32.mxu0 0.0
      %1335 = vmatmul.mubr.f32.gmra.mrb[0].mxu0 %v1110
      %v1336 = vpop.f32.mrb[0].mxu0
      %v1337 = vadd.f32 0.0, %v1336
      %v1338 = vpop.f32.mrb[0].mxu0
      %1339 = vdwg.mxu0
      %v1340 = vadd.f32 %v807, %v1182
      %v1341 = vadd.f32 %v812, %v1187
      %v1342 = vadd.f32 %v817, %v1192
      %v1343 = vadd.f32 %v822, %v1197
      %v1344 = vadd.f32 %v827, %v1202
      %v1345 = vadd.f32 %v832, %v1207
      %v1346 = vadd.f32 %v837, %v1212
      %v1347 = vadd.f32 %v842, %v1217
      %v1348 = vadd.f32 %v847, %v1222
      %v1349 = vadd.f32 %v852, %v1227
      %v1350 = vadd.f32 %v857, %v1232
      %v1351 = vadd.f32 %v862, %v1237
      %v1352 = vadd.f32 %v867, %v1242
      %v1353 = vadd.f32 %v872, %v1247
      %v1354 = vadd.f32 %v877, %v1252
      %v1355 = vadd.f32 %v882, %v1257
      %v1356 = vadd.f32 %v887, %v1262
      %v1357 = vadd.f32 %v892, %v1267
      %v1358 = vadd.f32 %v897, %v1272
      %v1359 = vadd.f32 %v902, %v1277
      %v1360 = vadd.f32 %v907, %v1282
      %v1361 = vadd.f32 %v912, %v1287
      %v1362 = vadd.f32 %v917, %v1292
      %v1363 = vadd.f32 %v922, %v1297
      %v1364 = vadd.f32 %v927, %v1302
      %v1365 = vadd.f32 %v932, %v1307
      %v1366 = vadd.f32 %v937, %v1312
      %v1367 = vadd.f32 %v942, %v1317
      %v1368 = vadd.f32 %v947, %v1322
      %v1369 = vadd.f32 %v952, %v1327
      %v1370 = vadd.f32 %v957, %v1332
      %v1371 = vadd.f32 %v962, %v1337
      %s1372 = sadd.s32 %s196, 1
      %s1373 = smul.u32 %s1372, 24
      %s1374 = scalar_lea.vmem %s184, %s1373
      %v1375 = vld [vmem:[%s1374] sm:$0xff]
      %v1376 = vld [vmem:[%s1374 + $0x8] sm:$0xff]
      %v1377 = vld [vmem:[%s1374 + $0x10] sm:$0x3]
      %v1378 = vld [vmem:[%s1374 + $0x18] sm:$0xff]
      %v1379 = vld [vmem:[%s1374 + $0x20] sm:$0xff]
      %v1380 = vld [vmem:[%s1374 + $0x28] sm:$0x3]
      %v1381 = vld [vmem:[%s1374 + $0x30] sm:$0xff]
      %v1382 = vld [vmem:[%s1374 + $0x38] sm:$0xff]
      %v1383 = vld [vmem:[%s1374 + $0x40] sm:$0x3]
      %v1384 = vld [vmem:[%s1374 + $0x48] sm:$0xff]
      %v1385 = vld [vmem:[%s1374 + $0x50] sm:$0xff]
      %v1386 = vld [vmem:[%s1374 + $0x58] sm:$0x3]
      %v1387 = vld [vmem:[%s1374 + $0x60] sm:$0xff]
      %v1388 = vld [vmem:[%s1374 + $0x68] sm:$0xff]
      %v1389 = vld [vmem:[%s1374 + $0x70] sm:$0x3]
      %v1390 = vld [vmem:[%s1374 + $0x78] sm:$0xff]
      %v1391 = vld [vmem:[%s1374 + $0x80] sm:$0xff]
      %v1392 = vld [vmem:[%s1374 + $0x88] sm:$0x3]
      %v1393 = vld [vmem:[%s1374 + $0x90] sm:$0xff]
      %v1394 = vld [vmem:[%s1374 + $0x98] sm:$0xff]
      %v1395 = vld [vmem:[%s1374 + $0xa0] sm:$0x3]
      %v1396 = vld [vmem:[%s1374 + $0xa8] sm:$0xff]
      %v1397 = vld [vmem:[%s1374 + $0xb0] sm:$0xff]
      %v1398 = vld [vmem:[%s1374 + $0xb8] sm:$0x3]
      %v1399 = vld [vmem:[%s1374 + $0xc0] sm:$0xff]
      %v1400 = vld [vmem:[%s1374 + $0xc8] sm:$0xff]
      %v1401 = vld [vmem:[%s1374 + $0xd0] sm:$0x3]
      %v1402 = vld [vmem:[%s1374 + $0xd8] sm:$0xff]
      %v1403 = vld [vmem:[%s1374 + $0xe0] sm:$0xff]
      %v1404 = vld [vmem:[%s1374 + $0xe8] sm:$0x3]
      %v1405 = vld [vmem:[%s1374 + $0xf0] sm:$0xff]
      %v1406 = vld [vmem:[%s1374 + $0xf8] sm:$0xff]
      %v1407 = vld [vmem:[%s1374 + $0x100] sm:$0x3]
      %v1408 = vld [vmem:[%s1374 + $0x108] sm:$0xff]
      %v1409 = vld [vmem:[%s1374 + $0x110] sm:$0xff]
      %v1410 = vld [vmem:[%s1374 + $0x118] sm:$0x3]
      %v1411 = vld [vmem:[%s1374 + $0x120] sm:$0xff]
      %v1412 = vld [vmem:[%s1374 + $0x128] sm:$0xff]
      %v1413 = vld [vmem:[%s1374 + $0x130] sm:$0x3]
      %v1414 = vld [vmem:[%s1374 + $0x138] sm:$0xff]
      %v1415 = vld [vmem:[%s1374 + $0x140] sm:$0xff]
      %v1416 = vld [vmem:[%s1374 + $0x148] sm:$0x3]
      %v1417 = vld [vmem:[%s1374 + $0x150] sm:$0xff]
      %v1418 = vld [vmem:[%s1374 + $0x158] sm:$0xff]
      %v1419 = vld [vmem:[%s1374 + $0x160] sm:$0x3]
      %v1420 = vld [vmem:[%s1374 + $0x168] sm:$0xff]
      %v1421 = vld [vmem:[%s1374 + $0x170] sm:$0xff]
      %v1422 = vld [vmem:[%s1374 + $0x178] sm:$0x3]
      %s1423 = scalar_lea.vmem %s1, 12
      %v1424 = vld [vmem:[%s1423] sm:$0xf]
      %v1426 = vsel %vm379, %v1375, 0
      %v1429 = vsel %vm379, %v1376, 0
      %v1432 = vsel %vm379, %v1378, 0
      %v1435 = vsel %vm379, %v1379, 0
      %v1438 = vsel %vm379, %v1381, 0
      %v1441 = vsel %vm379, %v1382, 0
      %v1444 = vsel %vm379, %v1384, 0
      %v1447 = vsel %vm379, %v1385, 0
      %v1450 = vsel %vm379, %v1387, 0
      %v1453 = vsel %vm379, %v1388, 0
      %v1456 = vsel %vm379, %v1390, 0
      %v1459 = vsel %vm379, %v1391, 0
      %v1462 = vsel %vm379, %v1393, 0
      %v1465 = vsel %vm379, %v1394, 0
      %v1468 = vsel %vm379, %v1396, 0
      %v1471 = vsel %vm379, %v1397, 0
      %v1474 = vsel %vm379, %v1399, 0
      %v1477 = vsel %vm379, %v1400, 0
      %v1480 = vsel %vm379, %v1402, 0
      %v1483 = vsel %vm379, %v1403, 0
      %v1486 = vsel %vm379, %v1405, 0
      %v1489 = vsel %vm379, %v1406, 0
      %v1492 = vsel %vm379, %v1408, 0
      %v1495 = vsel %vm379, %v1409, 0
      %v1498 = vsel %vm379, %v1411, 0
      %v1501 = vsel %vm379, %v1412, 0
      %v1504 = vsel %vm379, %v1414, 0
      %v1507 = vsel %vm379, %v1415, 0
      %v1510 = vsel %vm379, %v1417, 0
      %v1513 = vsel %vm379, %v1418, 0
      %v1516 = vsel %vm379, %v1420, 0
      %v1519 = vsel %vm379, %v1421, 0
      %v1522 = vsel %vm444, %v1424, 0
      %1524 = vmatprep.subr.mxu0 0.0
      %1525 = vmatpush1.msra.mxu0 %v1522
      %1526 = vmatprep.subr.mxu0 0.0
      %1527 = vmatpush1.msra.mxu0 0.0
      %1528 = vmatprep.subr.mxu0 0.0
      %1529 = vmatpush1.msra.mxu0 0.0
      %1530 = vmatprep.subr.mxu0 0.0
      %1531 = vmatpush1.msra.mxu0 0.0
      %1532 = vmatprep.subr.mxu0 0.0
      %1533 = vmatpush1.msra.mxu0 0.0
      %1534 = vmatprep.subr.mxu0 0.0
      %1535 = vmatpush1.msra.mxu0 0.0
      %1536 = vmatprep.subr.mxu0 0.0
      %1537 = vmatpush1.msra.mxu0 0.0
      %1538 = vmatprep.subr.mxu0 0.0
      %1539 = vmatpush1.msra.mxu0 0.0
      %1540 = vmatprep.subr.mxu0 0.0
      %1541 = vmatpush1.msra.mxu0 0.0
      %1542 = vmatprep.subr.mxu0 0.0
      %1543 = vmatpush1.msra.mxu0 0.0
      %1544 = vmatprep.subr.mxu0 0.0
      %1545 = vmatpush1.msra.mxu0 0.0
      %1546 = vmatprep.subr.mxu0 0.0
      %1547 = vmatpush1.msra.mxu0 0.0
      %1548 = vmatprep.subr.mxu0 0.0
      %1549 = vmatpush1.msra.mxu0 0.0
      %1550 = vmatprep.subr.mxu0 0.0
      %1551 = vmatpush1.msra.mxu0 0.0
      %1552 = vmatprep.subr.mxu0 0.0
      %1553 = vmatpush1.msra.mxu0 0.0
      %1554 = vmatprep.subr.mxu0 0.0
      %1555 = vmatpush1.msra.mxu0 0.0
      %1556 = vmatprep.subr.mxu0 0.0
      %1557 = vmatpush1.msra.mxu0 0.0
      %1558 = vmatprep.subr.mxu0 0.0
      %1559 = vmatpush1.msra.mxu0 0.0
      %1560 = vmatprep.subr.mxu0 0.0
      %1561 = vmatpush1.msra.mxu0 0.0
      %1562 = vmatprep.subr.mxu0 0.0
      %1563 = vmatpush1.msra.mxu0 0.0
      %1564 = vmatprep.subr.mxu0 0.0
      %1565 = vmatpush1.msra.mxu0 0.0
      %1566 = vmatprep.subr.mxu0 0.0
      %1567 = vmatpush1.msra.mxu0 0.0
      %1568 = vmatprep.subr.mxu0 0.0
      %1569 = vmatpush1.msra.mxu0 0.0
      %1570 = vmatprep.subr.mxu0 0.0
      %1571 = vmatpush1.msra.mxu0 0.0
      %1572 = vmatprep.subr.mxu0 0.0
      %1573 = vmatpush1.msra.mxu0 0.0
      %1574 = vmatprep.subr.mxu0 0.0
      %1575 = vmatpush1.msra.mxu0 0.0
      %1576 = vmatprep.subr.mxu0 0.0
      %1577 = vmatpush1.msra.mxu0 0.0
      %1578 = vmatprep.subr.mxu0 0.0
      %1579 = vmatpush1.msra.mxu0 0.0
      %1580 = vmatprep.subr.mxu0 0.0
      %1581 = vmatpush1.msra.mxu0 0.0
      %1582 = vmatprep.subr.mxu0 0.0
      %1583 = vmatpush1.msra.mxu0 0.0
      %1584 = vmatprep.subr.mxu0 0.0
      %1585 = vmatpush1.msra.mxu0 0.0
      %1586 = vmatprep.subr.mxu0 0.0
      %1587 = vmatpush1.msra.mxu0 0.0
      %1588 = vmatprep.mubr.f32.mxu0 0.0
      %1589 = vmatmul.mubr.f32.gmra.mrb[0].mxu0 %v1426
      %v1590 = vpop.f32.mrb[0].mxu0
      %v1591 = vadd.f32 0.0, %v1590
      %v1592 = vpop.f32.mrb[0].mxu0
      %1593 = vmatprep.mubr.f32.mxu0 0.0
      %1594 = vmatmul.mubr.f32.gmra.mrb[0].mxu0 %v1429
      %v1595 = vpop.f32.mrb[0].mxu0
      %v1596 = vadd.f32 0.0, %v1595
      %v1597 = vpop.f32.mrb[0].mxu0
      %1598 = vmatprep.mubr.f32.mxu0 0.0
      %1599 = vmatmul.mubr.f32.gmra.mrb[0].mxu0 %v1432
      %v1600 = vpop.f32.mrb[0].mxu0
      %v1601 = vadd.f32 0.0, %v1600
      %v1602 = vpop.f32.mrb[0].mxu0
      %1603 = vmatprep.mubr.f32.mxu0 0.0
      %1604 = vmatmul.mubr.f32.gmra.mrb[0].mxu0 %v1435
      %v1605 = vpop.f32.mrb[0].mxu0
      %v1606 = vadd.f32 0.0, %v1605
      %v1607 = vpop.f32.mrb[0].mxu0
      %1608 = vmatprep.mubr.f32.mxu0 0.0
      %1609 = vmatmul.mubr.f32.gmra.mrb[0].mxu0 %v1438
      %v1610 = vpop.f32.mrb[0].mxu0
      %v1611 = vadd.f32 0.0, %v1610
      %v1612 = vpop.f32.mrb[0].mxu0
      %1613 = vmatprep.mubr.f32.mxu0 0.0
      %1614 = vmatmul.mubr.f32.gmra.mrb[0].mxu0 %v1441
      %v1615 = vpop.f32.mrb[0].mxu0
      %v1616 = vadd.f32 0.0, %v1615
      %v1617 = vpop.f32.mrb[0].mxu0
      %1618 = vmatprep.mubr.f32.mxu0 0.0
      %1619 = vmatmul.mubr.f32.gmra.mrb[0].mxu0 %v1444
      %v1620 = vpop.f32.mrb[0].mxu0
      %v1621 = vadd.f32 0.0, %v1620
      %v1622 = vpop.f32.mrb[0].mxu0
      %1623 = vmatprep.mubr.f32.mxu0 0.0
      %1624 = vmatmul.mubr.f32.gmra.mrb[0].mxu0 %v1447
      %v1625 = vpop.f32.mrb[0].mxu0
      %v1626 = vadd.f32 0.0, %v1625
      %v1627 = vpop.f32.mrb[0].mxu0
      %1628 = vmatprep.mubr.f32.mxu0 0.0
      %1629 = vmatmul.mubr.f32.gmra.mrb[0].mxu0 %v1450
      %v1630 = vpop.f32.mrb[0].mxu0
      %v1631 = vadd.f32 0.0, %v1630
      %v1632 = vpop.f32.mrb[0].mxu0
      %1633 = vmatprep.mubr.f32.mxu0 0.0
      %1634 = vmatmul.mubr.f32.gmra.mrb[0].mxu0 %v1453
      %v1635 = vpop.f32.mrb[0].mxu0
      %v1636 = vadd.f32 0.0, %v1635
      %v1637 = vpop.f32.mrb[0].mxu0
      %1638 = vmatprep.mubr.f32.mxu0 0.0
      %1639 = vmatmul.mubr.f32.gmra.mrb[0].mxu0 %v1456
      %v1640 = vpop.f32.mrb[0].mxu0
      %v1641 = vadd.f32 0.0, %v1640
      %v1642 = vpop.f32.mrb[0].mxu0
      %1643 = vmatprep.mubr.f32.mxu0 0.0
      %1644 = vmatmul.mubr.f32.gmra.mrb[0].mxu0 %v1459
      %v1645 = vpop.f32.mrb[0].mxu0
      %v1646 = vadd.f32 0.0, %v1645
      %v1647 = vpop.f32.mrb[0].mxu0
      %1648 = vmatprep.mubr.f32.mxu0 0.0
      %1649 = vmatmul.mubr.f32.gmra.mrb[0].mxu0 %v1462
      %v1650 = vpop.f32.mrb[0].mxu0
      %v1651 = vadd.f32 0.0, %v1650
      %v1652 = vpop.f32.mrb[0].mxu0
      %1653 = vmatprep.mubr.f32.mxu0 0.0
      %1654 = vmatmul.mubr.f32.gmra.mrb[0].mxu0 %v1465
      %v1655 = vpop.f32.mrb[0].mxu0
      %v1656 = vadd.f32 0.0, %v1655
      %v1657 = vpop.f32.mrb[0].mxu0
      %1658 = vmatprep.mubr.f32.mxu0 0.0
      %1659 = vmatmul.mubr.f32.gmra.mrb[0].mxu0 %v1468
      %v1660 = vpop.f32.mrb[0].mxu0
      %v1661 = vadd.f32 0.0, %v1660
      %v1662 = vpop.f32.mrb[0].mxu0
      %1663 = vmatprep.mubr.f32.mxu0 0.0
      %1664 = vmatmul.mubr.f32.gmra.mrb[0].mxu0 %v1471
      %v1665 = vpop.f32.mrb[0].mxu0
      %v1666 = vadd.f32 0.0, %v1665
      %v1667 = vpop.f32.mrb[0].mxu0
      %1668 = vmatprep.mubr.f32.mxu0 0.0
      %1669 = vmatmul.mubr.f32.gmra.mrb[0].mxu0 %v1474
      %v1670 = vpop.f32.mrb[0].mxu0
      %v1671 = vadd.f32 0.0, %v1670
      %v1672 = vpop.f32.mrb[0].mxu0
      %1673 = vmatprep.mubr.f32.mxu0 0.0
      %1674 = vmatmul.mubr.f32.gmra.mrb[0].mxu0 %v1477
      %v1675 = vpop.f32.mrb[0].mxu0
      %v1676 = vadd.f32 0.0, %v1675
      %v1677 = vpop.f32.mrb[0].mxu0
      %1678 = vmatprep.mubr.f32.mxu0 0.0
      %1679 = vmatmul.mubr.f32.gmra.mrb[0].mxu0 %v1480
      %v1680 = vpop.f32.mrb[0].mxu0
      %v1681 = vadd.f32 0.0, %v1680
      %v1682 = vpop.f32.mrb[0].mxu0
      %1683 = vmatprep.mubr.f32.mxu0 0.0
      %1684 = vmatmul.mubr.f32.gmra.mrb[0].mxu0 %v1483
      %v1685 = vpop.f32.mrb[0].mxu0
      %v1686 = vadd.f32 0.0, %v1685
      %v1687 = vpop.f32.mrb[0].mxu0
      %1688 = vmatprep.mubr.f32.mxu0 0.0
      %1689 = vmatmul.mubr.f32.gmra.mrb[0].mxu0 %v1486
      %v1690 = vpop.f32.mrb[0].mxu0
      %v1691 = vadd.f32 0.0, %v1690
      %v1692 = vpop.f32.mrb[0].mxu0
      %1693 = vmatprep.mubr.f32.mxu0 0.0
      %1694 = vmatmul.mubr.f32.gmra.mrb[0].mxu0 %v1489
      %v1695 = vpop.f32.mrb[0].mxu0
      %v1696 = vadd.f32 0.0, %v1695
      %v1697 = vpop.f32.mrb[0].mxu0
      %1698 = vmatprep.mubr.f32.mxu0 0.0
      %1699 = vmatmul.mubr.f32.gmra.mrb[0].mxu0 %v1492
      %v1700 = vpop.f32.mrb[0].mxu0
      %v1701 = vadd.f32 0.0, %v1700
      %v1702 = vpop.f32.mrb[0].mxu0
      %1703 = vmatprep.mubr.f32.mxu0 0.0
      %1704 = vmatmul.mubr.f32.gmra.mrb[0].mxu0 %v1495
      %v1705 = vpop.f32.mrb[0].mxu0
      %v1706 = vadd.f32 0.0, %v1705
      %v1707 = vpop.f32.mrb[0].mxu0
      %1708 = vmatprep.mubr.f32.mxu0 0.0
      %1709 = vmatmul.mubr.f32.gmra.mrb[0].mxu0 %v1498
      %v1710 = vpop.f32.mrb[0].mxu0
      %v1711 = vadd.f32 0.0, %v1710
      %v1712 = vpop.f32.mrb[0].mxu0
      %1713 = vmatprep.mubr.f32.mxu0 0.0
      %1714 = vmatmul.mubr.f32.gmra.mrb[0].mxu0 %v1501
      %v1715 = vpop.f32.mrb[0].mxu0
      %v1716 = vadd.f32 0.0, %v1715
      %v1717 = vpop.f32.mrb[0].mxu0
      %1718 = vmatprep.mubr.f32.mxu0 0.0
      %1719 = vmatmul.mubr.f32.gmra.mrb[0].mxu0 %v1504
      %v1720 = vpop.f32.mrb[0].mxu0
      %v1721 = vadd.f32 0.0, %v1720
      %v1722 = vpop.f32.mrb[0].mxu0
      %1723 = vmatprep.mubr.f32.mxu0 0.0
      %1724 = vmatmul.mubr.f32.gmra.mrb[0].mxu0 %v1507
      %v1725 = vpop.f32.mrb[0].mxu0
      %v1726 = vadd.f32 0.0, %v1725
      %v1727 = vpop.f32.mrb[0].mxu0
      %1728 = vmatprep.mubr.f32.mxu0 0.0
      %1729 = vmatmul.mubr.f32.gmra.mrb[0].mxu0 %v1510
      %v1730 = vpop.f32.mrb[0].mxu0
      %v1731 = vadd.f32 0.0, %v1730
      %v1732 = vpop.f32.mrb[0].mxu0
      %1733 = vmatprep.mubr.f32.mxu0 0.0
      %1734 = vmatmul.mubr.f32.gmra.mrb[0].mxu0 %v1513
      %v1735 = vpop.f32.mrb[0].mxu0
      %v1736 = vadd.f32 0.0, %v1735
      %v1737 = vpop.f32.mrb[0].mxu0
      %1738 = vmatprep.mubr.f32.mxu0 0.0
      %1739 = vmatmul.mubr.f32.gmra.mrb[0].mxu0 %v1516
      %v1740 = vpop.f32.mrb[0].mxu0
      %v1741 = vadd.f32 0.0, %v1740
      %v1742 = vpop.f32.mrb[0].mxu0
      %1743 = vmatprep.mubr.f32.mxu0 0.0
      %1744 = vmatmul.mubr.f32.gmra.mrb[0].mxu0 %v1519
      %v1745 = vpop.f32.mrb[0].mxu0
      %v1746 = vadd.f32 0.0, %v1745
      %v1747 = vpop.f32.mrb[0].mxu0
      %1748 = vdwg.mxu0
      %v1749 = vadd.f32 %v1340, %v1591
      %v1750 = vadd.f32 %v1341, %v1596
      %v1751 = vadd.f32 %v1342, %v1601
      %v1752 = vadd.f32 %v1343, %v1606
      %v1753 = vadd.f32 %v1344, %v1611
      %v1754 = vadd.f32 %v1345, %v1616
      %v1755 = vadd.f32 %v1346, %v1621
      %v1756 = vadd.f32 %v1347, %v1626
      %v1757 = vadd.f32 %v1348, %v1631
      %v1758 = vadd.f32 %v1349, %v1636
      %v1759 = vadd.f32 %v1350, %v1641
      %v1760 = vadd.f32 %v1351, %v1646
      %v1761 = vadd.f32 %v1352, %v1651
      %v1762 = vadd.f32 %v1353, %v1656
      %v1763 = vadd.f32 %v1354, %v1661
      %v1764 = vadd.f32 %v1355, %v1666
      %v1765 = vadd.f32 %v1356, %v1671
      %v1766 = vadd.f32 %v1357, %v1676
      %v1767 = vadd.f32 %v1358, %v1681
      %v1768 = vadd.f32 %v1359, %v1686
      %v1769 = vadd.f32 %v1360, %v1691
      %v1770 = vadd.f32 %v1361, %v1696
      %v1771 = vadd.f32 %v1362, %v1701
      %v1772 = vadd.f32 %v1363, %v1706
      %v1773 = vadd.f32 %v1364, %v1711
      %v1774 = vadd.f32 %v1365, %v1716
      %v1775 = vadd.f32 %v1366, %v1721
      %v1776 = vadd.f32 %v1367, %v1726
      %v1777 = vadd.f32 %v1368, %v1731
      %v1778 = vadd.f32 %v1369, %v1736
      %v1779 = vadd.f32 %v1370, %v1741
      %v1780 = vadd.f32 %v1371, %v1746
      %v1797 = vrot.slane %v1375, 1
      %v1798 = vrot.slane %v1376, 1
      %v1799 = vsel %vm296, %v1797, %v1798
      %v1800 = vrot.slane %v1377, 1
      %v1801 = vsel %vm296, %v1798, %v1800
      %v1802 = vrot.slane %v1378, 1
      %v1803 = vrot.slane %v1379, 1
      %v1804 = vsel %vm296, %v1802, %v1803
      %v1805 = vrot.slane %v1380, 1
      %v1806 = vsel %vm296, %v1803, %v1805
      %v1807 = vrot.slane %v1381, 1
      %v1808 = vrot.slane %v1382, 1
      %v1809 = vsel %vm296, %v1807, %v1808
      %v1810 = vrot.slane %v1383, 1
      %v1811 = vsel %vm296, %v1808, %v1810
      %v1812 = vrot.slane %v1384, 1
      %v1813 = vrot.slane %v1385, 1
      %v1814 = vsel %vm296, %v1812, %v1813
      %v1815 = vrot.slane %v1386, 1
      %v1816 = vsel %vm296, %v1813, %v1815
      %v1817 = vrot.slane %v1387, 1
      %v1818 = vrot.slane %v1388, 1
      %v1819 = vsel %vm296, %v1817, %v1818
      %v1820 = vrot.slane %v1389, 1
      %v1821 = vsel %vm296, %v1818, %v1820
      %v1822 = vrot.slane %v1390, 1
      %v1823 = vrot.slane %v1391, 1
      %v1824 = vsel %vm296, %v1822, %v1823
      %v1825 = vrot.slane %v1392, 1
      %v1826 = vsel %vm296, %v1823, %v1825
      %v1827 = vrot.slane %v1393, 1
      %v1828 = vrot.slane %v1394, 1
      %v1829 = vsel %vm296, %v1827, %v1828
      %v1830 = vrot.slane %v1395, 1
      %v1831 = vsel %vm296, %v1828, %v1830
      %v1832 = vrot.slane %v1396, 1
      %v1833 = vrot.slane %v1397, 1
      %v1834 = vsel %vm296, %v1832, %v1833
      %v1835 = vrot.slane %v1398, 1
      %v1836 = vsel %vm296, %v1833, %v1835
      %v1837 = vrot.slane %v1399, 1
      %v1838 = vrot.slane %v1400, 1
      %v1839 = vsel %vm296, %v1837, %v1838
      %v1840 = vrot.slane %v1401, 1
      %v1841 = vsel %vm296, %v1838, %v1840
      %v1842 = vrot.slane %v1402, 1
      %v1843 = vrot.slane %v1403, 1
      %v1844 = vsel %vm296, %v1842, %v1843
      %v1845 = vrot.slane %v1404, 1
      %v1846 = vsel %vm296, %v1843, %v1845
      %v1847 = vrot.slane %v1405, 1
      %v1848 = vrot.slane %v1406, 1
      %v1849 = vsel %vm296, %v1847, %v1848
      %v1850 = vrot.slane %v1407, 1
      %v1851 = vsel %vm296, %v1848, %v1850
      %v1852 = vrot.slane %v1408, 1
      %v1853 = vrot.slane %v1409, 1
      %v1854 = vsel %vm296, %v1852, %v1853
      %v1855 = vrot.slane %v1410, 1
      %v1856 = vsel %vm296, %v1853, %v1855
      %v1857 = vrot.slane %v1411, 1
      %v1858 = vrot.slane %v1412, 1
      %v1859 = vsel %vm296, %v1857, %v1858
      %v1860 = vrot.slane %v1413, 1
      %v1861 = vsel %vm296, %v1858, %v1860
      %v1862 = vrot.slane %v1414, 1
      %v1863 = vrot.slane %v1415, 1
      %v1864 = vsel %vm296, %v1862, %v1863
      %v1865 = vrot.slane %v1416, 1
      %v1866 = vsel %vm296, %v1863, %v1865
      %v1867 = vrot.slane %v1417, 1
      %v1868 = vrot.slane %v1418, 1
      %v1869 = vsel %vm296, %v1867, %v1868
      %v1870 = vrot.slane %v1419, 1
      %v1871 = vsel %vm296, %v1868, %v1870
      %v1872 = vrot.slane %v1420, 1
      %v1873 = vrot.slane %v1421, 1
      %v1874 = vsel %vm296, %v1872, %v1873
      %v1875 = vrot.slane %v1422, 1
      %v1876 = vsel %vm296, %v1873, %v1875
      %s1877 = scalar_lea.vmem %s1, 16
      %v1878 = vld [vmem:[%s1877] sm:$0xf]
      %v1879 = vsel %vm379, %v1799, 0
      %v1881 = vsel %vm379, %v1801, 0
      %v1883 = vsel %vm379, %v1804, 0
      %v1885 = vsel %vm379, %v1806, 0
      %v1887 = vsel %vm379, %v1809, 0
      %v1889 = vsel %vm379, %v1811, 0
      %v1891 = vsel %vm379, %v1814, 0
      %v1893 = vsel %vm379, %v1816, 0
      %v1895 = vsel %vm379, %v1819, 0
      %v1897 = vsel %vm379, %v1821, 0
      %v1899 = vsel %vm379, %v1824, 0
      %v1901 = vsel %vm379, %v1826, 0
      %v1903 = vsel %vm379, %v1829, 0
      %v1905 = vsel %vm379, %v1831, 0
      %v1907 = vsel %vm379, %v1834, 0
      %v1909 = vsel %vm379, %v1836, 0
      %v1911 = vsel %vm379, %v1839, 0
      %v1913 = vsel %vm379, %v1841, 0
      %v1915 = vsel %vm379, %v1844, 0
      %v1917 = vsel %vm379, %v1846, 0
      %v1919 = vsel %vm379, %v1849, 0
      %v1921 = vsel %vm379, %v1851, 0
      %v1923 = vsel %vm379, %v1854, 0
      %v1925 = vsel %vm379, %v1856, 0
      %v1927 = vsel %vm379, %v1859, 0
      %v1929 = vsel %vm379, %v1861, 0
      %v1931 = vsel %vm379, %v1864, 0
      %v1933 = vsel %vm379, %v1866, 0
      %v1935 = vsel %vm379, %v1869, 0
      %v1937 = vsel %vm379, %v1871, 0
      %v1939 = vsel %vm379, %v1874, 0
      %v1941 = vsel %vm379, %v1876, 0
      %v1944 = vsel %vm444, %v1878, 0
      %1946 = vmatprep.subr.mxu0 0.0
      %1947 = vmatpush1.msra.mxu0 %v1944
      %1948 = vmatprep.subr.mxu0 0.0
      %1949 = vmatpush1.msra.mxu0 0.0
      %1950 = vmatprep.subr.mxu0 0.0
      %1951 = vmatpush1.msra.mxu0 0.0
      %1952 = vmatprep.subr.mxu0 0.0
      %1953 = vmatpush1.msra.mxu0 0.0
      %1954 = vmatprep.subr.mxu0 0.0
      %1955 = vmatpush1.msra.mxu0 0.0
      %1956 = vmatprep.subr.mxu0 0.0
      %1957 = vmatpush1.msra.mxu0 0.0
      %1958 = vmatprep.subr.mxu0 0.0
      %1959 = vmatpush1.msra.mxu0 0.0
      %1960 = vmatprep.subr.mxu0 0.0
      %1961 = vmatpush1.msra.mxu0 0.0
      %1962 = vmatprep.subr.mxu0 0.0
      %1963 = vmatpush1.msra.mxu0 0.0
      %1964 = vmatprep.subr.mxu0 0.0
      %1965 = vmatpush1.msra.mxu0 0.0
      %1966 = vmatprep.subr.mxu0 0.0
      %1967 = vmatpush1.msra.mxu0 0.0
      %1968 = vmatprep.subr.mxu0 0.0
      %1969 = vmatpush1.msra.mxu0 0.0
      %1970 = vmatprep.subr.mxu0 0.0
      %1971 = vmatpush1.msra.mxu0 0.0
      %1972 = vmatprep.subr.mxu0 0.0
      %1973 = vmatpush1.msra.mxu0 0.0
      %1974 = vmatprep.subr.mxu0 0.0
      %1975 = vmatpush1.msra.mxu0 0.0
      %1976 = vmatprep.subr.mxu0 0.0
      %1977 = vmatpush1.msra.mxu0 0.0
      %1978 = vmatprep.subr.mxu0 0.0
      %1979 = vmatpush1.msra.mxu0 0.0
      %1980 = vmatprep.subr.mxu0 0.0
      %1981 = vmatpush1.msra.mxu0 0.0
      %1982 = vmatprep.subr.mxu0 0.0
      %1983 = vmatpush1.msra.mxu0 0.0
      %1984 = vmatprep.subr.mxu0 0.0
      %1985 = vmatpush1.msra.mxu0 0.0
      %1986 = vmatprep.subr.mxu0 0.0
      %1987 = vmatpush1.msra.mxu0 0.0
      %1988 = vmatprep.subr.mxu0 0.0
      %1989 = vmatpush1.msra.mxu0 0.0
      %1990 = vmatprep.subr.mxu0 0.0
      %1991 = vmatpush1.msra.mxu0 0.0
      %1992 = vmatprep.subr.mxu0 0.0
      %1993 = vmatpush1.msra.mxu0 0.0
      %1994 = vmatprep.subr.mxu0 0.0
      %1995 = vmatpush1.msra.mxu0 0.0
      %1996 = vmatprep.subr.mxu0 0.0
      %1997 = vmatpush1.msra.mxu0 0.0
      %1998 = vmatprep.subr.mxu0 0.0
      %1999 = vmatpush1.msra.mxu0 0.0
      %2000 = vmatprep.subr.mxu0 0.0
      %2001 = vmatpush1.msra.mxu0 0.0
      %2002 = vmatprep.subr.mxu0 0.0
      %2003 = vmatpush1.msra.mxu0 0.0
      %2004 = vmatprep.subr.mxu0 0.0
      %2005 = vmatpush1.msra.mxu0 0.0
      %2006 = vmatprep.subr.mxu0 0.0
      %2007 = vmatpush1.msra.mxu0 0.0
      %2008 = vmatprep.subr.mxu0 0.0
      %2009 = vmatpush1.msra.mxu0 0.0
      %2010 = vmatprep.mubr.f32.mxu0 0.0
      %2011 = vmatmul.mubr.f32.gmra.mrb[0].mxu0 %v1879
      %v2012 = vpop.f32.mrb[0].mxu0
      %v2013 = vadd.f32 0.0, %v2012
      %v2014 = vpop.f32.mrb[0].mxu0
      %2015 = vmatprep.mubr.f32.mxu0 0.0
      %2016 = vmatmul.mubr.f32.gmra.mrb[0].mxu0 %v1881
      %v2017 = vpop.f32.mrb[0].mxu0
      %v2018 = vadd.f32 0.0, %v2017
      %v2019 = vpop.f32.mrb[0].mxu0
      %2020 = vmatprep.mubr.f32.mxu0 0.0
      %2021 = vmatmul.mubr.f32.gmra.mrb[0].mxu0 %v1883
      %v2022 = vpop.f32.mrb[0].mxu0
      %v2023 = vadd.f32 0.0, %v2022
      %v2024 = vpop.f32.mrb[0].mxu0
      %2025 = vmatprep.mubr.f32.mxu0 0.0
      %2026 = vmatmul.mubr.f32.gmra.mrb[0].mxu0 %v1885
      %v2027 = vpop.f32.mrb[0].mxu0
      %v2028 = vadd.f32 0.0, %v2027
      %v2029 = vpop.f32.mrb[0].mxu0
      %2030 = vmatprep.mubr.f32.mxu0 0.0
      %2031 = vmatmul.mubr.f32.gmra.mrb[0].mxu0 %v1887
      %v2032 = vpop.f32.mrb[0].mxu0
      %v2033 = vadd.f32 0.0, %v2032
      %v2034 = vpop.f32.mrb[0].mxu0
      %2035 = vmatprep.mubr.f32.mxu0 0.0
      %2036 = vmatmul.mubr.f32.gmra.mrb[0].mxu0 %v1889
      %v2037 = vpop.f32.mrb[0].mxu0
      %v2038 = vadd.f32 0.0, %v2037
      %v2039 = vpop.f32.mrb[0].mxu0
      %2040 = vmatprep.mubr.f32.mxu0 0.0
      %2041 = vmatmul.mubr.f32.gmra.mrb[0].mxu0 %v1891
      %v2042 = vpop.f32.mrb[0].mxu0
      %v2043 = vadd.f32 0.0, %v2042
      %v2044 = vpop.f32.mrb[0].mxu0
      %2045 = vmatprep.mubr.f32.mxu0 0.0
      %2046 = vmatmul.mubr.f32.gmra.mrb[0].mxu0 %v1893
      %v2047 = vpop.f32.mrb[0].mxu0
      %v2048 = vadd.f32 0.0, %v2047
      %v2049 = vpop.f32.mrb[0].mxu0
      %2050 = vmatprep.mubr.f32.mxu0 0.0
      %2051 = vmatmul.mubr.f32.gmra.mrb[0].mxu0 %v1895
      %v2052 = vpop.f32.mrb[0].mxu0
      %v2053 = vadd.f32 0.0, %v2052
      %v2054 = vpop.f32.mrb[0].mxu0
      %2055 = vmatprep.mubr.f32.mxu0 0.0
      %2056 = vmatmul.mubr.f32.gmra.mrb[0].mxu0 %v1897
      %v2057 = vpop.f32.mrb[0].mxu0
      %v2058 = vadd.f32 0.0, %v2057
      %v2059 = vpop.f32.mrb[0].mxu0
      %2060 = vmatprep.mubr.f32.mxu0 0.0
      %2061 = vmatmul.mubr.f32.gmra.mrb[0].mxu0 %v1899
      %v2062 = vpop.f32.mrb[0].mxu0
      %v2063 = vadd.f32 0.0, %v2062
      %v2064 = vpop.f32.mrb[0].mxu0
      %2065 = vmatprep.mubr.f32.mxu0 0.0
      %2066 = vmatmul.mubr.f32.gmra.mrb[0].mxu0 %v1901
      %v2067 = vpop.f32.mrb[0].mxu0
      %v2068 = vadd.f32 0.0, %v2067
      %v2069 = vpop.f32.mrb[0].mxu0
      %2070 = vmatprep.mubr.f32.mxu0 0.0
      %2071 = vmatmul.mubr.f32.gmra.mrb[0].mxu0 %v1903
      %v2072 = vpop.f32.mrb[0].mxu0
      %v2073 = vadd.f32 0.0, %v2072
      %v2074 = vpop.f32.mrb[0].mxu0
      %2075 = vmatprep.mubr.f32.mxu0 0.0
      %2076 = vmatmul.mubr.f32.gmra.mrb[0].mxu0 %v1905
      %v2077 = vpop.f32.mrb[0].mxu0
      %v2078 = vadd.f32 0.0, %v2077
      %v2079 = vpop.f32.mrb[0].mxu0
      %2080 = vmatprep.mubr.f32.mxu0 0.0
      %2081 = vmatmul.mubr.f32.gmra.mrb[0].mxu0 %v1907
      %v2082 = vpop.f32.mrb[0].mxu0
      %v2083 = vadd.f32 0.0, %v2082
      %v2084 = vpop.f32.mrb[0].mxu0
      %2085 = vmatprep.mubr.f32.mxu0 0.0
      %2086 = vmatmul.mubr.f32.gmra.mrb[0].mxu0 %v1909
      %v2087 = vpop.f32.mrb[0].mxu0
      %v2088 = vadd.f32 0.0, %v2087
      %v2089 = vpop.f32.mrb[0].mxu0
      %2090 = vmatprep.mubr.f32.mxu0 0.0
      %2091 = vmatmul.mubr.f32.gmra.mrb[0].mxu0 %v1911
      %v2092 = vpop.f32.mrb[0].mxu0
      %v2093 = vadd.f32 0.0, %v2092
      %v2094 = vpop.f32.mrb[0].mxu0
      %2095 = vmatprep.mubr.f32.mxu0 0.0
      %2096 = vmatmul.mubr.f32.gmra.mrb[0].mxu0 %v1913
      %v2097 = vpop.f32.mrb[0].mxu0
      %v2098 = vadd.f32 0.0, %v2097
      %v2099 = vpop.f32.mrb[0].mxu0
      %2100 = vmatprep.mubr.f32.mxu0 0.0
      %2101 = vmatmul.mubr.f32.gmra.mrb[0].mxu0 %v1915
      %v2102 = vpop.f32.mrb[0].mxu0
      %v2103 = vadd.f32 0.0, %v2102
      %v2104 = vpop.f32.mrb[0].mxu0
      %2105 = vmatprep.mubr.f32.mxu0 0.0
      %2106 = vmatmul.mubr.f32.gmra.mrb[0].mxu0 %v1917
      %v2107 = vpop.f32.mrb[0].mxu0
      %v2108 = vadd.f32 0.0, %v2107
      %v2109 = vpop.f32.mrb[0].mxu0
      %2110 = vmatprep.mubr.f32.mxu0 0.0
      %2111 = vmatmul.mubr.f32.gmra.mrb[0].mxu0 %v1919
      %v2112 = vpop.f32.mrb[0].mxu0
      %v2113 = vadd.f32 0.0, %v2112
      %v2114 = vpop.f32.mrb[0].mxu0
      %2115 = vmatprep.mubr.f32.mxu0 0.0
      %2116 = vmatmul.mubr.f32.gmra.mrb[0].mxu0 %v1921
      %v2117 = vpop.f32.mrb[0].mxu0
      %v2118 = vadd.f32 0.0, %v2117
      %v2119 = vpop.f32.mrb[0].mxu0
      %2120 = vmatprep.mubr.f32.mxu0 0.0
      %2121 = vmatmul.mubr.f32.gmra.mrb[0].mxu0 %v1923
      %v2122 = vpop.f32.mrb[0].mxu0
      %v2123 = vadd.f32 0.0, %v2122
      %v2124 = vpop.f32.mrb[0].mxu0
      %2125 = vmatprep.mubr.f32.mxu0 0.0
      %2126 = vmatmul.mubr.f32.gmra.mrb[0].mxu0 %v1925
      %v2127 = vpop.f32.mrb[0].mxu0
      %v2128 = vadd.f32 0.0, %v2127
      %v2129 = vpop.f32.mrb[0].mxu0
      %2130 = vmatprep.mubr.f32.mxu0 0.0
      %2131 = vmatmul.mubr.f32.gmra.mrb[0].mxu0 %v1927
      %v2132 = vpop.f32.mrb[0].mxu0
      %v2133 = vadd.f32 0.0, %v2132
      %v2134 = vpop.f32.mrb[0].mxu0
      %2135 = vmatprep.mubr.f32.mxu0 0.0
      %2136 = vmatmul.mubr.f32.gmra.mrb[0].mxu0 %v1929
      %v2137 = vpop.f32.mrb[0].mxu0
      %v2138 = vadd.f32 0.0, %v2137
      %v2139 = vpop.f32.mrb[0].mxu0
      %2140 = vmatprep.mubr.f32.mxu0 0.0
      %2141 = vmatmul.mubr.f32.gmra.mrb[0].mxu0 %v1931
      %v2142 = vpop.f32.mrb[0].mxu0
      %v2143 = vadd.f32 0.0, %v2142
      %v2144 = vpop.f32.mrb[0].mxu0
      %2145 = vmatprep.mubr.f32.mxu0 0.0
      %2146 = vmatmul.mubr.f32.gmra.mrb[0].mxu0 %v1933
      %v2147 = vpop.f32.mrb[0].mxu0
      %v2148 = vadd.f32 0.0, %v2147
      %v2149 = vpop.f32.mrb[0].mxu0
      %2150 = vmatprep.mubr.f32.mxu0 0.0
      %2151 = vmatmul.mubr.f32.gmra.mrb[0].mxu0 %v1935
      %v2152 = vpop.f32.mrb[0].mxu0
      %v2153 = vadd.f32 0.0, %v2152
      %v2154 = vpop.f32.mrb[0].mxu0
      %2155 = vmatprep.mubr.f32.mxu0 0.0
      %2156 = vmatmul.mubr.f32.gmra.mrb[0].mxu0 %v1937
      %v2157 = vpop.f32.mrb[0].mxu0
      %v2158 = vadd.f32 0.0, %v2157
      %v2159 = vpop.f32.mrb[0].mxu0
      %2160 = vmatprep.mubr.f32.mxu0 0.0
      %2161 = vmatmul.mubr.f32.gmra.mrb[0].mxu0 %v1939
      %v2162 = vpop.f32.mrb[0].mxu0
      %v2163 = vadd.f32 0.0, %v2162
      %v2164 = vpop.f32.mrb[0].mxu0
      %2165 = vmatprep.mubr.f32.mxu0 0.0
      %2166 = vmatmul.mubr.f32.gmra.mrb[0].mxu0 %v1941
      %v2167 = vpop.f32.mrb[0].mxu0
      %v2168 = vadd.f32 0.0, %v2167
      %v2169 = vpop.f32.mrb[0].mxu0
      %2170 = vdwg.mxu0
      %v2171 = vadd.f32 %v1749, %v2013
      %v2172 = vadd.f32 %v1750, %v2018
      %v2173 = vadd.f32 %v1751, %v2023
      %v2174 = vadd.f32 %v1752, %v2028
      %v2175 = vadd.f32 %v1753, %v2033
      %v2176 = vadd.f32 %v1754, %v2038
      %v2177 = vadd.f32 %v1755, %v2043
      %v2178 = vadd.f32 %v1756, %v2048
      %v2179 = vadd.f32 %v1757, %v2053
      %v2180 = vadd.f32 %v1758, %v2058
      %v2181 = vadd.f32 %v1759, %v2063
      %v2182 = vadd.f32 %v1760, %v2068
      %v2183 = vadd.f32 %v1761, %v2073
      %v2184 = vadd.f32 %v1762, %v2078
      %v2185 = vadd.f32 %v1763, %v2083
      %v2186 = vadd.f32 %v1764, %v2088
      %v2187 = vadd.f32 %v1765, %v2093
      %v2188 = vadd.f32 %v1766, %v2098
      %v2189 = vadd.f32 %v1767, %v2103
      %v2190 = vadd.f32 %v1768, %v2108
      %v2191 = vadd.f32 %v1769, %v2113
      %v2192 = vadd.f32 %v1770, %v2118
      %v2193 = vadd.f32 %v1771, %v2123
      %v2194 = vadd.f32 %v1772, %v2128
      %v2195 = vadd.f32 %v1773, %v2133
      %v2196 = vadd.f32 %v1774, %v2138
      %v2197 = vadd.f32 %v1775, %v2143
      %v2198 = vadd.f32 %v1776, %v2148
      %v2199 = vadd.f32 %v1777, %v2153
      %v2200 = vadd.f32 %v1778, %v2158
      %v2201 = vadd.f32 %v1779, %v2163
      %v2202 = vadd.f32 %v1780, %v2168
      %v2203 = vrot.slane %v1375, 2
      %v2204 = vrot.slane %v1376, 2
      %v2205 = vsel %vm965, %v2203, %v2204
      %v2206 = vrot.slane %v1377, 2
      %v2207 = vsel %vm965, %v2204, %v2206
      %v2208 = vrot.slane %v1378, 2
      %v2209 = vrot.slane %v1379, 2
      %v2210 = vsel %vm965, %v2208, %v2209
      %v2211 = vrot.slane %v1380, 2
      %v2212 = vsel %vm965, %v2209, %v2211
      %v2213 = vrot.slane %v1381, 2
      %v2214 = vrot.slane %v1382, 2
      %v2215 = vsel %vm965, %v2213, %v2214
      %v2216 = vrot.slane %v1383, 2
      %v2217 = vsel %vm965, %v2214, %v2216
      %v2218 = vrot.slane %v1384, 2
      %v2219 = vrot.slane %v1385, 2
      %v2220 = vsel %vm965, %v2218, %v2219
      %v2221 = vrot.slane %v1386, 2
      %v2222 = vsel %vm965, %v2219, %v2221
      %v2223 = vrot.slane %v1387, 2
      %v2224 = vrot.slane %v1388, 2
      %v2225 = vsel %vm965, %v2223, %v2224
      %v2226 = vrot.slane %v1389, 2
      %v2227 = vsel %vm965, %v2224, %v2226
      %v2228 = vrot.slane %v1390, 2
      %v2229 = vrot.slane %v1391, 2
      %v2230 = vsel %vm965, %v2228, %v2229
      %v2231 = vrot.slane %v1392, 2
      %v2232 = vsel %vm965, %v2229, %v2231
      %v2233 = vrot.slane %v1393, 2
      %v2234 = vrot.slane %v1394, 2
      %v2235 = vsel %vm965, %v2233, %v2234
      %v2236 = vrot.slane %v1395, 2
      %v2237 = vsel %vm965, %v2234, %v2236
      %v2238 = vrot.slane %v1396, 2
      %v2239 = vrot.slane %v1397, 2
      %v2240 = vsel %vm965, %v2238, %v2239
      %v2241 = vrot.slane %v1398, 2
      %v2242 = vsel %vm965, %v2239, %v2241
      %v2243 = vrot.slane %v1399, 2
      %v2244 = vrot.slane %v1400, 2
      %v2245 = vsel %vm965, %v2243, %v2244
      %v2246 = vrot.slane %v1401, 2
      %v2247 = vsel %vm965, %v2244, %v2246
      %v2248 = vrot.slane %v1402, 2
      %v2249 = vrot.slane %v1403, 2
      %v2250 = vsel %vm965, %v2248, %v2249
      %v2251 = vrot.slane %v1404, 2
      %v2252 = vsel %vm965, %v2249, %v2251
      %v2253 = vrot.slane %v1405, 2
      %v2254 = vrot.slane %v1406, 2
      %v2255 = vsel %vm965, %v2253, %v2254
      %v2256 = vrot.slane %v1407, 2
      %v2257 = vsel %vm965, %v2254, %v2256
      %v2258 = vrot.slane %v1408, 2
      %v2259 = vrot.slane %v1409, 2
      %v2260 = vsel %vm965, %v2258, %v2259
      %v2261 = vrot.slane %v1410, 2
      %v2262 = vsel %vm965, %v2259, %v2261
      %v2263 = vrot.slane %v1411, 2
      %v2264 = vrot.slane %v1412, 2
      %v2265 = vsel %vm965, %v2263, %v2264
      %v2266 = vrot.slane %v1413, 2
      %v2267 = vsel %vm965, %v2264, %v2266
      %v2268 = vrot.slane %v1414, 2
      %v2269 = vrot.slane %v1415, 2
      %v2270 = vsel %vm965, %v2268, %v2269
      %v2271 = vrot.slane %v1416, 2
      %v2272 = vsel %vm965, %v2269, %v2271
      %v2273 = vrot.slane %v1417, 2
      %v2274 = vrot.slane %v1418, 2
      %v2275 = vsel %vm965, %v2273, %v2274
      %v2276 = vrot.slane %v1419, 2
      %v2277 = vsel %vm965, %v2274, %v2276
      %v2278 = vrot.slane %v1420, 2
      %v2279 = vrot.slane %v1421, 2
      %v2280 = vsel %vm965, %v2278, %v2279
      %v2281 = vrot.slane %v1422, 2
      %v2282 = vsel %vm965, %v2279, %v2281
      %s2283 = scalar_lea.vmem %s1, 20
      %v2284 = vld [vmem:[%s2283] sm:$0xf]
      %v2285 = vsel %vm379, %v2205, 0
      %v2287 = vsel %vm379, %v2207, 0
      %v2289 = vsel %vm379, %v2210, 0
      %v2291 = vsel %vm379, %v2212, 0
      %v2293 = vsel %vm379, %v2215, 0
      %v2295 = vsel %vm379, %v2217, 0
      %v2297 = vsel %vm379, %v2220, 0
      %v2299 = vsel %vm379, %v2222, 0
      %v2301 = vsel %vm379, %v2225, 0
      %v2303 = vsel %vm379, %v2227, 0
      %v2305 = vsel %vm379, %v2230, 0
      %v2307 = vsel %vm379, %v2232, 0
      %v2309 = vsel %vm379, %v2235, 0
      %v2311 = vsel %vm379, %v2237, 0
      %v2313 = vsel %vm379, %v2240, 0
      %v2315 = vsel %vm379, %v2242, 0
      %v2317 = vsel %vm379, %v2245, 0
      %v2319 = vsel %vm379, %v2247, 0
      %v2321 = vsel %vm379, %v2250, 0
      %v2323 = vsel %vm379, %v2252, 0
      %v2325 = vsel %vm379, %v2255, 0
      %v2327 = vsel %vm379, %v2257, 0
      %v2329 = vsel %vm379, %v2260, 0
      %v2331 = vsel %vm379, %v2262, 0
      %v2333 = vsel %vm379, %v2265, 0
      %v2335 = vsel %vm379, %v2267, 0
      %v2337 = vsel %vm379, %v2270, 0
      %v2339 = vsel %vm379, %v2272, 0
      %v2341 = vsel %vm379, %v2275, 0
      %v2343 = vsel %vm379, %v2277, 0
      %v2345 = vsel %vm379, %v2280, 0
      %v2347 = vsel %vm379, %v2282, 0
      %v2350 = vsel %vm444, %v2284, 0
      %2352 = vmatprep.subr.mxu0 0.0
      %2353 = vmatpush1.msra.mxu0 %v2350
      %2354 = vmatprep.subr.mxu0 0.0
      %2355 = vmatpush1.msra.mxu0 0.0
      %2356 = vmatprep.subr.mxu0 0.0
      %2357 = vmatpush1.msra.mxu0 0.0
      %2358 = vmatprep.subr.mxu0 0.0
      %2359 = vmatpush1.msra.mxu0 0.0
      %2360 = vmatprep.subr.mxu0 0.0
      %2361 = vmatpush1.msra.mxu0 0.0
      %2362 = vmatprep.subr.mxu0 0.0
      %2363 = vmatpush1.msra.mxu0 0.0
      %2364 = vmatprep.subr.mxu0 0.0
      %2365 = vmatpush1.msra.mxu0 0.0
      %2366 = vmatprep.subr.mxu0 0.0
      %2367 = vmatpush1.msra.mxu0 0.0
      %2368 = vmatprep.subr.mxu0 0.0
      %2369 = vmatpush1.msra.mxu0 0.0
      %2370 = vmatprep.subr.mxu0 0.0
      %2371 = vmatpush1.msra.mxu0 0.0
      %2372 = vmatprep.subr.mxu0 0.0
      %2373 = vmatpush1.msra.mxu0 0.0
      %2374 = vmatprep.subr.mxu0 0.0
      %2375 = vmatpush1.msra.mxu0 0.0
      %2376 = vmatprep.subr.mxu0 0.0
      %2377 = vmatpush1.msra.mxu0 0.0
      %2378 = vmatprep.subr.mxu0 0.0
      %2379 = vmatpush1.msra.mxu0 0.0
      %2380 = vmatprep.subr.mxu0 0.0
      %2381 = vmatpush1.msra.mxu0 0.0
      %2382 = vmatprep.subr.mxu0 0.0
      %2383 = vmatpush1.msra.mxu0 0.0
      %2384 = vmatprep.subr.mxu0 0.0
      %2385 = vmatpush1.msra.mxu0 0.0
      %2386 = vmatprep.subr.mxu0 0.0
      %2387 = vmatpush1.msra.mxu0 0.0
      %2388 = vmatprep.subr.mxu0 0.0
      %2389 = vmatpush1.msra.mxu0 0.0
      %2390 = vmatprep.subr.mxu0 0.0
      %2391 = vmatpush1.msra.mxu0 0.0
      %2392 = vmatprep.subr.mxu0 0.0
      %2393 = vmatpush1.msra.mxu0 0.0
      %2394 = vmatprep.subr.mxu0 0.0
      %2395 = vmatpush1.msra.mxu0 0.0
      %2396 = vmatprep.subr.mxu0 0.0
      %2397 = vmatpush1.msra.mxu0 0.0
      %2398 = vmatprep.subr.mxu0 0.0
      %2399 = vmatpush1.msra.mxu0 0.0
      %2400 = vmatprep.subr.mxu0 0.0
      %2401 = vmatpush1.msra.mxu0 0.0
      %2402 = vmatprep.subr.mxu0 0.0
      %2403 = vmatpush1.msra.mxu0 0.0
      %2404 = vmatprep.subr.mxu0 0.0
      %2405 = vmatpush1.msra.mxu0 0.0
      %2406 = vmatprep.subr.mxu0 0.0
      %2407 = vmatpush1.msra.mxu0 0.0
      %2408 = vmatprep.subr.mxu0 0.0
      %2409 = vmatpush1.msra.mxu0 0.0
      %2410 = vmatprep.subr.mxu0 0.0
      %2411 = vmatpush1.msra.mxu0 0.0
      %2412 = vmatprep.subr.mxu0 0.0
      %2413 = vmatpush1.msra.mxu0 0.0
      %2414 = vmatprep.subr.mxu0 0.0
      %2415 = vmatpush1.msra.mxu0 0.0
      %2416 = vmatprep.mubr.f32.mxu0 0.0
      %2417 = vmatmul.mubr.f32.gmra.mrb[0].mxu0 %v2285
      %v2418 = vpop.f32.mrb[0].mxu0
      %v2419 = vadd.f32 0.0, %v2418
      %v2420 = vpop.f32.mrb[0].mxu0
      %2421 = vmatprep.mubr.f32.mxu0 0.0
      %2422 = vmatmul.mubr.f32.gmra.mrb[0].mxu0 %v2287
      %v2423 = vpop.f32.mrb[0].mxu0
      %v2424 = vadd.f32 0.0, %v2423
      %v2425 = vpop.f32.mrb[0].mxu0
      %2426 = vmatprep.mubr.f32.mxu0 0.0
      %2427 = vmatmul.mubr.f32.gmra.mrb[0].mxu0 %v2289
      %v2428 = vpop.f32.mrb[0].mxu0
      %v2429 = vadd.f32 0.0, %v2428
      %v2430 = vpop.f32.mrb[0].mxu0
      %2431 = vmatprep.mubr.f32.mxu0 0.0
      %2432 = vmatmul.mubr.f32.gmra.mrb[0].mxu0 %v2291
      %v2433 = vpop.f32.mrb[0].mxu0
      %v2434 = vadd.f32 0.0, %v2433
      %v2435 = vpop.f32.mrb[0].mxu0
      %2436 = vmatprep.mubr.f32.mxu0 0.0
      %2437 = vmatmul.mubr.f32.gmra.mrb[0].mxu0 %v2293
      %v2438 = vpop.f32.mrb[0].mxu0
      %v2439 = vadd.f32 0.0, %v2438
      %v2440 = vpop.f32.mrb[0].mxu0
      %2441 = vmatprep.mubr.f32.mxu0 0.0
      %2442 = vmatmul.mubr.f32.gmra.mrb[0].mxu0 %v2295
      %v2443 = vpop.f32.mrb[0].mxu0
      %v2444 = vadd.f32 0.0, %v2443
      %v2445 = vpop.f32.mrb[0].mxu0
      %2446 = vmatprep.mubr.f32.mxu0 0.0
      %2447 = vmatmul.mubr.f32.gmra.mrb[0].mxu0 %v2297
      %v2448 = vpop.f32.mrb[0].mxu0
      %v2449 = vadd.f32 0.0, %v2448
      %v2450 = vpop.f32.mrb[0].mxu0
      %2451 = vmatprep.mubr.f32.mxu0 0.0
      %2452 = vmatmul.mubr.f32.gmra.mrb[0].mxu0 %v2299
      %v2453 = vpop.f32.mrb[0].mxu0
      %v2454 = vadd.f32 0.0, %v2453
      %v2455 = vpop.f32.mrb[0].mxu0
      %2456 = vmatprep.mubr.f32.mxu0 0.0
      %2457 = vmatmul.mubr.f32.gmra.mrb[0].mxu0 %v2301
      %v2458 = vpop.f32.mrb[0].mxu0
      %v2459 = vadd.f32 0.0, %v2458
      %v2460 = vpop.f32.mrb[0].mxu0
      %2461 = vmatprep.mubr.f32.mxu0 0.0
      %2462 = vmatmul.mubr.f32.gmra.mrb[0].mxu0 %v2303
      %v2463 = vpop.f32.mrb[0].mxu0
      %v2464 = vadd.f32 0.0, %v2463
      %v2465 = vpop.f32.mrb[0].mxu0
      %2466 = vmatprep.mubr.f32.mxu0 0.0
      %2467 = vmatmul.mubr.f32.gmra.mrb[0].mxu0 %v2305
      %v2468 = vpop.f32.mrb[0].mxu0
      %v2469 = vadd.f32 0.0, %v2468
      %v2470 = vpop.f32.mrb[0].mxu0
      %2471 = vmatprep.mubr.f32.mxu0 0.0
      %2472 = vmatmul.mubr.f32.gmra.mrb[0].mxu0 %v2307
      %v2473 = vpop.f32.mrb[0].mxu0
      %v2474 = vadd.f32 0.0, %v2473
      %v2475 = vpop.f32.mrb[0].mxu0
      %2476 = vmatprep.mubr.f32.mxu0 0.0
      %2477 = vmatmul.mubr.f32.gmra.mrb[0].mxu0 %v2309
      %v2478 = vpop.f32.mrb[0].mxu0
      %v2479 = vadd.f32 0.0, %v2478
      %v2480 = vpop.f32.mrb[0].mxu0
      %2481 = vmatprep.mubr.f32.mxu0 0.0
      %2482 = vmatmul.mubr.f32.gmra.mrb[0].mxu0 %v2311
      %v2483 = vpop.f32.mrb[0].mxu0
      %v2484 = vadd.f32 0.0, %v2483
      %v2485 = vpop.f32.mrb[0].mxu0
      %2486 = vmatprep.mubr.f32.mxu0 0.0
      %2487 = vmatmul.mubr.f32.gmra.mrb[0].mxu0 %v2313
      %v2488 = vpop.f32.mrb[0].mxu0
      %v2489 = vadd.f32 0.0, %v2488
      %v2490 = vpop.f32.mrb[0].mxu0
      %2491 = vmatprep.mubr.f32.mxu0 0.0
      %2492 = vmatmul.mubr.f32.gmra.mrb[0].mxu0 %v2315
      %v2493 = vpop.f32.mrb[0].mxu0
      %v2494 = vadd.f32 0.0, %v2493
      %v2495 = vpop.f32.mrb[0].mxu0
      %2496 = vmatprep.mubr.f32.mxu0 0.0
      %2497 = vmatmul.mubr.f32.gmra.mrb[0].mxu0 %v2317
      %v2498 = vpop.f32.mrb[0].mxu0
      %v2499 = vadd.f32 0.0, %v2498
      %v2500 = vpop.f32.mrb[0].mxu0
      %2501 = vmatprep.mubr.f32.mxu0 0.0
      %2502 = vmatmul.mubr.f32.gmra.mrb[0].mxu0 %v2319
      %v2503 = vpop.f32.mrb[0].mxu0
      %v2504 = vadd.f32 0.0, %v2503
      %v2505 = vpop.f32.mrb[0].mxu0
      %2506 = vmatprep.mubr.f32.mxu0 0.0
      %2507 = vmatmul.mubr.f32.gmra.mrb[0].mxu0 %v2321
      %v2508 = vpop.f32.mrb[0].mxu0
      %v2509 = vadd.f32 0.0, %v2508
      %v2510 = vpop.f32.mrb[0].mxu0
      %2511 = vmatprep.mubr.f32.mxu0 0.0
      %2512 = vmatmul.mubr.f32.gmra.mrb[0].mxu0 %v2323
      %v2513 = vpop.f32.mrb[0].mxu0
      %v2514 = vadd.f32 0.0, %v2513
      %v2515 = vpop.f32.mrb[0].mxu0
      %2516 = vmatprep.mubr.f32.mxu0 0.0
      %2517 = vmatmul.mubr.f32.gmra.mrb[0].mxu0 %v2325
      %v2518 = vpop.f32.mrb[0].mxu0
      %v2519 = vadd.f32 0.0, %v2518
      %v2520 = vpop.f32.mrb[0].mxu0
      %2521 = vmatprep.mubr.f32.mxu0 0.0
      %2522 = vmatmul.mubr.f32.gmra.mrb[0].mxu0 %v2327
      %v2523 = vpop.f32.mrb[0].mxu0
      %v2524 = vadd.f32 0.0, %v2523
      %v2525 = vpop.f32.mrb[0].mxu0
      %2526 = vmatprep.mubr.f32.mxu0 0.0
      %2527 = vmatmul.mubr.f32.gmra.mrb[0].mxu0 %v2329
      %v2528 = vpop.f32.mrb[0].mxu0
      %v2529 = vadd.f32 0.0, %v2528
      %v2530 = vpop.f32.mrb[0].mxu0
      %2531 = vmatprep.mubr.f32.mxu0 0.0
      %2532 = vmatmul.mubr.f32.gmra.mrb[0].mxu0 %v2331
      %v2533 = vpop.f32.mrb[0].mxu0
      %v2534 = vadd.f32 0.0, %v2533
      %v2535 = vpop.f32.mrb[0].mxu0
      %2536 = vmatprep.mubr.f32.mxu0 0.0
      %2537 = vmatmul.mubr.f32.gmra.mrb[0].mxu0 %v2333
      %v2538 = vpop.f32.mrb[0].mxu0
      %v2539 = vadd.f32 0.0, %v2538
      %v2540 = vpop.f32.mrb[0].mxu0
      %2541 = vmatprep.mubr.f32.mxu0 0.0
      %2542 = vmatmul.mubr.f32.gmra.mrb[0].mxu0 %v2335
      %v2543 = vpop.f32.mrb[0].mxu0
      %v2544 = vadd.f32 0.0, %v2543
      %v2545 = vpop.f32.mrb[0].mxu0
      %2546 = vmatprep.mubr.f32.mxu0 0.0
      %2547 = vmatmul.mubr.f32.gmra.mrb[0].mxu0 %v2337
      %v2548 = vpop.f32.mrb[0].mxu0
      %v2549 = vadd.f32 0.0, %v2548
      %v2550 = vpop.f32.mrb[0].mxu0
      %2551 = vmatprep.mubr.f32.mxu0 0.0
      %2552 = vmatmul.mubr.f32.gmra.mrb[0].mxu0 %v2339
      %v2553 = vpop.f32.mrb[0].mxu0
      %v2554 = vadd.f32 0.0, %v2553
      %v2555 = vpop.f32.mrb[0].mxu0
      %2556 = vmatprep.mubr.f32.mxu0 0.0
      %2557 = vmatmul.mubr.f32.gmra.mrb[0].mxu0 %v2341
      %v2558 = vpop.f32.mrb[0].mxu0
      %v2559 = vadd.f32 0.0, %v2558
      %v2560 = vpop.f32.mrb[0].mxu0
      %2561 = vmatprep.mubr.f32.mxu0 0.0
      %2562 = vmatmul.mubr.f32.gmra.mrb[0].mxu0 %v2343
      %v2563 = vpop.f32.mrb[0].mxu0
      %v2564 = vadd.f32 0.0, %v2563
      %v2565 = vpop.f32.mrb[0].mxu0
      %2566 = vmatprep.mubr.f32.mxu0 0.0
      %2567 = vmatmul.mubr.f32.gmra.mrb[0].mxu0 %v2345
      %v2568 = vpop.f32.mrb[0].mxu0
      %v2569 = vadd.f32 0.0, %v2568
      %v2570 = vpop.f32.mrb[0].mxu0
      %2571 = vmatprep.mubr.f32.mxu0 0.0
      %2572 = vmatmul.mubr.f32.gmra.mrb[0].mxu0 %v2347
      %v2573 = vpop.f32.mrb[0].mxu0
      %v2574 = vadd.f32 0.0, %v2573
      %v2575 = vpop.f32.mrb[0].mxu0
      %2576 = vdwg.mxu0
      %v2577 = vadd.f32 %v2171, %v2419
      %v2578 = vadd.f32 %v2172, %v2424
      %v2579 = vadd.f32 %v2173, %v2429
      %v2580 = vadd.f32 %v2174, %v2434
      %v2581 = vadd.f32 %v2175, %v2439
      %v2582 = vadd.f32 %v2176, %v2444
      %v2583 = vadd.f32 %v2177, %v2449
      %v2584 = vadd.f32 %v2178, %v2454
      %v2585 = vadd.f32 %v2179, %v2459
      %v2586 = vadd.f32 %v2180, %v2464
      %v2587 = vadd.f32 %v2181, %v2469
      %v2588 = vadd.f32 %v2182, %v2474
      %v2589 = vadd.f32 %v2183, %v2479
      %v2590 = vadd.f32 %v2184, %v2484
      %v2591 = vadd.f32 %v2185, %v2489
      %v2592 = vadd.f32 %v2186, %v2494
      %v2593 = vadd.f32 %v2187, %v2499
      %v2594 = vadd.f32 %v2188, %v2504
      %v2595 = vadd.f32 %v2189, %v2509
      %v2596 = vadd.f32 %v2190, %v2514
      %v2597 = vadd.f32 %v2191, %v2519
      %v2598 = vadd.f32 %v2192, %v2524
      %v2599 = vadd.f32 %v2193, %v2529
      %v2600 = vadd.f32 %v2194, %v2534
      %v2601 = vadd.f32 %v2195, %v2539
      %v2602 = vadd.f32 %v2196, %v2544
      %v2603 = vadd.f32 %v2197, %v2549
      %v2604 = vadd.f32 %v2198, %v2554
      %v2605 = vadd.f32 %v2199, %v2559
      %v2606 = vadd.f32 %v2200, %v2564
      %v2607 = vadd.f32 %v2201, %v2569
      %v2608 = vadd.f32 %v2202, %v2574
      %s2609 = sadd.s32 %s196, 2
      %s2610 = smul.u32 %s2609, 24
      %s2611 = scalar_lea.vmem %s184, %s2610
      %v2612 = vld [vmem:[%s2611] sm:$0xff]
      %v2613 = vld [vmem:[%s2611 + $0x8] sm:$0xff]
      %v2614 = vld [vmem:[%s2611 + $0x10] sm:$0x3]
      %v2615 = vld [vmem:[%s2611 + $0x18] sm:$0xff]
      %v2616 = vld [vmem:[%s2611 + $0x20] sm:$0xff]
      %v2617 = vld [vmem:[%s2611 + $0x28] sm:$0x3]
      %v2618 = vld [vmem:[%s2611 + $0x30] sm:$0xff]
      %v2619 = vld [vmem:[%s2611 + $0x38] sm:$0xff]
      %v2620 = vld [vmem:[%s2611 + $0x40] sm:$0x3]
      %v2621 = vld [vmem:[%s2611 + $0x48] sm:$0xff]
      %v2622 = vld [vmem:[%s2611 + $0x50] sm:$0xff]
      %v2623 = vld [vmem:[%s2611 + $0x58] sm:$0x3]
      %v2624 = vld [vmem:[%s2611 + $0x60] sm:$0xff]
      %v2625 = vld [vmem:[%s2611 + $0x68] sm:$0xff]
      %v2626 = vld [vmem:[%s2611 + $0x70] sm:$0x3]
      %v2627 = vld [vmem:[%s2611 + $0x78] sm:$0xff]
      %v2628 = vld [vmem:[%s2611 + $0x80] sm:$0xff]
      %v2629 = vld [vmem:[%s2611 + $0x88] sm:$0x3]
      %v2630 = vld [vmem:[%s2611 + $0x90] sm:$0xff]
      %v2631 = vld [vmem:[%s2611 + $0x98] sm:$0xff]
      %v2632 = vld [vmem:[%s2611 + $0xa0] sm:$0x3]
      %v2633 = vld [vmem:[%s2611 + $0xa8] sm:$0xff]
      %v2634 = vld [vmem:[%s2611 + $0xb0] sm:$0xff]
      %v2635 = vld [vmem:[%s2611 + $0xb8] sm:$0x3]
      %v2636 = vld [vmem:[%s2611 + $0xc0] sm:$0xff]
      %v2637 = vld [vmem:[%s2611 + $0xc8] sm:$0xff]
      %v2638 = vld [vmem:[%s2611 + $0xd0] sm:$0x3]
      %v2639 = vld [vmem:[%s2611 + $0xd8] sm:$0xff]
      %v2640 = vld [vmem:[%s2611 + $0xe0] sm:$0xff]
      %v2641 = vld [vmem:[%s2611 + $0xe8] sm:$0x3]
      %v2642 = vld [vmem:[%s2611 + $0xf0] sm:$0xff]
      %v2643 = vld [vmem:[%s2611 + $0xf8] sm:$0xff]
      %v2644 = vld [vmem:[%s2611 + $0x100] sm:$0x3]
      %v2645 = vld [vmem:[%s2611 + $0x108] sm:$0xff]
      %v2646 = vld [vmem:[%s2611 + $0x110] sm:$0xff]
      %v2647 = vld [vmem:[%s2611 + $0x118] sm:$0x3]
      %v2648 = vld [vmem:[%s2611 + $0x120] sm:$0xff]
      %v2649 = vld [vmem:[%s2611 + $0x128] sm:$0xff]
      %v2650 = vld [vmem:[%s2611 + $0x130] sm:$0x3]
      %v2651 = vld [vmem:[%s2611 + $0x138] sm:$0xff]
      %v2652 = vld [vmem:[%s2611 + $0x140] sm:$0xff]
      %v2653 = vld [vmem:[%s2611 + $0x148] sm:$0x3]
      %v2654 = vld [vmem:[%s2611 + $0x150] sm:$0xff]
      %v2655 = vld [vmem:[%s2611 + $0x158] sm:$0xff]
      %v2656 = vld [vmem:[%s2611 + $0x160] sm:$0x3]
      %v2657 = vld [vmem:[%s2611 + $0x168] sm:$0xff]
      %v2658 = vld [vmem:[%s2611 + $0x170] sm:$0xff]
      %v2659 = vld [vmem:[%s2611 + $0x178] sm:$0x3]
      %s2660 = scalar_lea.vmem %s1, 24
      %v2661 = vld [vmem:[%s2660] sm:$0xf]
      %v2663 = vsel %vm379, %v2612, 0
      %v2666 = vsel %vm379, %v2613, 0
      %v2669 = vsel %vm379, %v2615, 0
      %v2672 = vsel %vm379, %v2616, 0
      %v2675 = vsel %vm379, %v2618, 0
      %v2678 = vsel %vm379, %v2619, 0
      %v2681 = vsel %vm379, %v2621, 0
      %v2684 = vsel %vm379, %v2622, 0
      %v2687 = vsel %vm379, %v2624, 0
      %v2690 = vsel %vm379, %v2625, 0
      %v2693 = vsel %vm379, %v2627, 0
      %v2696 = vsel %vm379, %v2628, 0
      %v2699 = vsel %vm379, %v2630, 0
      %v2702 = vsel %vm379, %v2631, 0
      %v2705 = vsel %vm379, %v2633, 0
      %v2708 = vsel %vm379, %v2634, 0
      %v2711 = vsel %vm379, %v2636, 0
      %v2714 = vsel %vm379, %v2637, 0
      %v2717 = vsel %vm379, %v2639, 0
      %v2720 = vsel %vm379, %v2640, 0
      %v2723 = vsel %vm379, %v2642, 0
      %v2726 = vsel %vm379, %v2643, 0
      %v2729 = vsel %vm379, %v2645, 0
      %v2732 = vsel %vm379, %v2646, 0
      %v2735 = vsel %vm379, %v2648, 0
      %v2738 = vsel %vm379, %v2649, 0
      %v2741 = vsel %vm379, %v2651, 0
      %v2744 = vsel %vm379, %v2652, 0
      %v2747 = vsel %vm379, %v2654, 0
      %v2750 = vsel %vm379, %v2655, 0
      %v2753 = vsel %vm379, %v2657, 0
      %v2756 = vsel %vm379, %v2658, 0
      %v2759 = vsel %vm444, %v2661, 0
      %2761 = vmatprep.subr.mxu0 0.0
      %2762 = vmatpush1.msra.mxu0 %v2759
      %2763 = vmatprep.subr.mxu0 0.0
      %2764 = vmatpush1.msra.mxu0 0.0
      %2765 = vmatprep.subr.mxu0 0.0
      %2766 = vmatpush1.msra.mxu0 0.0
      %2767 = vmatprep.subr.mxu0 0.0
      %2768 = vmatpush1.msra.mxu0 0.0
      %2769 = vmatprep.subr.mxu0 0.0
      %2770 = vmatpush1.msra.mxu0 0.0
      %2771 = vmatprep.subr.mxu0 0.0
      %2772 = vmatpush1.msra.mxu0 0.0
      %2773 = vmatprep.subr.mxu0 0.0
      %2774 = vmatpush1.msra.mxu0 0.0
      %2775 = vmatprep.subr.mxu0 0.0
      %2776 = vmatpush1.msra.mxu0 0.0
      %2777 = vmatprep.subr.mxu0 0.0
      %2778 = vmatpush1.msra.mxu0 0.0
      %2779 = vmatprep.subr.mxu0 0.0
      %2780 = vmatpush1.msra.mxu0 0.0
      %2781 = vmatprep.subr.mxu0 0.0
      %2782 = vmatpush1.msra.mxu0 0.0
      %2783 = vmatprep.subr.mxu0 0.0
      %2784 = vmatpush1.msra.mxu0 0.0
      %2785 = vmatprep.subr.mxu0 0.0
      %2786 = vmatpush1.msra.mxu0 0.0
      %2787 = vmatprep.subr.mxu0 0.0
      %2788 = vmatpush1.msra.mxu0 0.0
      %2789 = vmatprep.subr.mxu0 0.0
      %2790 = vmatpush1.msra.mxu0 0.0
      %2791 = vmatprep.subr.mxu0 0.0
      %2792 = vmatpush1.msra.mxu0 0.0
      %2793 = vmatprep.subr.mxu0 0.0
      %2794 = vmatpush1.msra.mxu0 0.0
      %2795 = vmatprep.subr.mxu0 0.0
      %2796 = vmatpush1.msra.mxu0 0.0
      %2797 = vmatprep.subr.mxu0 0.0
      %2798 = vmatpush1.msra.mxu0 0.0
      %2799 = vmatprep.subr.mxu0 0.0
      %2800 = vmatpush1.msra.mxu0 0.0
      %2801 = vmatprep.subr.mxu0 0.0
      %2802 = vmatpush1.msra.mxu0 0.0
      %2803 = vmatprep.subr.mxu0 0.0
      %2804 = vmatpush1.msra.mxu0 0.0
      %2805 = vmatprep.subr.mxu0 0.0
      %2806 = vmatpush1.msra.mxu0 0.0
      %2807 = vmatprep.subr.mxu0 0.0
      %2808 = vmatpush1.msra.mxu0 0.0
      %2809 = vmatprep.subr.mxu0 0.0
      %2810 = vmatpush1.msra.mxu0 0.0
      %2811 = vmatprep.subr.mxu0 0.0
      %2812 = vmatpush1.msra.mxu0 0.0
      %2813 = vmatprep.subr.mxu0 0.0
      %2814 = vmatpush1.msra.mxu0 0.0
      %2815 = vmatprep.subr.mxu0 0.0
      %2816 = vmatpush1.msra.mxu0 0.0
      %2817 = vmatprep.subr.mxu0 0.0
      %2818 = vmatpush1.msra.mxu0 0.0
      %2819 = vmatprep.subr.mxu0 0.0
      %2820 = vmatpush1.msra.mxu0 0.0
      %2821 = vmatprep.subr.mxu0 0.0
      %2822 = vmatpush1.msra.mxu0 0.0
      %2823 = vmatprep.subr.mxu0 0.0
      %2824 = vmatpush1.msra.mxu0 0.0
      %2825 = vmatprep.mubr.f32.mxu0 0.0
      %2826 = vmatmul.mubr.f32.gmra.mrb[0].mxu0 %v2663
      %v2827 = vpop.f32.mrb[0].mxu0
      %v2828 = vadd.f32 0.0, %v2827
      %v2829 = vpop.f32.mrb[0].mxu0
      %2830 = vmatprep.mubr.f32.mxu0 0.0
      %2831 = vmatmul.mubr.f32.gmra.mrb[0].mxu0 %v2666
      %v2832 = vpop.f32.mrb[0].mxu0
      %v2833 = vadd.f32 0.0, %v2832
      %v2834 = vpop.f32.mrb[0].mxu0
      %2835 = vmatprep.mubr.f32.mxu0 0.0
      %2836 = vmatmul.mubr.f32.gmra.mrb[0].mxu0 %v2669
      %v2837 = vpop.f32.mrb[0].mxu0
      %v2838 = vadd.f32 0.0, %v2837
      %v2839 = vpop.f32.mrb[0].mxu0
      %2840 = vmatprep.mubr.f32.mxu0 0.0
      %2841 = vmatmul.mubr.f32.gmra.mrb[0].mxu0 %v2672
      %v2842 = vpop.f32.mrb[0].mxu0
      %v2843 = vadd.f32 0.0, %v2842
      %v2844 = vpop.f32.mrb[0].mxu0
      %2845 = vmatprep.mubr.f32.mxu0 0.0
      %2846 = vmatmul.mubr.f32.gmra.mrb[0].mxu0 %v2675
      %v2847 = vpop.f32.mrb[0].mxu0
      %v2848 = vadd.f32 0.0, %v2847
      %v2849 = vpop.f32.mrb[0].mxu0
      %2850 = vmatprep.mubr.f32.mxu0 0.0
      %2851 = vmatmul.mubr.f32.gmra.mrb[0].mxu0 %v2678
      %v2852 = vpop.f32.mrb[0].mxu0
      %v2853 = vadd.f32 0.0, %v2852
      %v2854 = vpop.f32.mrb[0].mxu0
      %2855 = vmatprep.mubr.f32.mxu0 0.0
      %2856 = vmatmul.mubr.f32.gmra.mrb[0].mxu0 %v2681
      %v2857 = vpop.f32.mrb[0].mxu0
      %v2858 = vadd.f32 0.0, %v2857
      %v2859 = vpop.f32.mrb[0].mxu0
      %2860 = vmatprep.mubr.f32.mxu0 0.0
      %2861 = vmatmul.mubr.f32.gmra.mrb[0].mxu0 %v2684
      %v2862 = vpop.f32.mrb[0].mxu0
      %v2863 = vadd.f32 0.0, %v2862
      %v2864 = vpop.f32.mrb[0].mxu0
      %2865 = vmatprep.mubr.f32.mxu0 0.0
      %2866 = vmatmul.mubr.f32.gmra.mrb[0].mxu0 %v2687
      %v2867 = vpop.f32.mrb[0].mxu0
      %v2868 = vadd.f32 0.0, %v2867
      %v2869 = vpop.f32.mrb[0].mxu0
      %2870 = vmatprep.mubr.f32.mxu0 0.0
      %2871 = vmatmul.mubr.f32.gmra.mrb[0].mxu0 %v2690
      %v2872 = vpop.f32.mrb[0].mxu0
      %v2873 = vadd.f32 0.0, %v2872
      %v2874 = vpop.f32.mrb[0].mxu0
      %2875 = vmatprep.mubr.f32.mxu0 0.0
      %2876 = vmatmul.mubr.f32.gmra.mrb[0].mxu0 %v2693
      %v2877 = vpop.f32.mrb[0].mxu0
      %v2878 = vadd.f32 0.0, %v2877
      %v2879 = vpop.f32.mrb[0].mxu0
      %2880 = vmatprep.mubr.f32.mxu0 0.0
      %2881 = vmatmul.mubr.f32.gmra.mrb[0].mxu0 %v2696
      %v2882 = vpop.f32.mrb[0].mxu0
      %v2883 = vadd.f32 0.0, %v2882
      %v2884 = vpop.f32.mrb[0].mxu0
      %2885 = vmatprep.mubr.f32.mxu0 0.0
      %2886 = vmatmul.mubr.f32.gmra.mrb[0].mxu0 %v2699
      %v2887 = vpop.f32.mrb[0].mxu0
      %v2888 = vadd.f32 0.0, %v2887
      %v2889 = vpop.f32.mrb[0].mxu0
      %2890 = vmatprep.mubr.f32.mxu0 0.0
      %2891 = vmatmul.mubr.f32.gmra.mrb[0].mxu0 %v2702
      %v2892 = vpop.f32.mrb[0].mxu0
      %v2893 = vadd.f32 0.0, %v2892
      %v2894 = vpop.f32.mrb[0].mxu0
      %2895 = vmatprep.mubr.f32.mxu0 0.0
      %2896 = vmatmul.mubr.f32.gmra.mrb[0].mxu0 %v2705
      %v2897 = vpop.f32.mrb[0].mxu0
      %v2898 = vadd.f32 0.0, %v2897
      %v2899 = vpop.f32.mrb[0].mxu0
      %2900 = vmatprep.mubr.f32.mxu0 0.0
      %2901 = vmatmul.mubr.f32.gmra.mrb[0].mxu0 %v2708
      %v2902 = vpop.f32.mrb[0].mxu0
      %v2903 = vadd.f32 0.0, %v2902
      %v2904 = vpop.f32.mrb[0].mxu0
      %2905 = vmatprep.mubr.f32.mxu0 0.0
      %2906 = vmatmul.mubr.f32.gmra.mrb[0].mxu0 %v2711
      %v2907 = vpop.f32.mrb[0].mxu0
      %v2908 = vadd.f32 0.0, %v2907
      %v2909 = vpop.f32.mrb[0].mxu0
      %2910 = vmatprep.mubr.f32.mxu0 0.0
      %2911 = vmatmul.mubr.f32.gmra.mrb[0].mxu0 %v2714
      %v2912 = vpop.f32.mrb[0].mxu0
      %v2913 = vadd.f32 0.0, %v2912
      %v2914 = vpop.f32.mrb[0].mxu0
      %2915 = vmatprep.mubr.f32.mxu0 0.0
      %2916 = vmatmul.mubr.f32.gmra.mrb[0].mxu0 %v2717
      %v2917 = vpop.f32.mrb[0].mxu0
      %v2918 = vadd.f32 0.0, %v2917
      %v2919 = vpop.f32.mrb[0].mxu0
      %2920 = vmatprep.mubr.f32.mxu0 0.0
      %2921 = vmatmul.mubr.f32.gmra.mrb[0].mxu0 %v2720
      %v2922 = vpop.f32.mrb[0].mxu0
      %v2923 = vadd.f32 0.0, %v2922
      %v2924 = vpop.f32.mrb[0].mxu0
      %2925 = vmatprep.mubr.f32.mxu0 0.0
      %2926 = vmatmul.mubr.f32.gmra.mrb[0].mxu0 %v2723
      %v2927 = vpop.f32.mrb[0].mxu0
      %v2928 = vadd.f32 0.0, %v2927
      %v2929 = vpop.f32.mrb[0].mxu0
      %2930 = vmatprep.mubr.f32.mxu0 0.0
      %2931 = vmatmul.mubr.f32.gmra.mrb[0].mxu0 %v2726
      %v2932 = vpop.f32.mrb[0].mxu0
      %v2933 = vadd.f32 0.0, %v2932
      %v2934 = vpop.f32.mrb[0].mxu0
      %2935 = vmatprep.mubr.f32.mxu0 0.0
      %2936 = vmatmul.mubr.f32.gmra.mrb[0].mxu0 %v2729
      %v2937 = vpop.f32.mrb[0].mxu0
      %v2938 = vadd.f32 0.0, %v2937
      %v2939 = vpop.f32.mrb[0].mxu0
      %2940 = vmatprep.mubr.f32.mxu0 0.0
      %2941 = vmatmul.mubr.f32.gmra.mrb[0].mxu0 %v2732
      %v2942 = vpop.f32.mrb[0].mxu0
      %v2943 = vadd.f32 0.0, %v2942
      %v2944 = vpop.f32.mrb[0].mxu0
      %2945 = vmatprep.mubr.f32.mxu0 0.0
      %2946 = vmatmul.mubr.f32.gmra.mrb[0].mxu0 %v2735
      %v2947 = vpop.f32.mrb[0].mxu0
      %v2948 = vadd.f32 0.0, %v2947
      %v2949 = vpop.f32.mrb[0].mxu0
      %2950 = vmatprep.mubr.f32.mxu0 0.0
      %2951 = vmatmul.mubr.f32.gmra.mrb[0].mxu0 %v2738
      %v2952 = vpop.f32.mrb[0].mxu0
      %v2953 = vadd.f32 0.0, %v2952
      %v2954 = vpop.f32.mrb[0].mxu0
      %2955 = vmatprep.mubr.f32.mxu0 0.0
      %2956 = vmatmul.mubr.f32.gmra.mrb[0].mxu0 %v2741
      %v2957 = vpop.f32.mrb[0].mxu0
      %v2958 = vadd.f32 0.0, %v2957
      %v2959 = vpop.f32.mrb[0].mxu0
      %2960 = vmatprep.mubr.f32.mxu0 0.0
      %2961 = vmatmul.mubr.f32.gmra.mrb[0].mxu0 %v2744
      %v2962 = vpop.f32.mrb[0].mxu0
      %v2963 = vadd.f32 0.0, %v2962
      %v2964 = vpop.f32.mrb[0].mxu0
      %2965 = vmatprep.mubr.f32.mxu0 0.0
      %2966 = vmatmul.mubr.f32.gmra.mrb[0].mxu0 %v2747
      %v2967 = vpop.f32.mrb[0].mxu0
      %v2968 = vadd.f32 0.0, %v2967
      %v2969 = vpop.f32.mrb[0].mxu0
      %2970 = vmatprep.mubr.f32.mxu0 0.0
      %2971 = vmatmul.mubr.f32.gmra.mrb[0].mxu0 %v2750
      %v2972 = vpop.f32.mrb[0].mxu0
      %v2973 = vadd.f32 0.0, %v2972
      %v2974 = vpop.f32.mrb[0].mxu0
      %2975 = vmatprep.mubr.f32.mxu0 0.0
      %2976 = vmatmul.mubr.f32.gmra.mrb[0].mxu0 %v2753
      %v2977 = vpop.f32.mrb[0].mxu0
      %v2978 = vadd.f32 0.0, %v2977
      %v2979 = vpop.f32.mrb[0].mxu0
      %2980 = vmatprep.mubr.f32.mxu0 0.0
      %2981 = vmatmul.mubr.f32.gmra.mrb[0].mxu0 %v2756
      %v2982 = vpop.f32.mrb[0].mxu0
      %v2983 = vadd.f32 0.0, %v2982
      %v2984 = vpop.f32.mrb[0].mxu0
      %2985 = vdwg.mxu0
      %v2986 = vadd.f32 %v2577, %v2828
      %v2987 = vadd.f32 %v2578, %v2833
      %v2988 = vadd.f32 %v2579, %v2838
      %v2989 = vadd.f32 %v2580, %v2843
      %v2990 = vadd.f32 %v2581, %v2848
      %v2991 = vadd.f32 %v2582, %v2853
      %v2992 = vadd.f32 %v2583, %v2858
      %v2993 = vadd.f32 %v2584, %v2863
      %v2994 = vadd.f32 %v2585, %v2868
      %v2995 = vadd.f32 %v2586, %v2873
      %v2996 = vadd.f32 %v2587, %v2878
      %v2997 = vadd.f32 %v2588, %v2883
      %v2998 = vadd.f32 %v2589, %v2888
      %v2999 = vadd.f32 %v2590, %v2893
      %v3000 = vadd.f32 %v2591, %v2898
      %v3001 = vadd.f32 %v2592, %v2903
      %v3002 = vadd.f32 %v2593, %v2908
      %v3003 = vadd.f32 %v2594, %v2913
      %v3004 = vadd.f32 %v2595, %v2918
      %v3005 = vadd.f32 %v2596, %v2923
      %v3006 = vadd.f32 %v2597, %v2928
      %v3007 = vadd.f32 %v2598, %v2933
      %v3008 = vadd.f32 %v2599, %v2938
      %v3009 = vadd.f32 %v2600, %v2943
      %v3010 = vadd.f32 %v2601, %v2948
      %v3011 = vadd.f32 %v2602, %v2953
      %v3012 = vadd.f32 %v2603, %v2958
      %v3013 = vadd.f32 %v2604, %v2963
      %v3014 = vadd.f32 %v2605, %v2968
      %v3015 = vadd.f32 %v2606, %v2973
      %v3016 = vadd.f32 %v2607, %v2978
      %v3017 = vadd.f32 %v2608, %v2983
      %v3034 = vrot.slane %v2612, 1
      %v3035 = vrot.slane %v2613, 1
      %v3036 = vsel %vm296, %v3034, %v3035
      %v3037 = vrot.slane %v2614, 1
      %v3038 = vsel %vm296, %v3035, %v3037
      %v3039 = vrot.slane %v2615, 1
      %v3040 = vrot.slane %v2616, 1
      %v3041 = vsel %vm296, %v3039, %v3040
      %v3042 = vrot.slane %v2617, 1
      %v3043 = vsel %vm296, %v3040, %v3042
      %v3044 = vrot.slane %v2618, 1
      %v3045 = vrot.slane %v2619, 1
      %v3046 = vsel %vm296, %v3044, %v3045
      %v3047 = vrot.slane %v2620, 1
      %v3048 = vsel %vm296, %v3045, %v3047
      %v3049 = vrot.slane %v2621, 1
      %v3050 = vrot.slane %v2622, 1
      %v3051 = vsel %vm296, %v3049, %v3050
      %v3052 = vrot.slane %v2623, 1
      %v3053 = vsel %vm296, %v3050, %v3052
      %v3054 = vrot.slane %v2624, 1
      %v3055 = vrot.slane %v2625, 1
      %v3056 = vsel %vm296, %v3054, %v3055
      %v3057 = vrot.slane %v2626, 1
      %v3058 = vsel %vm296, %v3055, %v3057
      %v3059 = vrot.slane %v2627, 1
      %v3060 = vrot.slane %v2628, 1
      %v3061 = vsel %vm296, %v3059, %v3060
      %v3062 = vrot.slane %v2629, 1
      %v3063 = vsel %vm296, %v3060, %v3062
      %v3064 = vrot.slane %v2630, 1
      %v3065 = vrot.slane %v2631, 1
      %v3066 = vsel %vm296, %v3064, %v3065
      %v3067 = vrot.slane %v2632, 1
      %v3068 = vsel %vm296, %v3065, %v3067
      %v3069 = vrot.slane %v2633, 1
      %v3070 = vrot.slane %v2634, 1
      %v3071 = vsel %vm296, %v3069, %v3070
      %v3072 = vrot.slane %v2635, 1
      %v3073 = vsel %vm296, %v3070, %v3072
      %v3074 = vrot.slane %v2636, 1
      %v3075 = vrot.slane %v2637, 1
      %v3076 = vsel %vm296, %v3074, %v3075
      %v3077 = vrot.slane %v2638, 1
      %v3078 = vsel %vm296, %v3075, %v3077
      %v3079 = vrot.slane %v2639, 1
      %v3080 = vrot.slane %v2640, 1
      %v3081 = vsel %vm296, %v3079, %v3080
      %v3082 = vrot.slane %v2641, 1
      %v3083 = vsel %vm296, %v3080, %v3082
      %v3084 = vrot.slane %v2642, 1
      %v3085 = vrot.slane %v2643, 1
      %v3086 = vsel %vm296, %v3084, %v3085
      %v3087 = vrot.slane %v2644, 1
      %v3088 = vsel %vm296, %v3085, %v3087
      %v3089 = vrot.slane %v2645, 1
      %v3090 = vrot.slane %v2646, 1
      %v3091 = vsel %vm296, %v3089, %v3090
      %v3092 = vrot.slane %v2647, 1
      %v3093 = vsel %vm296, %v3090, %v3092
      %v3094 = vrot.slane %v2648, 1
      %v3095 = vrot.slane %v2649, 1
      %v3096 = vsel %vm296, %v3094, %v3095
      %v3097 = vrot.slane %v2650, 1
      %v3098 = vsel %vm296, %v3095, %v3097
      %v3099 = vrot.slane %v2651, 1
      %v3100 = vrot.slane %v2652, 1
      %v3101 = vsel %vm296, %v3099, %v3100
      %v3102 = vrot.slane %v2653, 1
      %v3103 = vsel %vm296, %v3100, %v3102
      %v3104 = vrot.slane %v2654, 1
      %v3105 = vrot.slane %v2655, 1
      %v3106 = vsel %vm296, %v3104, %v3105
      %v3107 = vrot.slane %v2656, 1
      %v3108 = vsel %vm296, %v3105, %v3107
      %v3109 = vrot.slane %v2657, 1
      %v3110 = vrot.slane %v2658, 1
      %v3111 = vsel %vm296, %v3109, %v3110
      %v3112 = vrot.slane %v2659, 1
      %v3113 = vsel %vm296, %v3110, %v3112
      %s3114 = scalar_lea.vmem %s1, 28
      %v3115 = vld [vmem:[%s3114] sm:$0xf]
      %v3116 = vsel %vm379, %v3036, 0
      %v3118 = vsel %vm379, %v3038, 0
      %v3120 = vsel %vm379, %v3041, 0
      %v3122 = vsel %vm379, %v3043, 0
      %v3124 = vsel %vm379, %v3046, 0
      %v3126 = vsel %vm379, %v3048, 0
      %v3128 = vsel %vm379, %v3051, 0
      %v3130 = vsel %vm379, %v3053, 0
      %v3132 = vsel %vm379, %v3056, 0
      %v3134 = vsel %vm379, %v3058, 0
      %v3136 = vsel %vm379, %v3061, 0
      %v3138 = vsel %vm379, %v3063, 0
      %v3140 = vsel %vm379, %v3066, 0
      %v3142 = vsel %vm379, %v3068, 0
      %v3144 = vsel %vm379, %v3071, 0
      %v3146 = vsel %vm379, %v3073, 0
      %v3148 = vsel %vm379, %v3076, 0
      %v3150 = vsel %vm379, %v3078, 0
      %v3152 = vsel %vm379, %v3081, 0
      %v3154 = vsel %vm379, %v3083, 0
      %v3156 = vsel %vm379, %v3086, 0
      %v3158 = vsel %vm379, %v3088, 0
      %v3160 = vsel %vm379, %v3091, 0
      %v3162 = vsel %vm379, %v3093, 0
      %v3164 = vsel %vm379, %v3096, 0
      %v3166 = vsel %vm379, %v3098, 0
      %v3168 = vsel %vm379, %v3101, 0
      %v3170 = vsel %vm379, %v3103, 0
      %v3172 = vsel %vm379, %v3106, 0
      %v3174 = vsel %vm379, %v3108, 0
      %v3176 = vsel %vm379, %v3111, 0
      %v3178 = vsel %vm379, %v3113, 0
      %v3181 = vsel %vm444, %v3115, 0
      %3183 = vmatprep.subr.mxu0 0.0
      %3184 = vmatpush1.msra.mxu0 %v3181
      %3185 = vmatprep.subr.mxu0 0.0
      %3186 = vmatpush1.msra.mxu0 0.0
      %3187 = vmatprep.subr.mxu0 0.0
      %3188 = vmatpush1.msra.mxu0 0.0
      %3189 = vmatprep.subr.mxu0 0.0
      %3190 = vmatpush1.msra.mxu0 0.0
      %3191 = vmatprep.subr.mxu0 0.0
      %3192 = vmatpush1.msra.mxu0 0.0
      %3193 = vmatprep.subr.mxu0 0.0
      %3194 = vmatpush1.msra.mxu0 0.0
      %3195 = vmatprep.subr.mxu0 0.0
      %3196 = vmatpush1.msra.mxu0 0.0
      %3197 = vmatprep.subr.mxu0 0.0
      %3198 = vmatpush1.msra.mxu0 0.0
      %3199 = vmatprep.subr.mxu0 0.0
      %3200 = vmatpush1.msra.mxu0 0.0
      %3201 = vmatprep.subr.mxu0 0.0
      %3202 = vmatpush1.msra.mxu0 0.0
      %3203 = vmatprep.subr.mxu0 0.0
      %3204 = vmatpush1.msra.mxu0 0.0
      %3205 = vmatprep.subr.mxu0 0.0
      %3206 = vmatpush1.msra.mxu0 0.0
      %3207 = vmatprep.subr.mxu0 0.0
      %3208 = vmatpush1.msra.mxu0 0.0
      %3209 = vmatprep.subr.mxu0 0.0
      %3210 = vmatpush1.msra.mxu0 0.0
      %3211 = vmatprep.subr.mxu0 0.0
      %3212 = vmatpush1.msra.mxu0 0.0
      %3213 = vmatprep.subr.mxu0 0.0
      %3214 = vmatpush1.msra.mxu0 0.0
      %3215 = vmatprep.subr.mxu0 0.0
      %3216 = vmatpush1.msra.mxu0 0.0
      %3217 = vmatprep.subr.mxu0 0.0
      %3218 = vmatpush1.msra.mxu0 0.0
      %3219 = vmatprep.subr.mxu0 0.0
      %3220 = vmatpush1.msra.mxu0 0.0
      %3221 = vmatprep.subr.mxu0 0.0
      %3222 = vmatpush1.msra.mxu0 0.0
      %3223 = vmatprep.subr.mxu0 0.0
      %3224 = vmatpush1.msra.mxu0 0.0
      %3225 = vmatprep.subr.mxu0 0.0
      %3226 = vmatpush1.msra.mxu0 0.0
      %3227 = vmatprep.subr.mxu0 0.0
      %3228 = vmatpush1.msra.mxu0 0.0
      %3229 = vmatprep.subr.mxu0 0.0
      %3230 = vmatpush1.msra.mxu0 0.0
      %3231 = vmatprep.subr.mxu0 0.0
      %3232 = vmatpush1.msra.mxu0 0.0
      %3233 = vmatprep.subr.mxu0 0.0
      %3234 = vmatpush1.msra.mxu0 0.0
      %3235 = vmatprep.subr.mxu0 0.0
      %3236 = vmatpush1.msra.mxu0 0.0
      %3237 = vmatprep.subr.mxu0 0.0
      %3238 = vmatpush1.msra.mxu0 0.0
      %3239 = vmatprep.subr.mxu0 0.0
      %3240 = vmatpush1.msra.mxu0 0.0
      %3241 = vmatprep.subr.mxu0 0.0
      %3242 = vmatpush1.msra.mxu0 0.0
      %3243 = vmatprep.subr.mxu0 0.0
      %3244 = vmatpush1.msra.mxu0 0.0
      %3245 = vmatprep.subr.mxu0 0.0
      %3246 = vmatpush1.msra.mxu0 0.0
      %3247 = vmatprep.mubr.f32.mxu0 0.0
      %3248 = vmatmul.mubr.f32.gmra.mrb[0].mxu0 %v3116
      %v3249 = vpop.f32.mrb[0].mxu0
      %v3250 = vadd.f32 0.0, %v3249
      %v3251 = vpop.f32.mrb[0].mxu0
      %3252 = vmatprep.mubr.f32.mxu0 0.0
      %3253 = vmatmul.mubr.f32.gmra.mrb[0].mxu0 %v3118
      %v3254 = vpop.f32.mrb[0].mxu0
      %v3255 = vadd.f32 0.0, %v3254
      %v3256 = vpop.f32.mrb[0].mxu0
      %3257 = vmatprep.mubr.f32.mxu0 0.0
      %3258 = vmatmul.mubr.f32.gmra.mrb[0].mxu0 %v3120
      %v3259 = vpop.f32.mrb[0].mxu0
      %v3260 = vadd.f32 0.0, %v3259
      %v3261 = vpop.f32.mrb[0].mxu0
      %3262 = vmatprep.mubr.f32.mxu0 0.0
      %3263 = vmatmul.mubr.f32.gmra.mrb[0].mxu0 %v3122
      %v3264 = vpop.f32.mrb[0].mxu0
      %v3265 = vadd.f32 0.0, %v3264
      %v3266 = vpop.f32.mrb[0].mxu0
      %3267 = vmatprep.mubr.f32.mxu0 0.0
      %3268 = vmatmul.mubr.f32.gmra.mrb[0].mxu0 %v3124
      %v3269 = vpop.f32.mrb[0].mxu0
      %v3270 = vadd.f32 0.0, %v3269
      %v3271 = vpop.f32.mrb[0].mxu0
      %3272 = vmatprep.mubr.f32.mxu0 0.0
      %3273 = vmatmul.mubr.f32.gmra.mrb[0].mxu0 %v3126
      %v3274 = vpop.f32.mrb[0].mxu0
      %v3275 = vadd.f32 0.0, %v3274
      %v3276 = vpop.f32.mrb[0].mxu0
      %3277 = vmatprep.mubr.f32.mxu0 0.0
      %3278 = vmatmul.mubr.f32.gmra.mrb[0].mxu0 %v3128
      %v3279 = vpop.f32.mrb[0].mxu0
      %v3280 = vadd.f32 0.0, %v3279
      %v3281 = vpop.f32.mrb[0].mxu0
      %3282 = vmatprep.mubr.f32.mxu0 0.0
      %3283 = vmatmul.mubr.f32.gmra.mrb[0].mxu0 %v3130
      %v3284 = vpop.f32.mrb[0].mxu0
      %v3285 = vadd.f32 0.0, %v3284
      %v3286 = vpop.f32.mrb[0].mxu0
      %3287 = vmatprep.mubr.f32.mxu0 0.0
      %3288 = vmatmul.mubr.f32.gmra.mrb[0].mxu0 %v3132
      %v3289 = vpop.f32.mrb[0].mxu0
      %v3290 = vadd.f32 0.0, %v3289
      %v3291 = vpop.f32.mrb[0].mxu0
      %3292 = vmatprep.mubr.f32.mxu0 0.0
      %3293 = vmatmul.mubr.f32.gmra.mrb[0].mxu0 %v3134
      %v3294 = vpop.f32.mrb[0].mxu0
      %v3295 = vadd.f32 0.0, %v3294
      %v3296 = vpop.f32.mrb[0].mxu0
      %3297 = vmatprep.mubr.f32.mxu0 0.0
      %3298 = vmatmul.mubr.f32.gmra.mrb[0].mxu0 %v3136
      %v3299 = vpop.f32.mrb[0].mxu0
      %v3300 = vadd.f32 0.0, %v3299
      %v3301 = vpop.f32.mrb[0].mxu0
      %3302 = vmatprep.mubr.f32.mxu0 0.0
      %3303 = vmatmul.mubr.f32.gmra.mrb[0].mxu0 %v3138
      %v3304 = vpop.f32.mrb[0].mxu0
      %v3305 = vadd.f32 0.0, %v3304
      %v3306 = vpop.f32.mrb[0].mxu0
      %3307 = vmatprep.mubr.f32.mxu0 0.0
      %3308 = vmatmul.mubr.f32.gmra.mrb[0].mxu0 %v3140
      %v3309 = vpop.f32.mrb[0].mxu0
      %v3310 = vadd.f32 0.0, %v3309
      %v3311 = vpop.f32.mrb[0].mxu0
      %3312 = vmatprep.mubr.f32.mxu0 0.0
      %3313 = vmatmul.mubr.f32.gmra.mrb[0].mxu0 %v3142
      %v3314 = vpop.f32.mrb[0].mxu0
      %v3315 = vadd.f32 0.0, %v3314
      %v3316 = vpop.f32.mrb[0].mxu0
      %3317 = vmatprep.mubr.f32.mxu0 0.0
      %3318 = vmatmul.mubr.f32.gmra.mrb[0].mxu0 %v3144
      %v3319 = vpop.f32.mrb[0].mxu0
      %v3320 = vadd.f32 0.0, %v3319
      %v3321 = vpop.f32.mrb[0].mxu0
      %3322 = vmatprep.mubr.f32.mxu0 0.0
      %3323 = vmatmul.mubr.f32.gmra.mrb[0].mxu0 %v3146
      %v3324 = vpop.f32.mrb[0].mxu0
      %v3325 = vadd.f32 0.0, %v3324
      %v3326 = vpop.f32.mrb[0].mxu0
      %3327 = vmatprep.mubr.f32.mxu0 0.0
      %3328 = vmatmul.mubr.f32.gmra.mrb[0].mxu0 %v3148
      %v3329 = vpop.f32.mrb[0].mxu0
      %v3330 = vadd.f32 0.0, %v3329
      %v3331 = vpop.f32.mrb[0].mxu0
      %3332 = vmatprep.mubr.f32.mxu0 0.0
      %3333 = vmatmul.mubr.f32.gmra.mrb[0].mxu0 %v3150
      %v3334 = vpop.f32.mrb[0].mxu0
      %v3335 = vadd.f32 0.0, %v3334
      %v3336 = vpop.f32.mrb[0].mxu0
      %3337 = vmatprep.mubr.f32.mxu0 0.0
      %3338 = vmatmul.mubr.f32.gmra.mrb[0].mxu0 %v3152
      %v3339 = vpop.f32.mrb[0].mxu0
      %v3340 = vadd.f32 0.0, %v3339
      %v3341 = vpop.f32.mrb[0].mxu0
      %3342 = vmatprep.mubr.f32.mxu0 0.0
      %3343 = vmatmul.mubr.f32.gmra.mrb[0].mxu0 %v3154
      %v3344 = vpop.f32.mrb[0].mxu0
      %v3345 = vadd.f32 0.0, %v3344
      %v3346 = vpop.f32.mrb[0].mxu0
      %3347 = vmatprep.mubr.f32.mxu0 0.0
      %3348 = vmatmul.mubr.f32.gmra.mrb[0].mxu0 %v3156
      %v3349 = vpop.f32.mrb[0].mxu0
      %v3350 = vadd.f32 0.0, %v3349
      %v3351 = vpop.f32.mrb[0].mxu0
      %3352 = vmatprep.mubr.f32.mxu0 0.0
      %3353 = vmatmul.mubr.f32.gmra.mrb[0].mxu0 %v3158
      %v3354 = vpop.f32.mrb[0].mxu0
      %v3355 = vadd.f32 0.0, %v3354
      %v3356 = vpop.f32.mrb[0].mxu0
      %3357 = vmatprep.mubr.f32.mxu0 0.0
      %3358 = vmatmul.mubr.f32.gmra.mrb[0].mxu0 %v3160
      %v3359 = vpop.f32.mrb[0].mxu0
      %v3360 = vadd.f32 0.0, %v3359
      %v3361 = vpop.f32.mrb[0].mxu0
      %3362 = vmatprep.mubr.f32.mxu0 0.0
      %3363 = vmatmul.mubr.f32.gmra.mrb[0].mxu0 %v3162
      %v3364 = vpop.f32.mrb[0].mxu0
      %v3365 = vadd.f32 0.0, %v3364
      %v3366 = vpop.f32.mrb[0].mxu0
      %3367 = vmatprep.mubr.f32.mxu0 0.0
      %3368 = vmatmul.mubr.f32.gmra.mrb[0].mxu0 %v3164
      %v3369 = vpop.f32.mrb[0].mxu0
      %v3370 = vadd.f32 0.0, %v3369
      %v3371 = vpop.f32.mrb[0].mxu0
      %3372 = vmatprep.mubr.f32.mxu0 0.0
      %3373 = vmatmul.mubr.f32.gmra.mrb[0].mxu0 %v3166
      %v3374 = vpop.f32.mrb[0].mxu0
      %v3375 = vadd.f32 0.0, %v3374
      %v3376 = vpop.f32.mrb[0].mxu0
      %3377 = vmatprep.mubr.f32.mxu0 0.0
      %3378 = vmatmul.mubr.f32.gmra.mrb[0].mxu0 %v3168
      %v3379 = vpop.f32.mrb[0].mxu0
      %v3380 = vadd.f32 0.0, %v3379
      %v3381 = vpop.f32.mrb[0].mxu0
      %3382 = vmatprep.mubr.f32.mxu0 0.0
      %3383 = vmatmul.mubr.f32.gmra.mrb[0].mxu0 %v3170
      %v3384 = vpop.f32.mrb[0].mxu0
      %v3385 = vadd.f32 0.0, %v3384
      %v3386 = vpop.f32.mrb[0].mxu0
      %3387 = vmatprep.mubr.f32.mxu0 0.0
      %3388 = vmatmul.mubr.f32.gmra.mrb[0].mxu0 %v3172
      %v3389 = vpop.f32.mrb[0].mxu0
      %v3390 = vadd.f32 0.0, %v3389
      %v3391 = vpop.f32.mrb[0].mxu0
      %3392 = vmatprep.mubr.f32.mxu0 0.0
      %3393 = vmatmul.mubr.f32.gmra.mrb[0].mxu0 %v3174
      %v3394 = vpop.f32.mrb[0].mxu0
      %v3395 = vadd.f32 0.0, %v3394
      %v3396 = vpop.f32.mrb[0].mxu0
      %3397 = vmatprep.mubr.f32.mxu0 0.0
      %3398 = vmatmul.mubr.f32.gmra.mrb[0].mxu0 %v3176
      %v3399 = vpop.f32.mrb[0].mxu0
      %v3400 = vadd.f32 0.0, %v3399
      %v3401 = vpop.f32.mrb[0].mxu0
      %3402 = vmatprep.mubr.f32.mxu0 0.0
      %3403 = vmatmul.mubr.f32.gmra.mrb[0].mxu0 %v3178
      %v3404 = vpop.f32.mrb[0].mxu0
      %v3405 = vadd.f32 0.0, %v3404
      %v3406 = vpop.f32.mrb[0].mxu0
      %3407 = vdwg.mxu0
      %v3408 = vadd.f32 %v2986, %v3250
      %v3409 = vadd.f32 %v2987, %v3255
      %v3410 = vadd.f32 %v2988, %v3260
      %v3411 = vadd.f32 %v2989, %v3265
      %v3412 = vadd.f32 %v2990, %v3270
      %v3413 = vadd.f32 %v2991, %v3275
      %v3414 = vadd.f32 %v2992, %v3280
      %v3415 = vadd.f32 %v2993, %v3285
      %v3416 = vadd.f32 %v2994, %v3290
      %v3417 = vadd.f32 %v2995, %v3295
      %v3418 = vadd.f32 %v2996, %v3300
      %v3419 = vadd.f32 %v2997, %v3305
      %v3420 = vadd.f32 %v2998, %v3310
      %v3421 = vadd.f32 %v2999, %v3315
      %v3422 = vadd.f32 %v3000, %v3320
      %v3423 = vadd.f32 %v3001, %v3325
      %v3424 = vadd.f32 %v3002, %v3330
      %v3425 = vadd.f32 %v3003, %v3335
      %v3426 = vadd.f32 %v3004, %v3340
      %v3427 = vadd.f32 %v3005, %v3345
      %v3428 = vadd.f32 %v3006, %v3350
      %v3429 = vadd.f32 %v3007, %v3355
      %v3430 = vadd.f32 %v3008, %v3360
      %v3431 = vadd.f32 %v3009, %v3365
      %v3432 = vadd.f32 %v3010, %v3370
      %v3433 = vadd.f32 %v3011, %v3375
      %v3434 = vadd.f32 %v3012, %v3380
      %v3435 = vadd.f32 %v3013, %v3385
      %v3436 = vadd.f32 %v3014, %v3390
      %v3437 = vadd.f32 %v3015, %v3395
      %v3438 = vadd.f32 %v3016, %v3400
      %v3439 = vadd.f32 %v3017, %v3405
      %v3440 = vrot.slane %v2612, 2
      %v3441 = vrot.slane %v2613, 2
      %v3442 = vsel %vm965, %v3440, %v3441
      %v3443 = vrot.slane %v2614, 2
      %v3444 = vsel %vm965, %v3441, %v3443
      %v3445 = vrot.slane %v2615, 2
      %v3446 = vrot.slane %v2616, 2
      %v3447 = vsel %vm965, %v3445, %v3446
      %v3448 = vrot.slane %v2617, 2
      %v3449 = vsel %vm965, %v3446, %v3448
      %v3450 = vrot.slane %v2618, 2
      %v3451 = vrot.slane %v2619, 2
      %v3452 = vsel %vm965, %v3450, %v3451
      %v3453 = vrot.slane %v2620, 2
      %v3454 = vsel %vm965, %v3451, %v3453
      %v3455 = vrot.slane %v2621, 2
      %v3456 = vrot.slane %v2622, 2
      %v3457 = vsel %vm965, %v3455, %v3456
      %v3458 = vrot.slane %v2623, 2
      %v3459 = vsel %vm965, %v3456, %v3458
      %v3460 = vrot.slane %v2624, 2
      %v3461 = vrot.slane %v2625, 2
      %v3462 = vsel %vm965, %v3460, %v3461
      %v3463 = vrot.slane %v2626, 2
      %v3464 = vsel %vm965, %v3461, %v3463
      %v3465 = vrot.slane %v2627, 2
      %v3466 = vrot.slane %v2628, 2
      %v3467 = vsel %vm965, %v3465, %v3466
      %v3468 = vrot.slane %v2629, 2
      %v3469 = vsel %vm965, %v3466, %v3468
      %v3470 = vrot.slane %v2630, 2
      %v3471 = vrot.slane %v2631, 2
      %v3472 = vsel %vm965, %v3470, %v3471
      %v3473 = vrot.slane %v2632, 2
      %v3474 = vsel %vm965, %v3471, %v3473
      %v3475 = vrot.slane %v2633, 2
      %v3476 = vrot.slane %v2634, 2
      %v3477 = vsel %vm965, %v3475, %v3476
      %v3478 = vrot.slane %v2635, 2
      %v3479 = vsel %vm965, %v3476, %v3478
      %v3480 = vrot.slane %v2636, 2
      %v3481 = vrot.slane %v2637, 2
      %v3482 = vsel %vm965, %v3480, %v3481
      %v3483 = vrot.slane %v2638, 2
      %v3484 = vsel %vm965, %v3481, %v3483
      %v3485 = vrot.slane %v2639, 2
      %v3486 = vrot.slane %v2640, 2
      %v3487 = vsel %vm965, %v3485, %v3486
      %v3488 = vrot.slane %v2641, 2
      %v3489 = vsel %vm965, %v3486, %v3488
      %v3490 = vrot.slane %v2642, 2
      %v3491 = vrot.slane %v2643, 2
      %v3492 = vsel %vm965, %v3490, %v3491
      %v3493 = vrot.slane %v2644, 2
      %v3494 = vsel %vm965, %v3491, %v3493
      %v3495 = vrot.slane %v2645, 2
      %v3496 = vrot.slane %v2646, 2
      %v3497 = vsel %vm965, %v3495, %v3496
      %v3498 = vrot.slane %v2647, 2
      %v3499 = vsel %vm965, %v3496, %v3498
      %v3500 = vrot.slane %v2648, 2
      %v3501 = vrot.slane %v2649, 2
      %v3502 = vsel %vm965, %v3500, %v3501
      %v3503 = vrot.slane %v2650, 2
      %v3504 = vsel %vm965, %v3501, %v3503
      %v3505 = vrot.slane %v2651, 2
      %v3506 = vrot.slane %v2652, 2
      %v3507 = vsel %vm965, %v3505, %v3506
      %v3508 = vrot.slane %v2653, 2
      %v3509 = vsel %vm965, %v3506, %v3508
      %v3510 = vrot.slane %v2654, 2
      %v3511 = vrot.slane %v2655, 2
      %v3512 = vsel %vm965, %v3510, %v3511
      %v3513 = vrot.slane %v2656, 2
      %v3514 = vsel %vm965, %v3511, %v3513
      %v3515 = vrot.slane %v2657, 2
      %v3516 = vrot.slane %v2658, 2
      %v3517 = vsel %vm965, %v3515, %v3516
      %v3518 = vrot.slane %v2659, 2
      %v3519 = vsel %vm965, %v3516, %v3518
      %s3520 = scalar_lea.vmem %s1, 32
      %v3521 = vld [vmem:[%s3520] sm:$0xf]
      %v3522 = vsel %vm379, %v3442, 0
      %v3524 = vsel %vm379, %v3444, 0
      %v3526 = vsel %vm379, %v3447, 0
      %v3528 = vsel %vm379, %v3449, 0
      %v3530 = vsel %vm379, %v3452, 0
      %v3532 = vsel %vm379, %v3454, 0
      %v3534 = vsel %vm379, %v3457, 0
      %v3536 = vsel %vm379, %v3459, 0
      %v3538 = vsel %vm379, %v3462, 0
      %v3540 = vsel %vm379, %v3464, 0
      %v3542 = vsel %vm379, %v3467, 0
      %v3544 = vsel %vm379, %v3469, 0
      %v3546 = vsel %vm379, %v3472, 0
      %v3548 = vsel %vm379, %v3474, 0
      %v3550 = vsel %vm379, %v3477, 0
      %v3552 = vsel %vm379, %v3479, 0
      %v3554 = vsel %vm379, %v3482, 0
      %v3556 = vsel %vm379, %v3484, 0
      %v3558 = vsel %vm379, %v3487, 0
      %v3560 = vsel %vm379, %v3489, 0
      %v3562 = vsel %vm379, %v3492, 0
      %v3564 = vsel %vm379, %v3494, 0
      %v3566 = vsel %vm379, %v3497, 0
      %v3568 = vsel %vm379, %v3499, 0
      %v3570 = vsel %vm379, %v3502, 0
      %v3572 = vsel %vm379, %v3504, 0
      %v3574 = vsel %vm379, %v3507, 0
      %v3576 = vsel %vm379, %v3509, 0
      %v3578 = vsel %vm379, %v3512, 0
      %v3580 = vsel %vm379, %v3514, 0
      %v3582 = vsel %vm379, %v3517, 0
      %v3584 = vsel %vm379, %v3519, 0
      %v3587 = vsel %vm444, %v3521, 0
      %3589 = vmatprep.subr.mxu0 0.0
      %3590 = vmatpush1.msra.mxu0 %v3587
      %3591 = vmatprep.subr.mxu0 0.0
      %3592 = vmatpush1.msra.mxu0 0.0
      %3593 = vmatprep.subr.mxu0 0.0
      %3594 = vmatpush1.msra.mxu0 0.0
      %3595 = vmatprep.subr.mxu0 0.0
      %3596 = vmatpush1.msra.mxu0 0.0
      %3597 = vmatprep.subr.mxu0 0.0
      %3598 = vmatpush1.msra.mxu0 0.0
      %3599 = vmatprep.subr.mxu0 0.0
      %3600 = vmatpush1.msra.mxu0 0.0
      %3601 = vmatprep.subr.mxu0 0.0
      %3602 = vmatpush1.msra.mxu0 0.0
      %3603 = vmatprep.subr.mxu0 0.0
      %3604 = vmatpush1.msra.mxu0 0.0
      %3605 = vmatprep.subr.mxu0 0.0
      %3606 = vmatpush1.msra.mxu0 0.0
      %3607 = vmatprep.subr.mxu0 0.0
      %3608 = vmatpush1.msra.mxu0 0.0
      %3609 = vmatprep.subr.mxu0 0.0
      %3610 = vmatpush1.msra.mxu0 0.0
      %3611 = vmatprep.subr.mxu0 0.0
      %3612 = vmatpush1.msra.mxu0 0.0
      %3613 = vmatprep.subr.mxu0 0.0
      %3614 = vmatpush1.msra.mxu0 0.0
      %3615 = vmatprep.subr.mxu0 0.0
      %3616 = vmatpush1.msra.mxu0 0.0
      %3617 = vmatprep.subr.mxu0 0.0
      %3618 = vmatpush1.msra.mxu0 0.0
      %3619 = vmatprep.subr.mxu0 0.0
      %3620 = vmatpush1.msra.mxu0 0.0
      %3621 = vmatprep.subr.mxu0 0.0
      %3622 = vmatpush1.msra.mxu0 0.0
      %3623 = vmatprep.subr.mxu0 0.0
      %3624 = vmatpush1.msra.mxu0 0.0
      %3625 = vmatprep.subr.mxu0 0.0
      %3626 = vmatpush1.msra.mxu0 0.0
      %3627 = vmatprep.subr.mxu0 0.0
      %3628 = vmatpush1.msra.mxu0 0.0
      %3629 = vmatprep.subr.mxu0 0.0
      %3630 = vmatpush1.msra.mxu0 0.0
      %3631 = vmatprep.subr.mxu0 0.0
      %3632 = vmatpush1.msra.mxu0 0.0
      %3633 = vmatprep.subr.mxu0 0.0
      %3634 = vmatpush1.msra.mxu0 0.0
      %3635 = vmatprep.subr.mxu0 0.0
      %3636 = vmatpush1.msra.mxu0 0.0
      %3637 = vmatprep.subr.mxu0 0.0
      %3638 = vmatpush1.msra.mxu0 0.0
      %3639 = vmatprep.subr.mxu0 0.0
      %3640 = vmatpush1.msra.mxu0 0.0
      %3641 = vmatprep.subr.mxu0 0.0
      %3642 = vmatpush1.msra.mxu0 0.0
      %3643 = vmatprep.subr.mxu0 0.0
      %3644 = vmatpush1.msra.mxu0 0.0
      %3645 = vmatprep.subr.mxu0 0.0
      %3646 = vmatpush1.msra.mxu0 0.0
      %3647 = vmatprep.subr.mxu0 0.0
      %3648 = vmatpush1.msra.mxu0 0.0
      %3649 = vmatprep.subr.mxu0 0.0
      %3650 = vmatpush1.msra.mxu0 0.0
      %3651 = vmatprep.subr.mxu0 0.0
      %3652 = vmatpush1.msra.mxu0 0.0
      %3653 = vmatprep.mubr.f32.mxu0 0.0
      %3654 = vmatmul.mubr.f32.gmra.mrb[0].mxu0 %v3522
      %v3655 = vpop.f32.mrb[0].mxu0
      %v3656 = vadd.f32 0.0, %v3655
      %v3657 = vpop.f32.mrb[0].mxu0
      %3658 = vmatprep.mubr.f32.mxu0 0.0
      %3659 = vmatmul.mubr.f32.gmra.mrb[0].mxu0 %v3524
      %v3660 = vpop.f32.mrb[0].mxu0
      %v3661 = vadd.f32 0.0, %v3660
      %v3662 = vpop.f32.mrb[0].mxu0
      %3663 = vmatprep.mubr.f32.mxu0 0.0
      %3664 = vmatmul.mubr.f32.gmra.mrb[0].mxu0 %v3526
      %v3665 = vpop.f32.mrb[0].mxu0
      %v3666 = vadd.f32 0.0, %v3665
      %v3667 = vpop.f32.mrb[0].mxu0
      %3668 = vmatprep.mubr.f32.mxu0 0.0
      %3669 = vmatmul.mubr.f32.gmra.mrb[0].mxu0 %v3528
      %v3670 = vpop.f32.mrb[0].mxu0
      %v3671 = vadd.f32 0.0, %v3670
      %v3672 = vpop.f32.mrb[0].mxu0
      %3673 = vmatprep.mubr.f32.mxu0 0.0
      %3674 = vmatmul.mubr.f32.gmra.mrb[0].mxu0 %v3530
      %v3675 = vpop.f32.mrb[0].mxu0
      %v3676 = vadd.f32 0.0, %v3675
      %v3677 = vpop.f32.mrb[0].mxu0
      %3678 = vmatprep.mubr.f32.mxu0 0.0
      %3679 = vmatmul.mubr.f32.gmra.mrb[0].mxu0 %v3532
      %v3680 = vpop.f32.mrb[0].mxu0
      %v3681 = vadd.f32 0.0, %v3680
      %v3682 = vpop.f32.mrb[0].mxu0
      %3683 = vmatprep.mubr.f32.mxu0 0.0
      %3684 = vmatmul.mubr.f32.gmra.mrb[0].mxu0 %v3534
      %v3685 = vpop.f32.mrb[0].mxu0
      %v3686 = vadd.f32 0.0, %v3685
      %v3687 = vpop.f32.mrb[0].mxu0
      %3688 = vmatprep.mubr.f32.mxu0 0.0
      %3689 = vmatmul.mubr.f32.gmra.mrb[0].mxu0 %v3536
      %v3690 = vpop.f32.mrb[0].mxu0
      %v3691 = vadd.f32 0.0, %v3690
      %v3692 = vpop.f32.mrb[0].mxu0
      %3693 = vmatprep.mubr.f32.mxu0 0.0
      %3694 = vmatmul.mubr.f32.gmra.mrb[0].mxu0 %v3538
      %v3695 = vpop.f32.mrb[0].mxu0
      %v3696 = vadd.f32 0.0, %v3695
      %v3697 = vpop.f32.mrb[0].mxu0
      %3698 = vmatprep.mubr.f32.mxu0 0.0
      %3699 = vmatmul.mubr.f32.gmra.mrb[0].mxu0 %v3540
      %v3700 = vpop.f32.mrb[0].mxu0
      %v3701 = vadd.f32 0.0, %v3700
      %v3702 = vpop.f32.mrb[0].mxu0
      %3703 = vmatprep.mubr.f32.mxu0 0.0
      %3704 = vmatmul.mubr.f32.gmra.mrb[0].mxu0 %v3542
      %v3705 = vpop.f32.mrb[0].mxu0
      %v3706 = vadd.f32 0.0, %v3705
      %v3707 = vpop.f32.mrb[0].mxu0
      %3708 = vmatprep.mubr.f32.mxu0 0.0
      %3709 = vmatmul.mubr.f32.gmra.mrb[0].mxu0 %v3544
      %v3710 = vpop.f32.mrb[0].mxu0
      %v3711 = vadd.f32 0.0, %v3710
      %v3712 = vpop.f32.mrb[0].mxu0
      %3713 = vmatprep.mubr.f32.mxu0 0.0
      %3714 = vmatmul.mubr.f32.gmra.mrb[0].mxu0 %v3546
      %v3715 = vpop.f32.mrb[0].mxu0
      %v3716 = vadd.f32 0.0, %v3715
      %v3717 = vpop.f32.mrb[0].mxu0
      %3718 = vmatprep.mubr.f32.mxu0 0.0
      %3719 = vmatmul.mubr.f32.gmra.mrb[0].mxu0 %v3548
      %v3720 = vpop.f32.mrb[0].mxu0
      %v3721 = vadd.f32 0.0, %v3720
      %v3722 = vpop.f32.mrb[0].mxu0
      %3723 = vmatprep.mubr.f32.mxu0 0.0
      %3724 = vmatmul.mubr.f32.gmra.mrb[0].mxu0 %v3550
      %v3725 = vpop.f32.mrb[0].mxu0
      %v3726 = vadd.f32 0.0, %v3725
      %v3727 = vpop.f32.mrb[0].mxu0
      %3728 = vmatprep.mubr.f32.mxu0 0.0
      %3729 = vmatmul.mubr.f32.gmra.mrb[0].mxu0 %v3552
      %v3730 = vpop.f32.mrb[0].mxu0
      %v3731 = vadd.f32 0.0, %v3730
      %v3732 = vpop.f32.mrb[0].mxu0
      %3733 = vmatprep.mubr.f32.mxu0 0.0
      %3734 = vmatmul.mubr.f32.gmra.mrb[0].mxu0 %v3554
      %v3735 = vpop.f32.mrb[0].mxu0
      %v3736 = vadd.f32 0.0, %v3735
      %v3737 = vpop.f32.mrb[0].mxu0
      %3738 = vmatprep.mubr.f32.mxu0 0.0
      %3739 = vmatmul.mubr.f32.gmra.mrb[0].mxu0 %v3556
      %v3740 = vpop.f32.mrb[0].mxu0
      %v3741 = vadd.f32 0.0, %v3740
      %v3742 = vpop.f32.mrb[0].mxu0
      %3743 = vmatprep.mubr.f32.mxu0 0.0
      %3744 = vmatmul.mubr.f32.gmra.mrb[0].mxu0 %v3558
      %v3745 = vpop.f32.mrb[0].mxu0
      %v3746 = vadd.f32 0.0, %v3745
      %v3747 = vpop.f32.mrb[0].mxu0
      %3748 = vmatprep.mubr.f32.mxu0 0.0
      %3749 = vmatmul.mubr.f32.gmra.mrb[0].mxu0 %v3560
      %v3750 = vpop.f32.mrb[0].mxu0
      %v3751 = vadd.f32 0.0, %v3750
      %v3752 = vpop.f32.mrb[0].mxu0
      %3753 = vmatprep.mubr.f32.mxu0 0.0
      %3754 = vmatmul.mubr.f32.gmra.mrb[0].mxu0 %v3562
      %v3755 = vpop.f32.mrb[0].mxu0
      %v3756 = vadd.f32 0.0, %v3755
      %v3757 = vpop.f32.mrb[0].mxu0
      %3758 = vmatprep.mubr.f32.mxu0 0.0
      %3759 = vmatmul.mubr.f32.gmra.mrb[0].mxu0 %v3564
      %v3760 = vpop.f32.mrb[0].mxu0
      %v3761 = vadd.f32 0.0, %v3760
      %v3762 = vpop.f32.mrb[0].mxu0
      %3763 = vmatprep.mubr.f32.mxu0 0.0
      %3764 = vmatmul.mubr.f32.gmra.mrb[0].mxu0 %v3566
      %v3765 = vpop.f32.mrb[0].mxu0
      %v3766 = vadd.f32 0.0, %v3765
      %v3767 = vpop.f32.mrb[0].mxu0
      %3768 = vmatprep.mubr.f32.mxu0 0.0
      %3769 = vmatmul.mubr.f32.gmra.mrb[0].mxu0 %v3568
      %v3770 = vpop.f32.mrb[0].mxu0
      %v3771 = vadd.f32 0.0, %v3770
      %v3772 = vpop.f32.mrb[0].mxu0
      %3773 = vmatprep.mubr.f32.mxu0 0.0
      %3774 = vmatmul.mubr.f32.gmra.mrb[0].mxu0 %v3570
      %v3775 = vpop.f32.mrb[0].mxu0
      %v3776 = vadd.f32 0.0, %v3775
      %v3777 = vpop.f32.mrb[0].mxu0
      %3778 = vmatprep.mubr.f32.mxu0 0.0
      %3779 = vmatmul.mubr.f32.gmra.mrb[0].mxu0 %v3572
      %v3780 = vpop.f32.mrb[0].mxu0
      %v3781 = vadd.f32 0.0, %v3780
      %v3782 = vpop.f32.mrb[0].mxu0
      %3783 = vmatprep.mubr.f32.mxu0 0.0
      %3784 = vmatmul.mubr.f32.gmra.mrb[0].mxu0 %v3574
      %v3785 = vpop.f32.mrb[0].mxu0
      %v3786 = vadd.f32 0.0, %v3785
      %v3787 = vpop.f32.mrb[0].mxu0
      %3788 = vmatprep.mubr.f32.mxu0 0.0
      %3789 = vmatmul.mubr.f32.gmra.mrb[0].mxu0 %v3576
      %v3790 = vpop.f32.mrb[0].mxu0
      %v3791 = vadd.f32 0.0, %v3790
      %v3792 = vpop.f32.mrb[0].mxu0
      %3793 = vmatprep.mubr.f32.mxu0 0.0
      %3794 = vmatmul.mubr.f32.gmra.mrb[0].mxu0 %v3578
      %v3795 = vpop.f32.mrb[0].mxu0
      %v3796 = vadd.f32 0.0, %v3795
      %v3797 = vpop.f32.mrb[0].mxu0
      %3798 = vmatprep.mubr.f32.mxu0 0.0
      %3799 = vmatmul.mubr.f32.gmra.mrb[0].mxu0 %v3580
      %v3800 = vpop.f32.mrb[0].mxu0
      %v3801 = vadd.f32 0.0, %v3800
      %v3802 = vpop.f32.mrb[0].mxu0
      %3803 = vmatprep.mubr.f32.mxu0 0.0
      %3804 = vmatmul.mubr.f32.gmra.mrb[0].mxu0 %v3582
      %v3805 = vpop.f32.mrb[0].mxu0
      %v3806 = vadd.f32 0.0, %v3805
      %v3807 = vpop.f32.mrb[0].mxu0
      %3808 = vmatprep.mubr.f32.mxu0 0.0
      %3809 = vmatmul.mubr.f32.gmra.mrb[0].mxu0 %v3584
      %v3810 = vpop.f32.mrb[0].mxu0
      %v3811 = vadd.f32 0.0, %v3810
      %v3812 = vpop.f32.mrb[0].mxu0
      %3813 = vdwg.mxu0
      %v3814 = vadd.f32 %v3408, %v3656
      %v3815 = vadd.f32 %v3409, %v3661
      %v3816 = vadd.f32 %v3410, %v3666
      %v3817 = vadd.f32 %v3411, %v3671
      %v3818 = vadd.f32 %v3412, %v3676
      %v3819 = vadd.f32 %v3413, %v3681
      %v3820 = vadd.f32 %v3414, %v3686
      %v3821 = vadd.f32 %v3415, %v3691
      %v3822 = vadd.f32 %v3416, %v3696
      %v3823 = vadd.f32 %v3417, %v3701
      %v3824 = vadd.f32 %v3418, %v3706
      %v3825 = vadd.f32 %v3419, %v3711
      %v3826 = vadd.f32 %v3420, %v3716
      %v3827 = vadd.f32 %v3421, %v3721
      %v3828 = vadd.f32 %v3422, %v3726
      %v3829 = vadd.f32 %v3423, %v3731
      %v3830 = vadd.f32 %v3424, %v3736
      %v3831 = vadd.f32 %v3425, %v3741
      %v3832 = vadd.f32 %v3426, %v3746
      %v3833 = vadd.f32 %v3427, %v3751
      %v3834 = vadd.f32 %v3428, %v3756
      %v3835 = vadd.f32 %v3429, %v3761
      %v3836 = vadd.f32 %v3430, %v3766
      %v3837 = vadd.f32 %v3431, %v3771
      %v3838 = vadd.f32 %v3432, %v3776
      %v3839 = vadd.f32 %v3433, %v3781
      %v3840 = vadd.f32 %v3434, %v3786
      %v3841 = vadd.f32 %v3435, %v3791
      %v3842 = vadd.f32 %v3436, %v3796
      %v3843 = vadd.f32 %v3437, %v3801
      %v3844 = vadd.f32 %v3438, %v3806
      %v3845 = vadd.f32 %v3439, %v3811
      %v3846 = vld [vmem:[%s2] sm:$0x1]
      %v3848 = vlaneseq
      %v3849 = vshrl.u32 %v3848, 7
      %v3850 = vsub.s32 0, %v3849
      %v3851 = vrot.slane %v3846, %v3850
      %v3853 = vadd.f32 %v3814, %v3851
      %v3854 = vadd.f32 %v3815, %v3851
      %v3855 = vadd.f32 %v3816, %v3851
      %v3856 = vadd.f32 %v3817, %v3851
      %v3857 = vadd.f32 %v3818, %v3851
      %v3858 = vadd.f32 %v3819, %v3851
      %v3859 = vadd.f32 %v3820, %v3851
      %v3860 = vadd.f32 %v3821, %v3851
      %v3861 = vadd.f32 %v3822, %v3851
      %v3862 = vadd.f32 %v3823, %v3851
      %v3863 = vadd.f32 %v3824, %v3851
      %v3864 = vadd.f32 %v3825, %v3851
      %v3865 = vadd.f32 %v3826, %v3851
      %v3866 = vadd.f32 %v3827, %v3851
      %v3867 = vadd.f32 %v3828, %v3851
      %v3868 = vadd.f32 %v3829, %v3851
      %v3869 = vadd.f32 %v3830, %v3851
      %v3870 = vadd.f32 %v3831, %v3851
      %v3871 = vadd.f32 %v3832, %v3851
      %v3872 = vadd.f32 %v3833, %v3851
      %v3873 = vadd.f32 %v3834, %v3851
      %v3874 = vadd.f32 %v3835, %v3851
      %v3875 = vadd.f32 %v3836, %v3851
      %v3876 = vadd.f32 %v3837, %v3851
      %v3877 = vadd.f32 %v3838, %v3851
      %v3878 = vadd.f32 %v3839, %v3851
      %v3879 = vadd.f32 %v3840, %v3851
      %v3880 = vadd.f32 %v3841, %v3851
      %v3881 = vadd.f32 %v3842, %v3851
      %v3882 = vadd.f32 %v3843, %v3851
      %v3883 = vadd.f32 %v3844, %v3851
      %v3884 = vadd.f32 %v3845, %v3851
      %v3885 = vmin.f32 %v3853, 20.0
      %v3886 = vmin.f32 %v3854, 20.0
      %v3887 = vmin.f32 %v3855, 20.0
      %v3888 = vmin.f32 %v3856, 20.0
      %v3889 = vmin.f32 %v3857, 20.0
      %v3890 = vmin.f32 %v3858, 20.0
      %v3891 = vmin.f32 %v3859, 20.0
      %v3892 = vmin.f32 %v3860, 20.0
      %v3893 = vmin.f32 %v3861, 20.0
      %v3894 = vmin.f32 %v3862, 20.0
      %v3895 = vmin.f32 %v3863, 20.0
      %v3896 = vmin.f32 %v3864, 20.0
      %v3897 = vmin.f32 %v3865, 20.0
      %v3898 = vmin.f32 %v3866, 20.0
      %v3899 = vmin.f32 %v3867, 20.0
      %v3900 = vmin.f32 %v3868, 20.0
      %v3901 = vmin.f32 %v3869, 20.0
      %v3902 = vmin.f32 %v3870, 20.0
      %v3903 = vmin.f32 %v3871, 20.0
      %v3904 = vmin.f32 %v3872, 20.0
      %v3905 = vmin.f32 %v3873, 20.0
      %v3906 = vmin.f32 %v3874, 20.0
      %v3907 = vmin.f32 %v3875, 20.0
      %v3908 = vmin.f32 %v3876, 20.0
      %v3909 = vmin.f32 %v3877, 20.0
      %v3910 = vmin.f32 %v3878, 20.0
      %v3911 = vmin.f32 %v3879, 20.0
      %v3912 = vmin.f32 %v3880, 20.0
      %v3913 = vmin.f32 %v3881, 20.0
      %v3914 = vmin.f32 %v3882, 20.0
      %v3915 = vmin.f32 %v3883, 20.0
      %v3916 = vmin.f32 %v3884, 20.0
      %v3917 = vmul.f32 %v3885, 1.442695
      %v3918 = vpow.pop %v3917
      %v3919 = vmul.f32 %v3886, 1.442695
      %v3920 = vpow.pop %v3919
      %v3921 = vmul.f32 %v3887, 1.442695
      %v3922 = vpow.pop %v3921
      %v3923 = vmul.f32 %v3888, 1.442695
      %v3924 = vpow.pop %v3923
      %v3925 = vmul.f32 %v3889, 1.442695
      %v3926 = vpow.pop %v3925
      %v3927 = vmul.f32 %v3890, 1.442695
      %v3928 = vpow.pop %v3927
      %v3929 = vmul.f32 %v3891, 1.442695
      %v3930 = vpow.pop %v3929
      %v3931 = vmul.f32 %v3892, 1.442695
      %v3932 = vpow.pop %v3931
      %v3933 = vmul.f32 %v3893, 1.442695
      %v3934 = vpow.pop %v3933
      %v3935 = vmul.f32 %v3894, 1.442695
      %v3936 = vpow.pop %v3935
      %v3937 = vmul.f32 %v3895, 1.442695
      %v3938 = vpow.pop %v3937
      %v3939 = vmul.f32 %v3896, 1.442695
      %v3940 = vpow.pop %v3939
      %v3941 = vmul.f32 %v3897, 1.442695
      %v3942 = vpow.pop %v3941
      %v3943 = vmul.f32 %v3898, 1.442695
      %v3944 = vpow.pop %v3943
      %v3945 = vmul.f32 %v3899, 1.442695
      %v3946 = vpow.pop %v3945
      %v3947 = vmul.f32 %v3900, 1.442695
      %v3948 = vpow.pop %v3947
      %v3949 = vmul.f32 %v3901, 1.442695
      %v3950 = vpow.pop %v3949
      %v3951 = vmul.f32 %v3902, 1.442695
      %v3952 = vpow.pop %v3951
      %v3953 = vmul.f32 %v3903, 1.442695
      %v3954 = vpow.pop %v3953
      %v3955 = vmul.f32 %v3904, 1.442695
      %v3956 = vpow.pop %v3955
      %v3957 = vmul.f32 %v3905, 1.442695
      %v3958 = vpow.pop %v3957
      %v3959 = vmul.f32 %v3906, 1.442695
      %v3960 = vpow.pop %v3959
      %v3961 = vmul.f32 %v3907, 1.442695
      %v3962 = vpow.pop %v3961
      %v3963 = vmul.f32 %v3908, 1.442695
      %v3964 = vpow.pop %v3963
      %v3965 = vmul.f32 %v3909, 1.442695
      %v3966 = vpow.pop %v3965
      %v3967 = vmul.f32 %v3910, 1.442695
      %v3968 = vpow.pop %v3967
      %v3969 = vmul.f32 %v3911, 1.442695
      %v3970 = vpow.pop %v3969
      %v3971 = vmul.f32 %v3912, 1.442695
      %v3972 = vpow.pop %v3971
      %v3973 = vmul.f32 %v3913, 1.442695
      %v3974 = vpow.pop %v3973
      %v3975 = vmul.f32 %v3914, 1.442695
      %v3976 = vpow.pop %v3975
      %v3977 = vmul.f32 %v3915, 1.442695
      %v3978 = vpow.pop %v3977
      %v3979 = vmul.f32 %v3916, 1.442695
      %v3980 = vpow.pop %v3979
      %v3981 = vadd.f32 %v3918, 2.0
      %v3982 = vadd.f32 %v3920, 2.0
      %v3983 = vadd.f32 %v3922, 2.0
      %v3984 = vadd.f32 %v3924, 2.0
      %v3985 = vadd.f32 %v3926, 2.0
      %v3986 = vadd.f32 %v3928, 2.0
      %v3987 = vadd.f32 %v3930, 2.0
      %v3988 = vadd.f32 %v3932, 2.0
      %v3989 = vadd.f32 %v3934, 2.0
      %v3990 = vadd.f32 %v3936, 2.0
      %v3991 = vadd.f32 %v3938, 2.0
      %v3992 = vadd.f32 %v3940, 2.0
      %v3993 = vadd.f32 %v3942, 2.0
      %v3994 = vadd.f32 %v3944, 2.0
      %v3995 = vadd.f32 %v3946, 2.0
      %v3996 = vadd.f32 %v3948, 2.0
      %v3997 = vadd.f32 %v3950, 2.0
      %v3998 = vadd.f32 %v3952, 2.0
      %v3999 = vadd.f32 %v3954, 2.0
      %v4000 = vadd.f32 %v3956, 2.0
      %v4001 = vadd.f32 %v3958, 2.0
      %v4002 = vadd.f32 %v3960, 2.0
      %v4003 = vadd.f32 %v3962, 2.0
      %v4004 = vadd.f32 %v3964, 2.0
      %v4005 = vadd.f32 %v3966, 2.0
      %v4006 = vadd.f32 %v3968, 2.0
      %v4007 = vadd.f32 %v3970, 2.0
      %v4008 = vadd.f32 %v3972, 2.0
      %v4009 = vadd.f32 %v3974, 2.0
      %v4010 = vadd.f32 %v3976, 2.0
      %v4011 = vadd.f32 %v3978, 2.0
      %v4012 = vadd.f32 %v3980, 2.0
      %v4013 = vmul.f32 %v3918, %v3981
      %v4014 = vmul.f32 %v3920, %v3982
      %v4015 = vmul.f32 %v3922, %v3983
      %v4016 = vmul.f32 %v3924, %v3984
      %v4017 = vmul.f32 %v3926, %v3985
      %v4018 = vmul.f32 %v3928, %v3986
      %v4019 = vmul.f32 %v3930, %v3987
      %v4020 = vmul.f32 %v3932, %v3988
      %v4021 = vmul.f32 %v3934, %v3989
      %v4022 = vmul.f32 %v3936, %v3990
      %v4023 = vmul.f32 %v3938, %v3991
      %v4024 = vmul.f32 %v3940, %v3992
      %v4025 = vmul.f32 %v3942, %v3993
      %v4026 = vmul.f32 %v3944, %v3994
      %v4027 = vmul.f32 %v3946, %v3995
      %v4028 = vmul.f32 %v3948, %v3996
      %v4029 = vmul.f32 %v3950, %v3997
      %v4030 = vmul.f32 %v3952, %v3998
      %v4031 = vmul.f32 %v3954, %v3999
      %v4032 = vmul.f32 %v3956, %v4000
      %v4033 = vmul.f32 %v3958, %v4001
      %v4034 = vmul.f32 %v3960, %v4002
      %v4035 = vmul.f32 %v3962, %v4003
      %v4036 = vmul.f32 %v3964, %v4004
      %v4037 = vmul.f32 %v3966, %v4005
      %v4038 = vmul.f32 %v3968, %v4006
      %v4039 = vmul.f32 %v3970, %v4007
      %v4040 = vmul.f32 %v3972, %v4008
      %v4041 = vmul.f32 %v3974, %v4009
      %v4042 = vmul.f32 %v3976, %v4010
      %v4043 = vmul.f32 %v3978, %v4011
      %v4044 = vmul.f32 %v3980, %v4012
      %vm4045 = vcmp.gt.f32.partialorder %v3853, 20.0
      %vm4046 = vcmp.gt.f32.partialorder %v3854, 20.0
      %vm4047 = vcmp.gt.f32.partialorder %v3855, 20.0
      %vm4048 = vcmp.gt.f32.partialorder %v3856, 20.0
      %vm4049 = vcmp.gt.f32.partialorder %v3857, 20.0
      %vm4050 = vcmp.gt.f32.partialorder %v3858, 20.0
      %vm4051 = vcmp.gt.f32.partialorder %v3859, 20.0
      %vm4052 = vcmp.gt.f32.partialorder %v3860, 20.0
      %vm4053 = vcmp.gt.f32.partialorder %v3861, 20.0
      %vm4054 = vcmp.gt.f32.partialorder %v3862, 20.0
      %vm4055 = vcmp.gt.f32.partialorder %v3863, 20.0
      %vm4056 = vcmp.gt.f32.partialorder %v3864, 20.0
      %vm4057 = vcmp.gt.f32.partialorder %v3865, 20.0
      %vm4058 = vcmp.gt.f32.partialorder %v3866, 20.0
      %vm4059 = vcmp.gt.f32.partialorder %v3867, 20.0
      %vm4060 = vcmp.gt.f32.partialorder %v3868, 20.0
      %vm4061 = vcmp.gt.f32.partialorder %v3869, 20.0
      %vm4062 = vcmp.gt.f32.partialorder %v3870, 20.0
      %vm4063 = vcmp.gt.f32.partialorder %v3871, 20.0
      %vm4064 = vcmp.gt.f32.partialorder %v3872, 20.0
      %vm4065 = vcmp.gt.f32.partialorder %v3873, 20.0
      %vm4066 = vcmp.gt.f32.partialorder %v3874, 20.0
      %vm4067 = vcmp.gt.f32.partialorder %v3875, 20.0
      %vm4068 = vcmp.gt.f32.partialorder %v3876, 20.0
      %vm4069 = vcmp.gt.f32.partialorder %v3877, 20.0
      %vm4070 = vcmp.gt.f32.partialorder %v3878, 20.0
      %vm4071 = vcmp.gt.f32.partialorder %v3879, 20.0
      %vm4072 = vcmp.gt.f32.partialorder %v3880, 20.0
      %vm4073 = vcmp.gt.f32.partialorder %v3881, 20.0
      %vm4074 = vcmp.gt.f32.partialorder %v3882, 20.0
      %vm4075 = vcmp.gt.f32.partialorder %v3883, 20.0
      %vm4076 = vcmp.gt.f32.partialorder %v3884, 20.0
      %v4077 = vadd.f32 %v4013, 2.0
      %v4078 = vadd.f32 %v4014, 2.0
      %v4079 = vadd.f32 %v4015, 2.0
      %v4080 = vadd.f32 %v4016, 2.0
      %v4081 = vadd.f32 %v4017, 2.0
      %v4082 = vadd.f32 %v4018, 2.0
      %v4083 = vadd.f32 %v4019, 2.0
      %v4084 = vadd.f32 %v4020, 2.0
      %v4085 = vadd.f32 %v4021, 2.0
      %v4086 = vadd.f32 %v4022, 2.0
      %v4087 = vadd.f32 %v4023, 2.0
      %v4088 = vadd.f32 %v4024, 2.0
      %v4089 = vadd.f32 %v4025, 2.0
      %v4090 = vadd.f32 %v4026, 2.0
      %v4091 = vadd.f32 %v4027, 2.0
      %v4092 = vadd.f32 %v4028, 2.0
      %v4093 = vadd.f32 %v4029, 2.0
      %v4094 = vadd.f32 %v4030, 2.0
      %v4095 = vadd.f32 %v4031, 2.0
      %v4096 = vadd.f32 %v4032, 2.0
      %v4097 = vadd.f32 %v4033, 2.0
      %v4098 = vadd.f32 %v4034, 2.0
      %v4099 = vadd.f32 %v4035, 2.0
      %v4100 = vadd.f32 %v4036, 2.0
      %v4101 = vadd.f32 %v4037, 2.0
      %v4102 = vadd.f32 %v4038, 2.0
      %v4103 = vadd.f32 %v4039, 2.0
      %v4104 = vadd.f32 %v4040, 2.0
      %v4105 = vadd.f32 %v4041, 2.0
      %v4106 = vadd.f32 %v4042, 2.0
      %v4107 = vadd.f32 %v4043, 2.0
      %v4108 = vadd.f32 %v4044, 2.0
      %v4109 = vrcp.pop %v4077
      %v4110 = vmul.f32 %v4013, %v4109
      %v4111 = vrcp.pop %v4078
      %v4112 = vmul.f32 %v4014, %v4111
      %v4113 = vrcp.pop %v4079
      %v4114 = vmul.f32 %v4015, %v4113
      %v4115 = vrcp.pop %v4080
      %v4116 = vmul.f32 %v4016, %v4115
      %v4117 = vrcp.pop %v4081
      %v4118 = vmul.f32 %v4017, %v4117
      %v4119 = vrcp.pop %v4082
      %v4120 = vmul.f32 %v4018, %v4119
      %v4121 = vrcp.pop %v4083
      %v4122 = vmul.f32 %v4019, %v4121
      %v4123 = vrcp.pop %v4084
      %v4124 = vmul.f32 %v4020, %v4123
      %v4125 = vrcp.pop %v4085
      %v4126 = vmul.f32 %v4021, %v4125
      %v4127 = vrcp.pop %v4086
      %v4128 = vmul.f32 %v4022, %v4127
      %v4129 = vrcp.pop %v4087
      %v4130 = vmul.f32 %v4023, %v4129
      %v4131 = vrcp.pop %v4088
      %v4132 = vmul.f32 %v4024, %v4131
      %v4133 = vrcp.pop %v4089
      %v4134 = vmul.f32 %v4025, %v4133
      %v4135 = vrcp.pop %v4090
      %v4136 = vmul.f32 %v4026, %v4135
      %v4137 = vrcp.pop %v4091
      %v4138 = vmul.f32 %v4027, %v4137
      %v4139 = vrcp.pop %v4092
      %v4140 = vmul.f32 %v4028, %v4139
      %v4141 = vrcp.pop %v4093
      %v4142 = vmul.f32 %v4029, %v4141
      %v4143 = vrcp.pop %v4094
      %v4144 = vmul.f32 %v4030, %v4143
      %v4145 = vrcp.pop %v4095
      %v4146 = vmul.f32 %v4031, %v4145
      %v4147 = vrcp.pop %v4096
      %v4148 = vmul.f32 %v4032, %v4147
      %v4149 = vrcp.pop %v4097
      %v4150 = vmul.f32 %v4033, %v4149
      %v4151 = vrcp.pop %v4098
      %v4152 = vmul.f32 %v4034, %v4151
      %v4153 = vrcp.pop %v4099
      %v4154 = vmul.f32 %v4035, %v4153
      %v4155 = vrcp.pop %v4100
      %v4156 = vmul.f32 %v4036, %v4155
      %v4157 = vrcp.pop %v4101
      %v4158 = vmul.f32 %v4037, %v4157
      %v4159 = vrcp.pop %v4102
      %v4160 = vmul.f32 %v4038, %v4159
      %v4161 = vrcp.pop %v4103
      %v4162 = vmul.f32 %v4039, %v4161
      %v4163 = vrcp.pop %v4104
      %v4164 = vmul.f32 %v4040, %v4163
      %v4165 = vrcp.pop %v4105
      %v4166 = vmul.f32 %v4041, %v4165
      %v4167 = vrcp.pop %v4106
      %v4168 = vmul.f32 %v4042, %v4167
      %v4169 = vrcp.pop %v4107
      %v4170 = vmul.f32 %v4043, %v4169
      %v4171 = vrcp.pop %v4108
      %v4172 = vmul.f32 %v4044, %v4171
      %v4173 = vsel %vm4045, 1.0, %v4110
      %v4174 = vsel %vm4046, 1.0, %v4112
      %v4175 = vsel %vm4047, 1.0, %v4114
      %v4176 = vsel %vm4048, 1.0, %v4116
      %v4177 = vsel %vm4049, 1.0, %v4118
      %v4178 = vsel %vm4050, 1.0, %v4120
      %v4179 = vsel %vm4051, 1.0, %v4122
      %v4180 = vsel %vm4052, 1.0, %v4124
      %v4181 = vsel %vm4053, 1.0, %v4126
      %v4182 = vsel %vm4054, 1.0, %v4128
      %v4183 = vsel %vm4055, 1.0, %v4130
      %v4184 = vsel %vm4056, 1.0, %v4132
      %v4185 = vsel %vm4057, 1.0, %v4134
      %v4186 = vsel %vm4058, 1.0, %v4136
      %v4187 = vsel %vm4059, 1.0, %v4138
      %v4188 = vsel %vm4060, 1.0, %v4140
      %v4189 = vsel %vm4061, 1.0, %v4142
      %v4190 = vsel %vm4062, 1.0, %v4144
      %v4191 = vsel %vm4063, 1.0, %v4146
      %v4192 = vsel %vm4064, 1.0, %v4148
      %v4193 = vsel %vm4065, 1.0, %v4150
      %v4194 = vsel %vm4066, 1.0, %v4152
      %v4195 = vsel %vm4067, 1.0, %v4154
      %v4196 = vsel %vm4068, 1.0, %v4156
      %v4197 = vsel %vm4069, 1.0, %v4158
      %v4198 = vsel %vm4070, 1.0, %v4160
      %v4199 = vsel %vm4071, 1.0, %v4162
      %v4200 = vsel %vm4072, 1.0, %v4164
      %v4201 = vsel %vm4073, 1.0, %v4166
      %v4202 = vsel %vm4074, 1.0, %v4168
      %v4203 = vsel %vm4075, 1.0, %v4170
      %v4204 = vsel %vm4076, 1.0, %v4172
      %v4205 = vmul.f32 %v3853, %v4173
      %v4206 = vmul.f32 %v3854, %v4174
      %v4207 = vmul.f32 %v3855, %v4175
      %v4208 = vmul.f32 %v3856, %v4176
      %v4209 = vmul.f32 %v3857, %v4177
      %v4210 = vmul.f32 %v3858, %v4178
      %v4211 = vmul.f32 %v3859, %v4179
      %v4212 = vmul.f32 %v3860, %v4180
      %v4213 = vmul.f32 %v3861, %v4181
      %v4214 = vmul.f32 %v3862, %v4182
      %v4215 = vmul.f32 %v3863, %v4183
      %v4216 = vmul.f32 %v3864, %v4184
      %v4217 = vmul.f32 %v3865, %v4185
      %v4218 = vmul.f32 %v3866, %v4186
      %v4219 = vmul.f32 %v3867, %v4187
      %v4220 = vmul.f32 %v3868, %v4188
      %v4221 = vmul.f32 %v3869, %v4189
      %v4222 = vmul.f32 %v3870, %v4190
      %v4223 = vmul.f32 %v3871, %v4191
      %v4224 = vmul.f32 %v3872, %v4192
      %v4225 = vmul.f32 %v3873, %v4193
      %v4226 = vmul.f32 %v3874, %v4194
      %v4227 = vmul.f32 %v3875, %v4195
      %v4228 = vmul.f32 %v3876, %v4196
      %v4229 = vmul.f32 %v3877, %v4197
      %v4230 = vmul.f32 %v3878, %v4198
      %v4231 = vmul.f32 %v3879, %v4199
      %v4232 = vmul.f32 %v3880, %v4200
      %v4233 = vmul.f32 %v3881, %v4201
      %v4234 = vmul.f32 %v3882, %v4202
      %v4235 = vmul.f32 %v3883, %v4203
      %v4236 = vmul.f32 %v3884, %v4204
      %4237 = vst [vmem:[%s194] sm:$0xff] %v4205
      %4238 = vst [vmem:[%s194 + $0x8] sm:$0xff] %v4206
      %4239 = vst [vmem:[%s194 + $0x10] sm:$0xff] %v4207
      %4240 = vst [vmem:[%s194 + $0x18] sm:$0xff] %v4208
      %4241 = vst [vmem:[%s194 + $0x20] sm:$0xff] %v4209
      %4242 = vst [vmem:[%s194 + $0x28] sm:$0xff] %v4210
      %4243 = vst [vmem:[%s194 + $0x30] sm:$0xff] %v4211
      %4244 = vst [vmem:[%s194 + $0x38] sm:$0xff] %v4212
      %4245 = vst [vmem:[%s194 + $0x40] sm:$0xff] %v4213
      %4246 = vst [vmem:[%s194 + $0x48] sm:$0xff] %v4214
      %4247 = vst [vmem:[%s194 + $0x50] sm:$0xff] %v4215
      %4248 = vst [vmem:[%s194 + $0x58] sm:$0xff] %v4216
      %4249 = vst [vmem:[%s194 + $0x60] sm:$0xff] %v4217
      %4250 = vst [vmem:[%s194 + $0x68] sm:$0xff] %v4218
      %4251 = vst [vmem:[%s194 + $0x70] sm:$0xff] %v4219
      %4252 = vst [vmem:[%s194 + $0x78] sm:$0xff] %v4220
      %4253 = vst [vmem:[%s194 + $0x80] sm:$0xff] %v4221
      %4254 = vst [vmem:[%s194 + $0x88] sm:$0xff] %v4222
      %4255 = vst [vmem:[%s194 + $0x90] sm:$0xff] %v4223
      %4256 = vst [vmem:[%s194 + $0x98] sm:$0xff] %v4224
      %4257 = vst [vmem:[%s194 + $0xa0] sm:$0xff] %v4225
      %4258 = vst [vmem:[%s194 + $0xa8] sm:$0xff] %v4226
      %4259 = vst [vmem:[%s194 + $0xb0] sm:$0xff] %v4227
      %4260 = vst [vmem:[%s194 + $0xb8] sm:$0xff] %v4228
      %4261 = vst [vmem:[%s194 + $0xc0] sm:$0xff] %v4229
      %4262 = vst [vmem:[%s194 + $0xc8] sm:$0xff] %v4230
      %4263 = vst [vmem:[%s194 + $0xd0] sm:$0xff] %v4231
      %4264 = vst [vmem:[%s194 + $0xd8] sm:$0xff] %v4232
      %4265 = vst [vmem:[%s194 + $0xe0] sm:$0xff] %v4233
      %4266 = vst [vmem:[%s194 + $0xe8] sm:$0xff] %v4234
      %4267 = vst [vmem:[%s194 + $0xf0] sm:$0xff] %v4235
      %4268 = vst [vmem:[%s194 + $0xf8] sm:$0xff] %v4236
      %s4269 = smul.u32 16, %s19
      %p4270 = scmp.lt.s32.totalorder %s18, 1
      %s4271 = scalar_select %p4270, %s18, 1
      %p4272 = scmp.lt.s32.totalorder %s4269, 15
      %s4273 = scalar_select %p4272, %s4269, 15
      %s4274 = smul.addr %s4273, 2
      %s4275 = smul.addr %s4271, 32
      %s4276 = sadd.s32 %s4274, %s4275
      %s4277 = smul.addr %s4276, 8
      %s4278 = scalar_lea.vmem %s3, %s4277
      // Predicated region
      $region33: #{my_conv2d.1} parent=31 // pred_check
        %p4279 = pneg %p114
      $region34: #{my_conv2d.1} parent=31 // pred_check_branch
        %4281 = sbr.rel (%p4279) target = $region36
      $region35: #{my_conv2d.1} parent=31 // pred_region
        %s4282 = smul.u32 16, %s19
      $region36: #{my_conv2d.1} parent=31 // pred_fallthru
        _
    $region32: #{my_conv2d.1} parent=5 // pred_fallthru
      _
    %p4283 = scmp.le.s32.totalorder 2, %s9
    // Predicated region
    $region37: #{my_conv2d.1} parent=5 // pred_check
      %p4284 = pneg %p4283
    $region38: #{my_conv2d.1} parent=5 // pred_check_branch
      %4286 = sbr.rel (%p4284) target = $region40
    $region39: #{my_conv2d.1} parent=5 // pred_region
      %s4287 = ssub.s32 %s9, 2
      // Predicated region
      $region41: #{my_conv2d.1} parent=39 // pred_check
        %p4288 = pneg %p120
      $region42: #{my_conv2d.1} parent=39 // pred_check_branch
        %4290 = sbr.rel (%p4288) target = $region44
      $region43: #{my_conv2d.1} parent=39 // pred_region
        %s4291 = smul.u32 16, %s21
        %p4292 = scmp.lt.s32.totalorder %s20, 1
        %s4293 = scalar_select %p4292, %s20, 1
        %p4294 = scmp.lt.s32.totalorder %s4291, 15
        %s4295 = scalar_select %p4294, %s4291, 15
        %s4296 = smul.addr %s4295, 2
        %s4297 = smul.addr %s4293, 32
        %s4298 = sadd.s32 %s4296, %s4297
        %s4299 = smul.addr %s4298, 8
        %s4300 = scalar_lea.vmem %s3, %s4299
      $region44: #{my_conv2d.1} parent=39 // pred_fallthru
        _
    $region40: #{my_conv2d.1} parent=5 // pred_fallthru
      _
  $region6: #{my_conv2d.1} parent=0 // loop_footer
    %s13 = sadd.s32 1, %s9
  $region7: #{my_conv2d.1} parent=0 // loop_footer_branch
    %8 = sbr.rel target = $region3
  $region8: #{my_conv2d.1} parent=0 // loop_exit
    _

</llo_original>
